<compile_context>
chip_gen: v5e
topology: v5e:2x2
jax: 0.10.0
libtpu: 0.0.40
codegen_flags: <defaults>
</compile_context>

<pallas_src>
import jax
import jax.numpy as jnp
from jax.experimental import pallas as pl
from jax.experimental.pallas import tpu as pltpu

# ---- Config (mirrors configs.* used by the PyTorch module) ----
SEQ_LEN = 16
DOWN_SAMPLING_WINDOW = 2
DOWN_SAMPLING_LAYERS = 2
BATCH = 2
CHANNELS = 64  # d_model rides along with batch; B*C = 128 -> one full lane tile

# ---- KANLinear hyper-params (efficient-KAN defaults) ----
GRID_SIZE = 5
SPLINE_ORDER = 3
NUM_COEF = GRID_SIZE + SPLINE_ORDER            # 8 spline coefficients per input feature
NUM_SLABS = NUM_COEF + 1                       # silu slab + 8 basis slabs
GRID_EXT = GRID_SIZE + 2 * SPLINE_ORDER + 1    # 12 grid knots
GRID_RANGE = (-1.0, 1.0)
_H = (GRID_RANGE[1] - GRID_RANGE[0]) / GRID_SIZE
GRID_VALS = tuple(float((j - SPLINE_ORDER) * _H + GRID_RANGE[0]) for j in range(GRID_EXT))

SUBLANE = 8
LANE = 128


def _round_up(x, m):
    return (x + m - 1) // m * m


def _silu(x):
    # TODO(synk): could route the reciprocal to the EUP slot (pl.reciprocal) in-kernel;
    # kept identical to the reference math for the exact f32 cross-check.
    return x * (1.0 / (1.0 + jnp.exp(-x)))


def _b_spline_bases(x):
    """Cox-de-Boor recursion with compile-time-constant knots (efficient-KAN).

    x: any-shaped f32 array. Returns a list of NUM_COEF arrays, same shape as x."""
    bases = []
    for j in range(GRID_EXT - 1):
        g0, g1 = GRID_VALS[j], GRID_VALS[j + 1]
        bases.append(jnp.where((x >= g0) & (x < g1), 1.0, 0.0).astype(x.dtype))
    for k in range(1, SPLINE_ORDER + 1):
        new_bases = []
        for j in range(len(bases) - 1):
            gj = GRID_VALS[j]
            gjk = GRID_VALS[j + k]
            gjk1 = GRID_VALS[j + k + 1]
            gj1 = GRID_VALS[j + 1]
            t1 = (x - gj) * (1.0 / (gjk - gj)) * bases[j]
            t2 = (gjk1 - x) * (1.0 / (gjk1 - gj1)) * bases[j + 1]
            new_bases.append(t1 + t2)
        bases = new_bases
    return bases  # length NUM_COEF


# ---------------------------------------------------------------------------
# Fused Pallas kernel: the entire MultiScaleSeasonMixing forward.
# ---------------------------------------------------------------------------
def _kan_fused(x, w_ref, feat_ref, t_pad):
    """One KANLinear as a single MXU matmul.

    x:        (t_in, n_tile)  current activation (time on sublanes, N on lanes)
    w_ref:    (t_out, NUM_SLABS * t_pad)  host-fused [base | scaled-spline] weight
    feat_ref: (NUM_SLABS * t_pad, n_tile) VMEM scratch holding [silu(x); bases(x)]
    """
    t_in = x.shape[0]
    if t_in != t_pad:
        # zero the sublane-padding rows once (weight pad columns are zero too)
        feat_ref[...] = jnp.zeros_like(feat_ref)
    feat_ref[pl.ds(0, t_in), :] = _silu(x)
    bases = _b_spline_bases(x)
    for c in range(NUM_COEF):
        feat_ref[pl.ds((c + 1) * t_pad, t_in), :] = bases[c]
    # Single fused matmul: (t_out, K) @ (K, n_tile) -> lane-dense (t_out, n_tile)
    return jnp.dot(w_ref[...], feat_ref[...], preferred_element_type=jnp.float32)


def _make_season_mix_kernel(num_layers, t_pads):
    n_season = num_layers + 1

    def kernel(*refs):
        season_refs = refs[:n_season]
        w_refs = refs[n_season:n_season + 2 * num_layers]
        out_refs = refs[n_season + 2 * num_layers:n_season + 3 * num_layers]
        feat_refs = refs[n_season + 3 * num_layers:]

        out_high = season_refs[0][...]
        for i in range(num_layers):
            h = _kan_fused(out_high, w_refs[2 * i], feat_refs[2 * i], t_pads[2 * i])
            y = _kan_fused(h, w_refs[2 * i + 1], feat_refs[2 * i + 1], t_pads[2 * i + 1])
            out_high = season_refs[i + 1][...] + y      # residual: out_low + out_low_res
            out_refs[i][...] = out_high

    return kernel


def multi_scale_season_mixing_pallas(season_list, fused_weights, *, n_tile=LANE):
    """season_list[i]: (B, C, T_i) f32; fused_weights: flat list of 2L fused matrices.

    Returns the same list structure as the PyTorch module's forward.
    For production B*C, raise n_tile (e.g. 256-512; cap for v7x's 64 MiB VMEM)."""
    num_layers = len(fused_weights) // 2
    assert len(season_list) == num_layers + 1
    b, c, _ = season_list[0].shape
    n = b * c
    n_pad = _round_up(n, n_tile)

    # (B, C, T) -> (T, N): N rides the lane (last) dimension.
    seasons_t = []
    for s in season_list:
        t = s.shape[-1]
        xt = jnp.transpose(s.reshape(n, t))
        if n_pad != n:
            xt = jnp.pad(xt, ((0, 0), (0, n_pad - n)))
        seasons_t.append(xt)

    t_pads = [w.shape[1] // NUM_SLABS for w in fused_weights]
    t_outs = [seasons_t[i + 1].shape[0] for i in range(num_layers)]

    grid = (n_pad // n_tile,)

    def n_blocked(t):
        return pl.BlockSpec((t, n_tile), lambda g: (0, g))

    def full(shape):
        return pl.BlockSpec(shape, lambda g: (0, 0))

    in_specs = ([n_blocked(s.shape[0]) for s in seasons_t] +
                [full(w.shape) for w in fused_weights])
    out_specs = [n_blocked(t_outs[i]) for i in range(num_layers)]
    out_shape = [jax.ShapeDtypeStruct((t_outs[i], n_pad), jnp.float32)
                 for i in range(num_layers)]
    scratch_shapes = [pltpu.VMEM((NUM_SLABS * tp, n_tile), jnp.float32) for tp in t_pads]

    outs = pl.pallas_call(
        _make_season_mix_kernel(num_layers, t_pads),
        out_shape=out_shape,
        grid=grid,
        in_specs=in_specs,
        out_specs=out_specs,
        scratch_shapes=scratch_shapes,
        compiler_params=pltpu.CompilerParams(dimension_semantics=("parallel",)),
    )(*seasons_t, *fused_weights)

    out_list = [season_list[0]]
    for i in range(num_layers):
        o = outs[i][:, :n]                                   # (T_out, N)
        out_list.append(jnp.transpose(o).reshape(b, c, t_outs[i]))
    return out_list


# ---------------------------------------------------------------------------
# Host-side parameter init + weight fusion
# ---------------------------------------------------------------------------
def init_kan_params(key, in_f, out_f):
    """Shapes follow efficient-KAN KANLinear.__init__ (standalone spline scaler)."""
    k1, k2, k3 = jax.random.split(key, 3)
    base_w = jax.random.normal(k1, (out_f, in_f), jnp.float32) * (1.0 / jnp.sqrt(in_f))
    spline_w = jax.random.normal(k2, (out_f, in_f, NUM_COEF), jnp.float32) * 0.1
    spline_scaler = jax.random.normal(k3, (out_f, in_f), jnp.float32) * (1.0 / jnp.sqrt(in_f))
    return base_w, spline_w, spline_scaler


def fuse_kan_weights(base_w, spline_w, spline_scaler):
    """Fold base + scaled-spline weights into ONE (out, NUM_SLABS * t_pad) matrix
    (t_pad = in rounded up to 8 sublanes; padded columns are zero) so each
    KANLinear is a single well-tiled matmul operand with one dense DMA."""
    out_f, in_f = base_w.shape
    t_pad = max(SUBLANE, _round_up(in_f, SUBLANE))
    scaled = spline_w * spline_scaler[..., None]              # (out, in, coef)
    w = jnp.zeros((out_f, NUM_SLABS * t_pad), jnp.float32)
    w = w.at[:, :in_f].set(base_w)
    for ci in range(NUM_COEF):
        start = (ci + 1) * t_pad
        w = w.at[:, start:start + in_f].set(scaled[:, :, ci])
    return w


# ---------------------------------------------------------------------------
# Pure-JAX reference (original, unfused math) for correctness checking
# ---------------------------------------------------------------------------
def _kan_linear_ref(x, base_w, spline_w, spline_scaler):
    """x: (N, in) -> (N, out); mirrors KANLinear.forward."""
    base = jnp.dot(_silu(x), base_w.T, precision=jax.lax.Precision.HIGHEST,
                   preferred_element_type=jnp.float32)
    bases = _b_spline_bases(x)
    scaled = spline_w * spline_scaler[..., None]
    spline = jnp.zeros_like(base)
    for ci in range(NUM_COEF):
        spline = spline + jnp.dot(bases[ci], scaled[:, :, ci].T,
                                  precision=jax.lax.Precision.HIGHEST,
                                  preferred_element_type=jnp.float32)
    return base + spline


def multi_scale_season_mixing_ref(season_list, raw_params):
    out_high = season_list[0]
    out_low = season_list[1]
    outs = [out_high]
    n_scales = len(season_list)
    for i in range(n_scales - 1):
        b, c, t = out_high.shape
        x = out_high.reshape(b * c, t)
        p1, p2 = raw_params[i]
        h = _kan_linear_ref(x, *p1)
        y = _kan_linear_ref(h, *p2)
        out_low = out_low + y.reshape(b, c, y.shape[-1])
        out_high = out_low
        if i + 2 <= n_scales - 1:
            out_low = season_list[i + 2]
        outs.append(out_high)
    return outs


if __name__ == "__main__":
    key = jax.random.PRNGKey(0)

    # season_list[i]: (B, C, seq_len // down_sampling_window ** i)
    season_list = []
    for i in range(DOWN_SAMPLING_LAYERS + 1):
        key, sub = jax.random.split(key)
        t_i = SEQ_LEN // DOWN_SAMPLING_WINDOW ** i
        season_list.append(
            0.5 * jax.random.normal(sub, (BATCH, CHANNELS, t_i), jnp.float32))

    # Params per Sequential(KANLinear(T_i, T_{i+1}), KANLinear(T_{i+1}, T_{i+1}))
    raw_params = []
    fused_weights = []
    for i in range(DOWN_SAMPLING_LAYERS):
        t_in = SEQ_LEN // DOWN_SAMPLING_WINDOW ** i
        t_out = SEQ_LEN // DOWN_SAMPLING_WINDOW ** (i + 1)
        key, k1, k2 = jax.random.split(key, 3)
        p1 = init_kan_params(k1, t_in, t_out)
        p2 = init_kan_params(k2, t_out, t_out)
        raw_params.append((p1, p2))
        fused_weights.append(fuse_kan_weights(*p1))
        fused_weights.append(fuse_kan_weights(*p2))

    out = multi_scale_season_mixing_pallas(season_list, fused_weights)
    out = jax.block_until_ready(out)

    ref = multi_scale_season_mixing_ref(season_list, raw_params)
    for o, r in zip(out, ref):
        assert o.shape == r.shape and o.dtype == r.dtype
        assert jnp.allclose(o, r, atol=1e-4, rtol=1e-4), "Pallas kernel mismatch vs reference"

    print("KERNEL_OK")
</pallas_src>

<mosaic_0001>
module attributes {stable_mosaic.version = 11 : i64} {
  func.func @kernel(%arg0: i32, %arg1: memref<16x128xf32, #tpu.memory_space<vmem>>, %arg2: memref<8x128xf32, #tpu.memory_space<vmem>>, %arg3: memref<4x128xf32, #tpu.memory_space<vmem>>, %arg4: memref<8x144xf32, #tpu.memory_space<vmem>>, %arg5: memref<8x72xf32, #tpu.memory_space<vmem>>, %arg6: memref<4x72xf32, #tpu.memory_space<vmem>>, %arg7: memref<4x72xf32, #tpu.memory_space<vmem>>, %arg8: memref<8x128xf32, #tpu.memory_space<vmem>>, %arg9: memref<4x128xf32, #tpu.memory_space<vmem>>, %arg10: memref<144x128xf32, #tpu.memory_space<vmem>>, %arg11: memref<72x128xf32, #tpu.memory_space<vmem>>, %arg12: memref<72x128xf32, #tpu.memory_space<vmem>>, %arg13: memref<72x128xf32, #tpu.memory_space<vmem>>) attributes {dimension_semantics = [#tpu.dimension_semantics<parallel>], iteration_bounds = array<i64: 1>, scalar_prefetch = 0 : i64, scratch_operands = 4 : i64, tpu.core_type = #tpu.core_type<tc>, window_params = [{transform_indices = @transform_0, window_bounds = array<i64: 16, 128>}, {transform_indices = @transform_1, window_bounds = array<i64: 8, 128>}, {transform_indices = @transform_2, window_bounds = array<i64: 4, 128>}, {pipeline_mode = #tpu.pipeline_mode<synchronous>, transform_indices = @transform_3, window_bounds = array<i64: 8, 144>}, {pipeline_mode = #tpu.pipeline_mode<synchronous>, transform_indices = @transform_4, window_bounds = array<i64: 8, 72>}, {pipeline_mode = #tpu.pipeline_mode<synchronous>, transform_indices = @transform_5, window_bounds = array<i64: 4, 72>}, {pipeline_mode = #tpu.pipeline_mode<synchronous>, transform_indices = @transform_6, window_bounds = array<i64: 4, 72>}, {transform_indices = @transform_7, window_bounds = array<i64: 8, 128>}, {transform_indices = @transform_8, window_bounds = array<i64: 4, 128>}]} {
    %c0 = arith.constant 0 : index
    %c0_0 = arith.constant 0 : index
    %0 = vector.load %arg1[%c0, %c0_0] : memref<16x128xf32, #tpu.memory_space<vmem>>, vector<16x128xf32>
    %cst = arith.constant 0.000000e+00 : f32
    %1 = vector.broadcast %cst : f32 to vector<16x128xf32>
    %2 = arith.subf %1, %0 : vector<16x128xf32>
    %3 = math.exp %2 : vector<16x128xf32>
    %cst_1 = arith.constant 1.000000e+00 : f32
    %4 = vector.broadcast %cst_1 : f32 to vector<16x128xf32>
    %5 = arith.addf %4, %3 : vector<16x128xf32>
    %cst_2 = arith.constant 1.000000e+00 : f32
    %6 = vector.broadcast %cst_2 : f32 to vector<16x128xf32>
    %7 = arith.divf %6, %5 : vector<16x128xf32>
    %8 = arith.mulf %0, %7 : vector<16x128xf32>
    %c0_3 = arith.constant 0 : index
    %c0_4 = arith.constant 0 : index
    %9 = vector.load %arg10[%c0_3, %c0_4] : memref<144x128xf32, #tpu.memory_space<vmem>>, vector<16x128xf32>
    tpu.vector_store %arg10[%c0_3, %c0_4], %8 {strides = array<i32>} : memref<144x128xf32, #tpu.memory_space<vmem>>, vector<16x128xf32>,
    %cst_5 = arith.constant -2.200000e+00 : f32
    %10 = vector.broadcast %cst_5 : f32 to vector<16x128xf32>
    %11 = arith.cmpf oge, %0, %10 : vector<16x128xf32>
    %cst_6 = arith.constant -1.800000e+00 : f32
    %12 = vector.broadcast %cst_6 : f32 to vector<16x128xf32>
    %13 = arith.cmpf olt, %0, %12 : vector<16x128xf32>
    %14 = arith.andi %11, %13 : vector<16x128xi1>
    %cst_7 = arith.constant 1.000000e+00 : f32
    %cst_8 = arith.constant 0.000000e+00 : f32
    %15 = vector.broadcast %cst_7 : f32 to vector<16x128xf32>
    %16 = vector.broadcast %cst_8 : f32 to vector<16x128xf32>
    %17 = arith.select %14, %15, %16 : vector<16x128xi1>, vector<16x128xf32>
    %cst_9 = arith.constant -1.800000e+00 : f32
    %18 = vector.broadcast %cst_9 : f32 to vector<16x128xf32>
    %19 = arith.cmpf oge, %0, %18 : vector<16x128xf32>
    %cst_10 = arith.constant -1.400000e+00 : f32
    %20 = vector.broadcast %cst_10 : f32 to vector<16x128xf32>
    %21 = arith.cmpf olt, %0, %20 : vector<16x128xf32>
    %22 = arith.andi %19, %21 : vector<16x128xi1>
    %cst_11 = arith.constant 1.000000e+00 : f32
    %cst_12 = arith.constant 0.000000e+00 : f32
    %23 = vector.broadcast %cst_11 : f32 to vector<16x128xf32>
    %24 = vector.broadcast %cst_12 : f32 to vector<16x128xf32>
    %25 = arith.select %22, %23, %24 : vector<16x128xi1>, vector<16x128xf32>
    %cst_13 = arith.constant -1.400000e+00 : f32
    %26 = vector.broadcast %cst_13 : f32 to vector<16x128xf32>
    %27 = arith.cmpf oge, %0, %26 : vector<16x128xf32>
    %cst_14 = arith.constant -1.000000e+00 : f32
    %28 = vector.broadcast %cst_14 : f32 to vector<16x128xf32>
    %29 = arith.cmpf olt, %0, %28 : vector<16x128xf32>
    %30 = arith.andi %27, %29 : vector<16x128xi1>
    %cst_15 = arith.constant 1.000000e+00 : f32
    %cst_16 = arith.constant 0.000000e+00 : f32
    %31 = vector.broadcast %cst_15 : f32 to vector<16x128xf32>
    %32 = vector.broadcast %cst_16 : f32 to vector<16x128xf32>
    %33 = arith.select %30, %31, %32 : vector<16x128xi1>, vector<16x128xf32>
    %cst_17 = arith.constant -1.000000e+00 : f32
    %34 = vector.broadcast %cst_17 : f32 to vector<16x128xf32>
    %35 = arith.cmpf oge, %0, %34 : vector<16x128xf32>
    %cst_18 = arith.constant -6.000000e-01 : f32
    %36 = vector.broadcast %cst_18 : f32 to vector<16x128xf32>
    %37 = arith.cmpf olt, %0, %36 : vector<16x128xf32>
    %38 = arith.andi %35, %37 : vector<16x128xi1>
    %cst_19 = arith.constant 1.000000e+00 : f32
    %cst_20 = arith.constant 0.000000e+00 : f32
    %39 = vector.broadcast %cst_19 : f32 to vector<16x128xf32>
    %40 = vector.broadcast %cst_20 : f32 to vector<16x128xf32>
    %41 = arith.select %38, %39, %40 : vector<16x128xi1>, vector<16x128xf32>
    %cst_21 = arith.constant -6.000000e-01 : f32
    %42 = vector.broadcast %cst_21 : f32 to vector<16x128xf32>
    %43 = arith.cmpf oge, %0, %42 : vector<16x128xf32>
    %cst_22 = arith.constant -2.000000e-01 : f32
    %44 = vector.broadcast %cst_22 : f32 to vector<16x128xf32>
    %45 = arith.cmpf olt, %0, %44 : vector<16x128xf32>
    %46 = arith.andi %43, %45 : vector<16x128xi1>
    %cst_23 = arith.constant 1.000000e+00 : f32
    %cst_24 = arith.constant 0.000000e+00 : f32
    %47 = vector.broadcast %cst_23 : f32 to vector<16x128xf32>
    %48 = vector.broadcast %cst_24 : f32 to vector<16x128xf32>
    %49 = arith.select %46, %47, %48 : vector<16x128xi1>, vector<16x128xf32>
    %cst_25 = arith.constant -2.000000e-01 : f32
    %50 = vector.broadcast %cst_25 : f32 to vector<16x128xf32>
    %51 = arith.cmpf oge, %0, %50 : vector<16x128xf32>
    %cst_26 = arith.constant 2.000000e-01 : f32
    %52 = vector.broadcast %cst_26 : f32 to vector<16x128xf32>
    %53 = arith.cmpf olt, %0, %52 : vector<16x128xf32>
    %54 = arith.andi %51, %53 : vector<16x128xi1>
    %cst_27 = arith.constant 1.000000e+00 : f32
    %cst_28 = arith.constant 0.000000e+00 : f32
    %55 = vector.broadcast %cst_27 : f32 to vector<16x128xf32>
    %56 = vector.broadcast %cst_28 : f32 to vector<16x128xf32>
    %57 = arith.select %54, %55, %56 : vector<16x128xi1>, vector<16x128xf32>
    %cst_29 = arith.constant 2.000000e-01 : f32
    %58 = vector.broadcast %cst_29 : f32 to vector<16x128xf32>
    %59 = arith.cmpf oge, %0, %58 : vector<16x128xf32>
    %cst_30 = arith.constant 6.000000e-01 : f32
    %60 = vector.broadcast %cst_30 : f32 to vector<16x128xf32>
    %61 = arith.cmpf olt, %0, %60 : vector<16x128xf32>
    %62 = arith.andi %59, %61 : vector<16x128xi1>
    %cst_31 = arith.constant 1.000000e+00 : f32
    %cst_32 = arith.constant 0.000000e+00 : f32
    %63 = vector.broadcast %cst_31 : f32 to vector<16x128xf32>
    %64 = vector.broadcast %cst_32 : f32 to vector<16x128xf32>
    %65 = arith.select %62, %63, %64 : vector<16x128xi1>, vector<16x128xf32>
    %cst_33 = arith.constant 6.000000e-01 : f32
    %66 = vector.broadcast %cst_33 : f32 to vector<16x128xf32>
    %67 = arith.cmpf oge, %0, %66 : vector<16x128xf32>
    %cst_34 = arith.constant 1.000000e+00 : f32
    %68 = vector.broadcast %cst_34 : f32 to vector<16x128xf32>
    %69 = arith.cmpf olt, %0, %68 : vector<16x128xf32>
    %70 = arith.andi %67, %69 : vector<16x128xi1>
    %cst_35 = arith.constant 1.000000e+00 : f32
    %cst_36 = arith.constant 0.000000e+00 : f32
    %71 = vector.broadcast %cst_35 : f32 to vector<16x128xf32>
    %72 = vector.broadcast %cst_36 : f32 to vector<16x128xf32>
    %73 = arith.select %70, %71, %72 : vector<16x128xi1>, vector<16x128xf32>
    %cst_37 = arith.constant 1.000000e+00 : f32
    %74 = vector.broadcast %cst_37 : f32 to vector<16x128xf32>
    %75 = arith.cmpf oge, %0, %74 : vector<16x128xf32>
    %cst_38 = arith.constant 1.400000e+00 : f32
    %76 = vector.broadcast %cst_38 : f32 to vector<16x128xf32>
    %77 = arith.cmpf olt, %0, %76 : vector<16x128xf32>
    %78 = arith.andi %75, %77 : vector<16x128xi1>
    %cst_39 = arith.constant 1.000000e+00 : f32
    %cst_40 = arith.constant 0.000000e+00 : f32
    %79 = vector.broadcast %cst_39 : f32 to vector<16x128xf32>
    %80 = vector.broadcast %cst_40 : f32 to vector<16x128xf32>
    %81 = arith.select %78, %79, %80 : vector<16x128xi1>, vector<16x128xf32>
    %cst_41 = arith.constant 1.400000e+00 : f32
    %82 = vector.broadcast %cst_41 : f32 to vector<16x128xf32>
    %83 = arith.cmpf oge, %0, %82 : vector<16x128xf32>
    %cst_42 = arith.constant 1.800000e+00 : f32
    %84 = vector.broadcast %cst_42 : f32 to vector<16x128xf32>
    %85 = arith.cmpf olt, %0, %84 : vector<16x128xf32>
    %86 = arith.andi %83, %85 : vector<16x128xi1>
    %cst_43 = arith.constant 1.000000e+00 : f32
    %cst_44 = arith.constant 0.000000e+00 : f32
    %87 = vector.broadcast %cst_43 : f32 to vector<16x128xf32>
    %88 = vector.broadcast %cst_44 : f32 to vector<16x128xf32>
    %89 = arith.select %86, %87, %88 : vector<16x128xi1>, vector<16x128xf32>
    %cst_45 = arith.constant 1.800000e+00 : f32
    %90 = vector.broadcast %cst_45 : f32 to vector<16x128xf32>
    %91 = arith.cmpf oge, %0, %90 : vector<16x128xf32>
    %cst_46 = arith.constant 2.200000e+00 : f32
    %92 = vector.broadcast %cst_46 : f32 to vector<16x128xf32>
    %93 = arith.cmpf olt, %0, %92 : vector<16x128xf32>
    %94 = arith.andi %91, %93 : vector<16x128xi1>
    %cst_47 = arith.constant 1.000000e+00 : f32
    %cst_48 = arith.constant 0.000000e+00 : f32
    %95 = vector.broadcast %cst_47 : f32 to vector<16x128xf32>
    %96 = vector.broadcast %cst_48 : f32 to vector<16x128xf32>
    %97 = arith.select %94, %95, %96 : vector<16x128xi1>, vector<16x128xf32>
    %cst_49 = arith.constant -2.200000e+00 : f32
    %98 = vector.broadcast %cst_49 : f32 to vector<16x128xf32>
    %99 = arith.subf %0, %98 : vector<16x128xf32>
    %cst_50 = arith.constant 2.500000e+00 : f32
    %100 = vector.broadcast %cst_50 : f32 to vector<16x128xf32>
    %101 = arith.mulf %99, %100 : vector<16x128xf32>
    %102 = arith.mulf %101, %17 : vector<16x128xf32>
    %cst_51 = arith.constant -1.400000e+00 : f32
    %103 = vector.broadcast %cst_51 : f32 to vector<16x128xf32>
    %104 = arith.subf %103, %0 : vector<16x128xf32>
    %cst_52 = arith.constant 2.500000e+00 : f32
    %105 = vector.broadcast %cst_52 : f32 to vector<16x128xf32>
    %106 = arith.mulf %104, %105 : vector<16x128xf32>
    %107 = arith.mulf %106, %25 : vector<16x128xf32>
    %108 = arith.addf %102, %107 : vector<16x128xf32>
    %cst_53 = arith.constant -1.800000e+00 : f32
    %109 = vector.broadcast %cst_53 : f32 to vector<16x128xf32>
    %110 = arith.subf %0, %109 : vector<16x128xf32>
    %cst_54 = arith.constant 2.500000e+00 : f32
    %111 = vector.broadcast %cst_54 : f32 to vector<16x128xf32>
    %112 = arith.mulf %110, %111 : vector<16x128xf32>
    %113 = arith.mulf %112, %25 : vector<16x128xf32>
    %cst_55 = arith.constant -1.000000e+00 : f32
    %114 = vector.broadcast %cst_55 : f32 to vector<16x128xf32>
    %115 = arith.subf %114, %0 : vector<16x128xf32>
    %cst_56 = arith.constant 2.500000e+00 : f32
    %116 = vector.broadcast %cst_56 : f32 to vector<16x128xf32>
    %117 = arith.mulf %115, %116 : vector<16x128xf32>
    %118 = arith.mulf %117, %33 : vector<16x128xf32>
    %119 = arith.addf %113, %118 : vector<16x128xf32>
    %cst_57 = arith.constant -1.400000e+00 : f32
    %120 = vector.broadcast %cst_57 : f32 to vector<16x128xf32>
    %121 = arith.subf %0, %120 : vector<16x128xf32>
    %cst_58 = arith.constant 2.500000e+00 : f32
    %122 = vector.broadcast %cst_58 : f32 to vector<16x128xf32>
    %123 = arith.mulf %121, %122 : vector<16x128xf32>
    %124 = arith.mulf %123, %33 : vector<16x128xf32>
    %cst_59 = arith.constant -6.000000e-01 : f32
    %125 = vector.broadcast %cst_59 : f32 to vector<16x128xf32>
    %126 = arith.subf %125, %0 : vector<16x128xf32>
    %cst_60 = arith.constant 2.500000e+00 : f32
    %127 = vector.broadcast %cst_60 : f32 to vector<16x128xf32>
    %128 = arith.mulf %126, %127 : vector<16x128xf32>
    %129 = arith.mulf %128, %41 : vector<16x128xf32>
    %130 = arith.addf %124, %129 : vector<16x128xf32>
    %cst_61 = arith.constant -1.000000e+00 : f32
    %131 = vector.broadcast %cst_61 : f32 to vector<16x128xf32>
    %132 = arith.subf %0, %131 : vector<16x128xf32>
    %cst_62 = arith.constant 2.500000e+00 : f32
    %133 = vector.broadcast %cst_62 : f32 to vector<16x128xf32>
    %134 = arith.mulf %132, %133 : vector<16x128xf32>
    %135 = arith.mulf %134, %41 : vector<16x128xf32>
    %cst_63 = arith.constant -2.000000e-01 : f32
    %136 = vector.broadcast %cst_63 : f32 to vector<16x128xf32>
    %137 = arith.subf %136, %0 : vector<16x128xf32>
    %cst_64 = arith.constant 2.500000e+00 : f32
    %138 = vector.broadcast %cst_64 : f32 to vector<16x128xf32>
    %139 = arith.mulf %137, %138 : vector<16x128xf32>
    %140 = arith.mulf %139, %49 : vector<16x128xf32>
    %141 = arith.addf %135, %140 : vector<16x128xf32>
    %cst_65 = arith.constant -6.000000e-01 : f32
    %142 = vector.broadcast %cst_65 : f32 to vector<16x128xf32>
    %143 = arith.subf %0, %142 : vector<16x128xf32>
    %cst_66 = arith.constant 2.500000e+00 : f32
    %144 = vector.broadcast %cst_66 : f32 to vector<16x128xf32>
    %145 = arith.mulf %143, %144 : vector<16x128xf32>
    %146 = arith.mulf %145, %49 : vector<16x128xf32>
    %cst_67 = arith.constant 2.000000e-01 : f32
    %147 = vector.broadcast %cst_67 : f32 to vector<16x128xf32>
    %148 = arith.subf %147, %0 : vector<16x128xf32>
    %cst_68 = arith.constant 2.500000e+00 : f32
    %149 = vector.broadcast %cst_68 : f32 to vector<16x128xf32>
    %150 = arith.mulf %148, %149 : vector<16x128xf32>
    %151 = arith.mulf %150, %57 : vector<16x128xf32>
    %152 = arith.addf %146, %151 : vector<16x128xf32>
    %cst_69 = arith.constant -2.000000e-01 : f32
    %153 = vector.broadcast %cst_69 : f32 to vector<16x128xf32>
    %154 = arith.subf %0, %153 : vector<16x128xf32>
    %cst_70 = arith.constant 2.500000e+00 : f32
    %155 = vector.broadcast %cst_70 : f32 to vector<16x128xf32>
    %156 = arith.mulf %154, %155 : vector<16x128xf32>
    %157 = arith.mulf %156, %57 : vector<16x128xf32>
    %cst_71 = arith.constant 6.000000e-01 : f32
    %158 = vector.broadcast %cst_71 : f32 to vector<16x128xf32>
    %159 = arith.subf %158, %0 : vector<16x128xf32>
    %cst_72 = arith.constant 2.500000e+00 : f32
    %160 = vector.broadcast %cst_72 : f32 to vector<16x128xf32>
    %161 = arith.mulf %159, %160 : vector<16x128xf32>
    %162 = arith.mulf %161, %65 : vector<16x128xf32>
    %163 = arith.addf %157, %162 : vector<16x128xf32>
    %cst_73 = arith.constant 2.000000e-01 : f32
    %164 = vector.broadcast %cst_73 : f32 to vector<16x128xf32>
    %165 = arith.subf %0, %164 : vector<16x128xf32>
    %cst_74 = arith.constant 2.500000e+00 : f32
    %166 = vector.broadcast %cst_74 : f32 to vector<16x128xf32>
    %167 = arith.mulf %165, %166 : vector<16x128xf32>
    %168 = arith.mulf %167, %65 : vector<16x128xf32>
    %cst_75 = arith.constant 1.000000e+00 : f32
    %169 = vector.broadcast %cst_75 : f32 to vector<16x128xf32>
    %170 = arith.subf %169, %0 : vector<16x128xf32>
    %cst_76 = arith.constant 2.500000e+00 : f32
    %171 = vector.broadcast %cst_76 : f32 to vector<16x128xf32>
    %172 = arith.mulf %170, %171 : vector<16x128xf32>
    %173 = arith.mulf %172, %73 : vector<16x128xf32>
    %174 = arith.addf %168, %173 : vector<16x128xf32>
    %cst_77 = arith.constant 6.000000e-01 : f32
    %175 = vector.broadcast %cst_77 : f32 to vector<16x128xf32>
    %176 = arith.subf %0, %175 : vector<16x128xf32>
    %cst_78 = arith.constant 2.500000e+00 : f32
    %177 = vector.broadcast %cst_78 : f32 to vector<16x128xf32>
    %178 = arith.mulf %176, %177 : vector<16x128xf32>
    %179 = arith.mulf %178, %73 : vector<16x128xf32>
    %cst_79 = arith.constant 1.400000e+00 : f32
    %180 = vector.broadcast %cst_79 : f32 to vector<16x128xf32>
    %181 = arith.subf %180, %0 : vector<16x128xf32>
    %cst_80 = arith.constant 2.500000e+00 : f32
    %182 = vector.broadcast %cst_80 : f32 to vector<16x128xf32>
    %183 = arith.mulf %181, %182 : vector<16x128xf32>
    %184 = arith.mulf %183, %81 : vector<16x128xf32>
    %185 = arith.addf %179, %184 : vector<16x128xf32>
    %cst_81 = arith.constant 1.000000e+00 : f32
    %186 = vector.broadcast %cst_81 : f32 to vector<16x128xf32>
    %187 = arith.subf %0, %186 : vector<16x128xf32>
    %cst_82 = arith.constant 2.500000e+00 : f32
    %188 = vector.broadcast %cst_82 : f32 to vector<16x128xf32>
    %189 = arith.mulf %187, %188 : vector<16x128xf32>
    %190 = arith.mulf %189, %81 : vector<16x128xf32>
    %cst_83 = arith.constant 1.800000e+00 : f32
    %191 = vector.broadcast %cst_83 : f32 to vector<16x128xf32>
    %192 = arith.subf %191, %0 : vector<16x128xf32>
    %cst_84 = arith.constant 2.500000e+00 : f32
    %193 = vector.broadcast %cst_84 : f32 to vector<16x128xf32>
    %194 = arith.mulf %192, %193 : vector<16x128xf32>
    %195 = arith.mulf %194, %89 : vector<16x128xf32>
    %196 = arith.addf %190, %195 : vector<16x128xf32>
    %cst_85 = arith.constant 1.400000e+00 : f32
    %197 = vector.broadcast %cst_85 : f32 to vector<16x128xf32>
    %198 = arith.subf %0, %197 : vector<16x128xf32>
    %cst_86 = arith.constant 2.500000e+00 : f32
    %199 = vector.broadcast %cst_86 : f32 to vector<16x128xf32>
    %200 = arith.mulf %198, %199 : vector<16x128xf32>
    %201 = arith.mulf %200, %89 : vector<16x128xf32>
    %cst_87 = arith.constant 2.200000e+00 : f32
    %202 = vector.broadcast %cst_87 : f32 to vector<16x128xf32>
    %203 = arith.subf %202, %0 : vector<16x128xf32>
    %cst_88 = arith.constant 2.500000e+00 : f32
    %204 = vector.broadcast %cst_88 : f32 to vector<16x128xf32>
    %205 = arith.mulf %203, %204 : vector<16x128xf32>
    %206 = arith.mulf %205, %97 : vector<16x128xf32>
    %207 = arith.addf %201, %206 : vector<16x128xf32>
    %cst_89 = arith.constant -2.200000e+00 : f32
    %208 = vector.broadcast %cst_89 : f32 to vector<16x128xf32>
    %209 = arith.subf %0, %208 : vector<16x128xf32>
    %cst_90 = arith.constant 1.250000e+00 : f32
    %210 = vector.broadcast %cst_90 : f32 to vector<16x128xf32>
    %211 = arith.mulf %209, %210 : vector<16x128xf32>
    %212 = arith.mulf %211, %108 : vector<16x128xf32>
    %cst_91 = arith.constant -1.000000e+00 : f32
    %213 = vector.broadcast %cst_91 : f32 to vector<16x128xf32>
    %214 = arith.subf %213, %0 : vector<16x128xf32>
    %cst_92 = arith.constant 1.250000e+00 : f32
    %215 = vector.broadcast %cst_92 : f32 to vector<16x128xf32>
    %216 = arith.mulf %214, %215 : vector<16x128xf32>
    %217 = arith.mulf %216, %119 : vector<16x128xf32>
    %218 = arith.addf %212, %217 : vector<16x128xf32>
    %cst_93 = arith.constant -1.800000e+00 : f32
    %219 = vector.broadcast %cst_93 : f32 to vector<16x128xf32>
    %220 = arith.subf %0, %219 : vector<16x128xf32>
    %cst_94 = arith.constant 1.250000e+00 : f32
    %221 = vector.broadcast %cst_94 : f32 to vector<16x128xf32>
    %222 = arith.mulf %220, %221 : vector<16x128xf32>
    %223 = arith.mulf %222, %119 : vector<16x128xf32>
    %cst_95 = arith.constant -6.000000e-01 : f32
    %224 = vector.broadcast %cst_95 : f32 to vector<16x128xf32>
    %225 = arith.subf %224, %0 : vector<16x128xf32>
    %cst_96 = arith.constant 1.250000e+00 : f32
    %226 = vector.broadcast %cst_96 : f32 to vector<16x128xf32>
    %227 = arith.mulf %225, %226 : vector<16x128xf32>
    %228 = arith.mulf %227, %130 : vector<16x128xf32>
    %229 = arith.addf %223, %228 : vector<16x128xf32>
    %cst_97 = arith.constant -1.400000e+00 : f32
    %230 = vector.broadcast %cst_97 : f32 to vector<16x128xf32>
    %231 = arith.subf %0, %230 : vector<16x128xf32>
    %cst_98 = arith.constant 1.250000e+00 : f32
    %232 = vector.broadcast %cst_98 : f32 to vector<16x128xf32>
    %233 = arith.mulf %231, %232 : vector<16x128xf32>
    %234 = arith.mulf %233, %130 : vector<16x128xf32>
    %cst_99 = arith.constant -2.000000e-01 : f32
    %235 = vector.broadcast %cst_99 : f32 to vector<16x128xf32>
    %236 = arith.subf %235, %0 : vector<16x128xf32>
    %cst_100 = arith.constant 1.250000e+00 : f32
    %237 = vector.broadcast %cst_100 : f32 to vector<16x128xf32>
    %238 = arith.mulf %236, %237 : vector<16x128xf32>
    %239 = arith.mulf %238, %141 : vector<16x128xf32>
    %240 = arith.addf %234, %239 : vector<16x128xf32>
    %cst_101 = arith.constant -1.000000e+00 : f32
    %241 = vector.broadcast %cst_101 : f32 to vector<16x128xf32>
    %242 = arith.subf %0, %241 : vector<16x128xf32>
    %cst_102 = arith.constant 1.250000e+00 : f32
    %243 = vector.broadcast %cst_102 : f32 to vector<16x128xf32>
    %244 = arith.mulf %242, %243 : vector<16x128xf32>
    %245 = arith.mulf %244, %141 : vector<16x128xf32>
    %cst_103 = arith.constant 2.000000e-01 : f32
    %246 = vector.broadcast %cst_103 : f32 to vector<16x128xf32>
    %247 = arith.subf %246, %0 : vector<16x128xf32>
    %cst_104 = arith.constant 1.250000e+00 : f32
    %248 = vector.broadcast %cst_104 : f32 to vector<16x128xf32>
    %249 = arith.mulf %247, %248 : vector<16x128xf32>
    %250 = arith.mulf %249, %152 : vector<16x128xf32>
    %251 = arith.addf %245, %250 : vector<16x128xf32>
    %cst_105 = arith.constant -6.000000e-01 : f32
    %252 = vector.broadcast %cst_105 : f32 to vector<16x128xf32>
    %253 = arith.subf %0, %252 : vector<16x128xf32>
    %cst_106 = arith.constant 1.250000e+00 : f32
    %254 = vector.broadcast %cst_106 : f32 to vector<16x128xf32>
    %255 = arith.mulf %253, %254 : vector<16x128xf32>
    %256 = arith.mulf %255, %152 : vector<16x128xf32>
    %cst_107 = arith.constant 6.000000e-01 : f32
    %257 = vector.broadcast %cst_107 : f32 to vector<16x128xf32>
    %258 = arith.subf %257, %0 : vector<16x128xf32>
    %cst_108 = arith.constant 1.250000e+00 : f32
    %259 = vector.broadcast %cst_108 : f32 to vector<16x128xf32>
    %260 = arith.mulf %258, %259 : vector<16x128xf32>
    %261 = arith.mulf %260, %163 : vector<16x128xf32>
    %262 = arith.addf %256, %261 : vector<16x128xf32>
    %cst_109 = arith.constant -2.000000e-01 : f32
    %263 = vector.broadcast %cst_109 : f32 to vector<16x128xf32>
    %264 = arith.subf %0, %263 : vector<16x128xf32>
    %cst_110 = arith.constant 1.250000e+00 : f32
    %265 = vector.broadcast %cst_110 : f32 to vector<16x128xf32>
    %266 = arith.mulf %264, %265 : vector<16x128xf32>
    %267 = arith.mulf %266, %163 : vector<16x128xf32>
    %cst_111 = arith.constant 1.000000e+00 : f32
    %268 = vector.broadcast %cst_111 : f32 to vector<16x128xf32>
    %269 = arith.subf %268, %0 : vector<16x128xf32>
    %cst_112 = arith.constant 1.250000e+00 : f32
    %270 = vector.broadcast %cst_112 : f32 to vector<16x128xf32>
    %271 = arith.mulf %269, %270 : vector<16x128xf32>
    %272 = arith.mulf %271, %174 : vector<16x128xf32>
    %273 = arith.addf %267, %272 : vector<16x128xf32>
    %cst_113 = arith.constant 2.000000e-01 : f32
    %274 = vector.broadcast %cst_113 : f32 to vector<16x128xf32>
    %275 = arith.subf %0, %274 : vector<16x128xf32>
    %cst_114 = arith.constant 1.250000e+00 : f32
    %276 = vector.broadcast %cst_114 : f32 to vector<16x128xf32>
    %277 = arith.mulf %275, %276 : vector<16x128xf32>
    %278 = arith.mulf %277, %174 : vector<16x128xf32>
    %cst_115 = arith.constant 1.400000e+00 : f32
    %279 = vector.broadcast %cst_115 : f32 to vector<16x128xf32>
    %280 = arith.subf %279, %0 : vector<16x128xf32>
    %cst_116 = arith.constant 1.250000e+00 : f32
    %281 = vector.broadcast %cst_116 : f32 to vector<16x128xf32>
    %282 = arith.mulf %280, %281 : vector<16x128xf32>
    %283 = arith.mulf %282, %185 : vector<16x128xf32>
    %284 = arith.addf %278, %283 : vector<16x128xf32>
    %cst_117 = arith.constant 6.000000e-01 : f32
    %285 = vector.broadcast %cst_117 : f32 to vector<16x128xf32>
    %286 = arith.subf %0, %285 : vector<16x128xf32>
    %cst_118 = arith.constant 1.250000e+00 : f32
    %287 = vector.broadcast %cst_118 : f32 to vector<16x128xf32>
    %288 = arith.mulf %286, %287 : vector<16x128xf32>
    %289 = arith.mulf %288, %185 : vector<16x128xf32>
    %cst_119 = arith.constant 1.800000e+00 : f32
    %290 = vector.broadcast %cst_119 : f32 to vector<16x128xf32>
    %291 = arith.subf %290, %0 : vector<16x128xf32>
    %cst_120 = arith.constant 1.250000e+00 : f32
    %292 = vector.broadcast %cst_120 : f32 to vector<16x128xf32>
    %293 = arith.mulf %291, %292 : vector<16x128xf32>
    %294 = arith.mulf %293, %196 : vector<16x128xf32>
    %295 = arith.addf %289, %294 : vector<16x128xf32>
    %cst_121 = arith.constant 1.000000e+00 : f32
    %296 = vector.broadcast %cst_121 : f32 to vector<16x128xf32>
    %297 = arith.subf %0, %296 : vector<16x128xf32>
    %cst_122 = arith.constant 1.250000e+00 : f32
    %298 = vector.broadcast %cst_122 : f32 to vector<16x128xf32>
    %299 = arith.mulf %297, %298 : vector<16x128xf32>
    %300 = arith.mulf %299, %196 : vector<16x128xf32>
    %cst_123 = arith.constant 2.200000e+00 : f32
    %301 = vector.broadcast %cst_123 : f32 to vector<16x128xf32>
    %302 = arith.subf %301, %0 : vector<16x128xf32>
    %cst_124 = arith.constant 1.250000e+00 : f32
    %303 = vector.broadcast %cst_124 : f32 to vector<16x128xf32>
    %304 = arith.mulf %302, %303 : vector<16x128xf32>
    %305 = arith.mulf %304, %207 : vector<16x128xf32>
    %306 = arith.addf %300, %305 : vector<16x128xf32>
    %cst_125 = arith.constant -2.200000e+00 : f32
    %307 = vector.broadcast %cst_125 : f32 to vector<16x128xf32>
    %308 = arith.subf %0, %307 : vector<16x128xf32>
    %cst_126 = arith.constant 0.833333313 : f32
    %309 = vector.broadcast %cst_126 : f32 to vector<16x128xf32>
    %310 = arith.mulf %308, %309 : vector<16x128xf32>
    %311 = arith.mulf %310, %218 : vector<16x128xf32>
    %cst_127 = arith.constant -6.000000e-01 : f32
    %312 = vector.broadcast %cst_127 : f32 to vector<16x128xf32>
    %313 = arith.subf %312, %0 : vector<16x128xf32>
    %cst_128 = arith.constant 0.833333313 : f32
    %314 = vector.broadcast %cst_128 : f32 to vector<16x128xf32>
    %315 = arith.mulf %313, %314 : vector<16x128xf32>
    %316 = arith.mulf %315, %229 : vector<16x128xf32>
    %317 = arith.addf %311, %316 : vector<16x128xf32>
    %cst_129 = arith.constant -1.800000e+00 : f32
    %318 = vector.broadcast %cst_129 : f32 to vector<16x128xf32>
    %319 = arith.subf %0, %318 : vector<16x128xf32>
    %cst_130 = arith.constant 0.833333313 : f32
    %320 = vector.broadcast %cst_130 : f32 to vector<16x128xf32>
    %321 = arith.mulf %319, %320 : vector<16x128xf32>
    %322 = arith.mulf %321, %229 : vector<16x128xf32>
    %cst_131 = arith.constant -2.000000e-01 : f32
    %323 = vector.broadcast %cst_131 : f32 to vector<16x128xf32>
    %324 = arith.subf %323, %0 : vector<16x128xf32>
    %cst_132 = arith.constant 0.833333313 : f32
    %325 = vector.broadcast %cst_132 : f32 to vector<16x128xf32>
    %326 = arith.mulf %324, %325 : vector<16x128xf32>
    %327 = arith.mulf %326, %240 : vector<16x128xf32>
    %328 = arith.addf %322, %327 : vector<16x128xf32>
    %cst_133 = arith.constant -1.400000e+00 : f32
    %329 = vector.broadcast %cst_133 : f32 to vector<16x128xf32>
    %330 = arith.subf %0, %329 : vector<16x128xf32>
    %cst_134 = arith.constant 0.833333313 : f32
    %331 = vector.broadcast %cst_134 : f32 to vector<16x128xf32>
    %332 = arith.mulf %330, %331 : vector<16x128xf32>
    %333 = arith.mulf %332, %240 : vector<16x128xf32>
    %cst_135 = arith.constant 2.000000e-01 : f32
    %334 = vector.broadcast %cst_135 : f32 to vector<16x128xf32>
    %335 = arith.subf %334, %0 : vector<16x128xf32>
    %cst_136 = arith.constant 0.833333313 : f32
    %336 = vector.broadcast %cst_136 : f32 to vector<16x128xf32>
    %337 = arith.mulf %335, %336 : vector<16x128xf32>
    %338 = arith.mulf %337, %251 : vector<16x128xf32>
    %339 = arith.addf %333, %338 : vector<16x128xf32>
    %cst_137 = arith.constant -1.000000e+00 : f32
    %340 = vector.broadcast %cst_137 : f32 to vector<16x128xf32>
    %341 = arith.subf %0, %340 : vector<16x128xf32>
    %cst_138 = arith.constant 0.833333313 : f32
    %342 = vector.broadcast %cst_138 : f32 to vector<16x128xf32>
    %343 = arith.mulf %341, %342 : vector<16x128xf32>
    %344 = arith.mulf %343, %251 : vector<16x128xf32>
    %cst_139 = arith.constant 6.000000e-01 : f32
    %345 = vector.broadcast %cst_139 : f32 to vector<16x128xf32>
    %346 = arith.subf %345, %0 : vector<16x128xf32>
    %cst_140 = arith.constant 0.833333313 : f32
    %347 = vector.broadcast %cst_140 : f32 to vector<16x128xf32>
    %348 = arith.mulf %346, %347 : vector<16x128xf32>
    %349 = arith.mulf %348, %262 : vector<16x128xf32>
    %350 = arith.addf %344, %349 : vector<16x128xf32>
    %cst_141 = arith.constant -6.000000e-01 : f32
    %351 = vector.broadcast %cst_141 : f32 to vector<16x128xf32>
    %352 = arith.subf %0, %351 : vector<16x128xf32>
    %cst_142 = arith.constant 0.833333313 : f32
    %353 = vector.broadcast %cst_142 : f32 to vector<16x128xf32>
    %354 = arith.mulf %352, %353 : vector<16x128xf32>
    %355 = arith.mulf %354, %262 : vector<16x128xf32>
    %cst_143 = arith.constant 1.000000e+00 : f32
    %356 = vector.broadcast %cst_143 : f32 to vector<16x128xf32>
    %357 = arith.subf %356, %0 : vector<16x128xf32>
    %cst_144 = arith.constant 0.833333313 : f32
    %358 = vector.broadcast %cst_144 : f32 to vector<16x128xf32>
    %359 = arith.mulf %357, %358 : vector<16x128xf32>
    %360 = arith.mulf %359, %273 : vector<16x128xf32>
    %361 = arith.addf %355, %360 : vector<16x128xf32>
    %cst_145 = arith.constant -2.000000e-01 : f32
    %362 = vector.broadcast %cst_145 : f32 to vector<16x128xf32>
    %363 = arith.subf %0, %362 : vector<16x128xf32>
    %cst_146 = arith.constant 0.833333313 : f32
    %364 = vector.broadcast %cst_146 : f32 to vector<16x128xf32>
    %365 = arith.mulf %363, %364 : vector<16x128xf32>
    %366 = arith.mulf %365, %273 : vector<16x128xf32>
    %cst_147 = arith.constant 1.400000e+00 : f32
    %367 = vector.broadcast %cst_147 : f32 to vector<16x128xf32>
    %368 = arith.subf %367, %0 : vector<16x128xf32>
    %cst_148 = arith.constant 0.833333313 : f32
    %369 = vector.broadcast %cst_148 : f32 to vector<16x128xf32>
    %370 = arith.mulf %368, %369 : vector<16x128xf32>
    %371 = arith.mulf %370, %284 : vector<16x128xf32>
    %372 = arith.addf %366, %371 : vector<16x128xf32>
    %cst_149 = arith.constant 2.000000e-01 : f32
    %373 = vector.broadcast %cst_149 : f32 to vector<16x128xf32>
    %374 = arith.subf %0, %373 : vector<16x128xf32>
    %cst_150 = arith.constant 0.833333313 : f32
    %375 = vector.broadcast %cst_150 : f32 to vector<16x128xf32>
    %376 = arith.mulf %374, %375 : vector<16x128xf32>
    %377 = arith.mulf %376, %284 : vector<16x128xf32>
    %cst_151 = arith.constant 1.800000e+00 : f32
    %378 = vector.broadcast %cst_151 : f32 to vector<16x128xf32>
    %379 = arith.subf %378, %0 : vector<16x128xf32>
    %cst_152 = arith.constant 0.833333313 : f32
    %380 = vector.broadcast %cst_152 : f32 to vector<16x128xf32>
    %381 = arith.mulf %379, %380 : vector<16x128xf32>
    %382 = arith.mulf %381, %295 : vector<16x128xf32>
    %383 = arith.addf %377, %382 : vector<16x128xf32>
    %cst_153 = arith.constant 6.000000e-01 : f32
    %384 = vector.broadcast %cst_153 : f32 to vector<16x128xf32>
    %385 = arith.subf %0, %384 : vector<16x128xf32>
    %cst_154 = arith.constant 0.833333313 : f32
    %386 = vector.broadcast %cst_154 : f32 to vector<16x128xf32>
    %387 = arith.mulf %385, %386 : vector<16x128xf32>
    %388 = arith.mulf %387, %295 : vector<16x128xf32>
    %cst_155 = arith.constant 2.200000e+00 : f32
    %389 = vector.broadcast %cst_155 : f32 to vector<16x128xf32>
    %390 = arith.subf %389, %0 : vector<16x128xf32>
    %cst_156 = arith.constant 0.833333313 : f32
    %391 = vector.broadcast %cst_156 : f32 to vector<16x128xf32>
    %392 = arith.mulf %390, %391 : vector<16x128xf32>
    %393 = arith.mulf %392, %306 : vector<16x128xf32>
    %394 = arith.addf %388, %393 : vector<16x128xf32>
    %c16 = arith.constant 16 : index
    %c0_157 = arith.constant 0 : index
    %395 = vector.load %arg10[%c16, %c0_157] : memref<144x128xf32, #tpu.memory_space<vmem>>, vector<16x128xf32>
    tpu.vector_store %arg10[%c16, %c0_157], %317 {strides = array<i32>} : memref<144x128xf32, #tpu.memory_space<vmem>>, vector<16x128xf32>,
    %c32 = arith.constant 32 : index
    %c0_158 = arith.constant 0 : index
    %396 = vector.load %arg10[%c32, %c0_158] : memref<144x128xf32, #tpu.memory_space<vmem>>, vector<16x128xf32>
    tpu.vector_store %arg10[%c32, %c0_158], %328 {strides = array<i32>} : memref<144x128xf32, #tpu.memory_space<vmem>>, vector<16x128xf32>,
    %c48 = arith.constant 48 : index
    %c0_159 = arith.constant 0 : index
    %397 = vector.load %arg10[%c48, %c0_159] : memref<144x128xf32, #tpu.memory_space<vmem>>, vector<16x128xf32>
    tpu.vector_store %arg10[%c48, %c0_159], %339 {strides = array<i32>} : memref<144x128xf32, #tpu.memory_space<vmem>>, vector<16x128xf32>,
    %c64 = arith.constant 64 : index
    %c0_160 = arith.constant 0 : index
    %398 = vector.load %arg10[%c64, %c0_160] : memref<144x128xf32, #tpu.memory_space<vmem>>, vector<16x128xf32>
    tpu.vector_store %arg10[%c64, %c0_160], %350 {strides = array<i32>} : memref<144x128xf32, #tpu.memory_space<vmem>>, vector<16x128xf32>,
    %c80 = arith.constant 80 : index
    %c0_161 = arith.constant 0 : index
    %399 = vector.load %arg10[%c80, %c0_161] : memref<144x128xf32, #tpu.memory_space<vmem>>, vector<16x128xf32>
    tpu.vector_store %arg10[%c80, %c0_161], %361 {strides = array<i32>} : memref<144x128xf32, #tpu.memory_space<vmem>>, vector<16x128xf32>,
    %c96 = arith.constant 96 : index
    %c0_162 = arith.constant 0 : index
    %400 = vector.load %arg10[%c96, %c0_162] : memref<144x128xf32, #tpu.memory_space<vmem>>, vector<16x128xf32>
    tpu.vector_store %arg10[%c96, %c0_162], %372 {strides = array<i32>} : memref<144x128xf32, #tpu.memory_space<vmem>>, vector<16x128xf32>,
    %c112 = arith.constant 112 : index
    %c0_163 = arith.constant 0 : index
    %401 = vector.load %arg10[%c112, %c0_163] : memref<144x128xf32, #tpu.memory_space<vmem>>, vector<16x128xf32>
    tpu.vector_store %arg10[%c112, %c0_163], %383 {strides = array<i32>} : memref<144x128xf32, #tpu.memory_space<vmem>>, vector<16x128xf32>,
    %c128 = arith.constant 128 : index
    %c0_164 = arith.constant 0 : index
    %402 = vector.load %arg10[%c128, %c0_164] : memref<144x128xf32, #tpu.memory_space<vmem>>, vector<16x128xf32>
    tpu.vector_store %arg10[%c128, %c0_164], %394 {strides = array<i32>} : memref<144x128xf32, #tpu.memory_space<vmem>>, vector<16x128xf32>,
    %c0_165 = arith.constant 0 : index
    %c0_166 = arith.constant 0 : index
    %403 = vector.load %arg4[%c0_165, %c0_166] : memref<8x144xf32, #tpu.memory_space<vmem>>, vector<8x144xf32>
    %c0_167 = arith.constant 0 : index
    %c0_168 = arith.constant 0 : index
    %404 = vector.load %arg10[%c0_167, %c0_168] : memref<144x128xf32, #tpu.memory_space<vmem>>, vector<144x128xf32>
    %cst_169 = arith.constant dense<0.000000e+00> : vector<8x128xf32>
    %405 = tpu.matmul %403, %404, %cst_169 {dimension_numbers = #tpu.dot_dimension_numbers<[1], [0], [0], [1], [0, 0, 1, 1], [], []>} : vector<8x144xf32>, vector<144x128xf32>, vector<8x128xf32> -> vector<8x128xf32>
    %cst_170 = arith.constant 0.000000e+00 : f32
    %406 = vector.broadcast %cst_170 : f32 to vector<8x128xf32>
    %407 = arith.subf %406, %405 : vector<8x128xf32>
    %408 = math.exp %407 : vector<8x128xf32>
    %cst_171 = arith.constant 1.000000e+00 : f32
    %409 = vector.broadcast %cst_171 : f32 to vector<8x128xf32>
    %410 = arith.addf %409, %408 : vector<8x128xf32>
    %cst_172 = arith.constant 1.000000e+00 : f32
    %411 = vector.broadcast %cst_172 : f32 to vector<8x128xf32>
    %412 = arith.divf %411, %410 : vector<8x128xf32>
    %413 = arith.mulf %405, %412 : vector<8x128xf32>
    %c0_173 = arith.constant 0 : index
    %c0_174 = arith.constant 0 : index
    %414 = vector.load %arg11[%c0_173, %c0_174] : memref<72x128xf32, #tpu.memory_space<vmem>>, vector<8x128xf32>
    tpu.vector_store %arg11[%c0_173, %c0_174], %413 {strides = array<i32>} : memref<72x128xf32, #tpu.memory_space<vmem>>, vector<8x128xf32>,
    %cst_175 = arith.constant -2.200000e+00 : f32
    %415 = vector.broadcast %cst_175 : f32 to vector<8x128xf32>
    %416 = arith.cmpf oge, %405, %415 : vector<8x128xf32>
    %cst_176 = arith.constant -1.800000e+00 : f32
    %417 = vector.broadcast %cst_176 : f32 to vector<8x128xf32>
    %418 = arith.cmpf olt, %405, %417 : vector<8x128xf32>
    %419 = arith.andi %416, %418 : vector<8x128xi1>
    %cst_177 = arith.constant 1.000000e+00 : f32
    %cst_178 = arith.constant 0.000000e+00 : f32
    %420 = vector.broadcast %cst_177 : f32 to vector<8x128xf32>
    %421 = vector.broadcast %cst_178 : f32 to vector<8x128xf32>
    %422 = arith.select %419, %420, %421 : vector<8x128xi1>, vector<8x128xf32>
    %cst_179 = arith.constant -1.800000e+00 : f32
    %423 = vector.broadcast %cst_179 : f32 to vector<8x128xf32>
    %424 = arith.cmpf oge, %405, %423 : vector<8x128xf32>
    %cst_180 = arith.constant -1.400000e+00 : f32
    %425 = vector.broadcast %cst_180 : f32 to vector<8x128xf32>
    %426 = arith.cmpf olt, %405, %425 : vector<8x128xf32>
    %427 = arith.andi %424, %426 : vector<8x128xi1>
    %cst_181 = arith.constant 1.000000e+00 : f32
    %cst_182 = arith.constant 0.000000e+00 : f32
    %428 = vector.broadcast %cst_181 : f32 to vector<8x128xf32>
    %429 = vector.broadcast %cst_182 : f32 to vector<8x128xf32>
    %430 = arith.select %427, %428, %429 : vector<8x128xi1>, vector<8x128xf32>
    %cst_183 = arith.constant -1.400000e+00 : f32
    %431 = vector.broadcast %cst_183 : f32 to vector<8x128xf32>
    %432 = arith.cmpf oge, %405, %431 : vector<8x128xf32>
    %cst_184 = arith.constant -1.000000e+00 : f32
    %433 = vector.broadcast %cst_184 : f32 to vector<8x128xf32>
    %434 = arith.cmpf olt, %405, %433 : vector<8x128xf32>
    %435 = arith.andi %432, %434 : vector<8x128xi1>
    %cst_185 = arith.constant 1.000000e+00 : f32
    %cst_186 = arith.constant 0.000000e+00 : f32
    %436 = vector.broadcast %cst_185 : f32 to vector<8x128xf32>
    %437 = vector.broadcast %cst_186 : f32 to vector<8x128xf32>
    %438 = arith.select %435, %436, %437 : vector<8x128xi1>, vector<8x128xf32>
    %cst_187 = arith.constant -1.000000e+00 : f32
    %439 = vector.broadcast %cst_187 : f32 to vector<8x128xf32>
    %440 = arith.cmpf oge, %405, %439 : vector<8x128xf32>
    %cst_188 = arith.constant -6.000000e-01 : f32
    %441 = vector.broadcast %cst_188 : f32 to vector<8x128xf32>
    %442 = arith.cmpf olt, %405, %441 : vector<8x128xf32>
    %443 = arith.andi %440, %442 : vector<8x128xi1>
    %cst_189 = arith.constant 1.000000e+00 : f32
    %cst_190 = arith.constant 0.000000e+00 : f32
    %444 = vector.broadcast %cst_189 : f32 to vector<8x128xf32>
    %445 = vector.broadcast %cst_190 : f32 to vector<8x128xf32>
    %446 = arith.select %443, %444, %445 : vector<8x128xi1>, vector<8x128xf32>
    %cst_191 = arith.constant -6.000000e-01 : f32
    %447 = vector.broadcast %cst_191 : f32 to vector<8x128xf32>
    %448 = arith.cmpf oge, %405, %447 : vector<8x128xf32>
    %cst_192 = arith.constant -2.000000e-01 : f32
    %449 = vector.broadcast %cst_192 : f32 to vector<8x128xf32>
    %450 = arith.cmpf olt, %405, %449 : vector<8x128xf32>
    %451 = arith.andi %448, %450 : vector<8x128xi1>
    %cst_193 = arith.constant 1.000000e+00 : f32
    %cst_194 = arith.constant 0.000000e+00 : f32
    %452 = vector.broadcast %cst_193 : f32 to vector<8x128xf32>
    %453 = vector.broadcast %cst_194 : f32 to vector<8x128xf32>
    %454 = arith.select %451, %452, %453 : vector<8x128xi1>, vector<8x128xf32>
    %cst_195 = arith.constant -2.000000e-01 : f32
    %455 = vector.broadcast %cst_195 : f32 to vector<8x128xf32>
    %456 = arith.cmpf oge, %405, %455 : vector<8x128xf32>
    %cst_196 = arith.constant 2.000000e-01 : f32
    %457 = vector.broadcast %cst_196 : f32 to vector<8x128xf32>
    %458 = arith.cmpf olt, %405, %457 : vector<8x128xf32>
    %459 = arith.andi %456, %458 : vector<8x128xi1>
    %cst_197 = arith.constant 1.000000e+00 : f32
    %cst_198 = arith.constant 0.000000e+00 : f32
    %460 = vector.broadcast %cst_197 : f32 to vector<8x128xf32>
    %461 = vector.broadcast %cst_198 : f32 to vector<8x128xf32>
    %462 = arith.select %459, %460, %461 : vector<8x128xi1>, vector<8x128xf32>
    %cst_199 = arith.constant 2.000000e-01 : f32
    %463 = vector.broadcast %cst_199 : f32 to vector<8x128xf32>
    %464 = arith.cmpf oge, %405, %463 : vector<8x128xf32>
    %cst_200 = arith.constant 6.000000e-01 : f32
    %465 = vector.broadcast %cst_200 : f32 to vector<8x128xf32>
    %466 = arith.cmpf olt, %405, %465 : vector<8x128xf32>
    %467 = arith.andi %464, %466 : vector<8x128xi1>
    %cst_201 = arith.constant 1.000000e+00 : f32
    %cst_202 = arith.constant 0.000000e+00 : f32
    %468 = vector.broadcast %cst_201 : f32 to vector<8x128xf32>
    %469 = vector.broadcast %cst_202 : f32 to vector<8x128xf32>
    %470 = arith.select %467, %468, %469 : vector<8x128xi1>, vector<8x128xf32>
    %cst_203 = arith.constant 6.000000e-01 : f32
    %471 = vector.broadcast %cst_203 : f32 to vector<8x128xf32>
    %472 = arith.cmpf oge, %405, %471 : vector<8x128xf32>
    %cst_204 = arith.constant 1.000000e+00 : f32
    %473 = vector.broadcast %cst_204 : f32 to vector<8x128xf32>
    %474 = arith.cmpf olt, %405, %473 : vector<8x128xf32>
    %475 = arith.andi %472, %474 : vector<8x128xi1>
    %cst_205 = arith.constant 1.000000e+00 : f32
    %cst_206 = arith.constant 0.000000e+00 : f32
    %476 = vector.broadcast %cst_205 : f32 to vector<8x128xf32>
    %477 = vector.broadcast %cst_206 : f32 to vector<8x128xf32>
    %478 = arith.select %475, %476, %477 : vector<8x128xi1>, vector<8x128xf32>
    %cst_207 = arith.constant 1.000000e+00 : f32
    %479 = vector.broadcast %cst_207 : f32 to vector<8x128xf32>
    %480 = arith.cmpf oge, %405, %479 : vector<8x128xf32>
    %cst_208 = arith.constant 1.400000e+00 : f32
    %481 = vector.broadcast %cst_208 : f32 to vector<8x128xf32>
    %482 = arith.cmpf olt, %405, %481 : vector<8x128xf32>
    %483 = arith.andi %480, %482 : vector<8x128xi1>
    %cst_209 = arith.constant 1.000000e+00 : f32
    %cst_210 = arith.constant 0.000000e+00 : f32
    %484 = vector.broadcast %cst_209 : f32 to vector<8x128xf32>
    %485 = vector.broadcast %cst_210 : f32 to vector<8x128xf32>
    %486 = arith.select %483, %484, %485 : vector<8x128xi1>, vector<8x128xf32>
    %cst_211 = arith.constant 1.400000e+00 : f32
    %487 = vector.broadcast %cst_211 : f32 to vector<8x128xf32>
    %488 = arith.cmpf oge, %405, %487 : vector<8x128xf32>
    %cst_212 = arith.constant 1.800000e+00 : f32
    %489 = vector.broadcast %cst_212 : f32 to vector<8x128xf32>
    %490 = arith.cmpf olt, %405, %489 : vector<8x128xf32>
    %491 = arith.andi %488, %490 : vector<8x128xi1>
    %cst_213 = arith.constant 1.000000e+00 : f32
    %cst_214 = arith.constant 0.000000e+00 : f32
    %492 = vector.broadcast %cst_213 : f32 to vector<8x128xf32>
    %493 = vector.broadcast %cst_214 : f32 to vector<8x128xf32>
    %494 = arith.select %491, %492, %493 : vector<8x128xi1>, vector<8x128xf32>
    %cst_215 = arith.constant 1.800000e+00 : f32
    %495 = vector.broadcast %cst_215 : f32 to vector<8x128xf32>
    %496 = arith.cmpf oge, %405, %495 : vector<8x128xf32>
    %cst_216 = arith.constant 2.200000e+00 : f32
    %497 = vector.broadcast %cst_216 : f32 to vector<8x128xf32>
    %498 = arith.cmpf olt, %405, %497 : vector<8x128xf32>
    %499 = arith.andi %496, %498 : vector<8x128xi1>
    %cst_217 = arith.constant 1.000000e+00 : f32
    %cst_218 = arith.constant 0.000000e+00 : f32
    %500 = vector.broadcast %cst_217 : f32 to vector<8x128xf32>
    %501 = vector.broadcast %cst_218 : f32 to vector<8x128xf32>
    %502 = arith.select %499, %500, %501 : vector<8x128xi1>, vector<8x128xf32>
    %cst_219 = arith.constant -2.200000e+00 : f32
    %503 = vector.broadcast %cst_219 : f32 to vector<8x128xf32>
    %504 = arith.subf %405, %503 : vector<8x128xf32>
    %cst_220 = arith.constant 2.500000e+00 : f32
    %505 = vector.broadcast %cst_220 : f32 to vector<8x128xf32>
    %506 = arith.mulf %504, %505 : vector<8x128xf32>
    %507 = arith.mulf %506, %422 : vector<8x128xf32>
    %cst_221 = arith.constant -1.400000e+00 : f32
    %508 = vector.broadcast %cst_221 : f32 to vector<8x128xf32>
    %509 = arith.subf %508, %405 : vector<8x128xf32>
    %cst_222 = arith.constant 2.500000e+00 : f32
    %510 = vector.broadcast %cst_222 : f32 to vector<8x128xf32>
    %511 = arith.mulf %509, %510 : vector<8x128xf32>
    %512 = arith.mulf %511, %430 : vector<8x128xf32>
    %513 = arith.addf %507, %512 : vector<8x128xf32>
    %cst_223 = arith.constant -1.800000e+00 : f32
    %514 = vector.broadcast %cst_223 : f32 to vector<8x128xf32>
    %515 = arith.subf %405, %514 : vector<8x128xf32>
    %cst_224 = arith.constant 2.500000e+00 : f32
    %516 = vector.broadcast %cst_224 : f32 to vector<8x128xf32>
    %517 = arith.mulf %515, %516 : vector<8x128xf32>
    %518 = arith.mulf %517, %430 : vector<8x128xf32>
    %cst_225 = arith.constant -1.000000e+00 : f32
    %519 = vector.broadcast %cst_225 : f32 to vector<8x128xf32>
    %520 = arith.subf %519, %405 : vector<8x128xf32>
    %cst_226 = arith.constant 2.500000e+00 : f32
    %521 = vector.broadcast %cst_226 : f32 to vector<8x128xf32>
    %522 = arith.mulf %520, %521 : vector<8x128xf32>
    %523 = arith.mulf %522, %438 : vector<8x128xf32>
    %524 = arith.addf %518, %523 : vector<8x128xf32>
    %cst_227 = arith.constant -1.400000e+00 : f32
    %525 = vector.broadcast %cst_227 : f32 to vector<8x128xf32>
    %526 = arith.subf %405, %525 : vector<8x128xf32>
    %cst_228 = arith.constant 2.500000e+00 : f32
    %527 = vector.broadcast %cst_228 : f32 to vector<8x128xf32>
    %528 = arith.mulf %526, %527 : vector<8x128xf32>
    %529 = arith.mulf %528, %438 : vector<8x128xf32>
    %cst_229 = arith.constant -6.000000e-01 : f32
    %530 = vector.broadcast %cst_229 : f32 to vector<8x128xf32>
    %531 = arith.subf %530, %405 : vector<8x128xf32>
    %cst_230 = arith.constant 2.500000e+00 : f32
    %532 = vector.broadcast %cst_230 : f32 to vector<8x128xf32>
    %533 = arith.mulf %531, %532 : vector<8x128xf32>
    %534 = arith.mulf %533, %446 : vector<8x128xf32>
    %535 = arith.addf %529, %534 : vector<8x128xf32>
    %cst_231 = arith.constant -1.000000e+00 : f32
    %536 = vector.broadcast %cst_231 : f32 to vector<8x128xf32>
    %537 = arith.subf %405, %536 : vector<8x128xf32>
    %cst_232 = arith.constant 2.500000e+00 : f32
    %538 = vector.broadcast %cst_232 : f32 to vector<8x128xf32>
    %539 = arith.mulf %537, %538 : vector<8x128xf32>
    %540 = arith.mulf %539, %446 : vector<8x128xf32>
    %cst_233 = arith.constant -2.000000e-01 : f32
    %541 = vector.broadcast %cst_233 : f32 to vector<8x128xf32>
    %542 = arith.subf %541, %405 : vector<8x128xf32>
    %cst_234 = arith.constant 2.500000e+00 : f32
    %543 = vector.broadcast %cst_234 : f32 to vector<8x128xf32>
    %544 = arith.mulf %542, %543 : vector<8x128xf32>
    %545 = arith.mulf %544, %454 : vector<8x128xf32>
    %546 = arith.addf %540, %545 : vector<8x128xf32>
    %cst_235 = arith.constant -6.000000e-01 : f32
    %547 = vector.broadcast %cst_235 : f32 to vector<8x128xf32>
    %548 = arith.subf %405, %547 : vector<8x128xf32>
    %cst_236 = arith.constant 2.500000e+00 : f32
    %549 = vector.broadcast %cst_236 : f32 to vector<8x128xf32>
    %550 = arith.mulf %548, %549 : vector<8x128xf32>
    %551 = arith.mulf %550, %454 : vector<8x128xf32>
    %cst_237 = arith.constant 2.000000e-01 : f32
    %552 = vector.broadcast %cst_237 : f32 to vector<8x128xf32>
    %553 = arith.subf %552, %405 : vector<8x128xf32>
    %cst_238 = arith.constant 2.500000e+00 : f32
    %554 = vector.broadcast %cst_238 : f32 to vector<8x128xf32>
    %555 = arith.mulf %553, %554 : vector<8x128xf32>
    %556 = arith.mulf %555, %462 : vector<8x128xf32>
    %557 = arith.addf %551, %556 : vector<8x128xf32>
    %cst_239 = arith.constant -2.000000e-01 : f32
    %558 = vector.broadcast %cst_239 : f32 to vector<8x128xf32>
    %559 = arith.subf %405, %558 : vector<8x128xf32>
    %cst_240 = arith.constant 2.500000e+00 : f32
    %560 = vector.broadcast %cst_240 : f32 to vector<8x128xf32>
    %561 = arith.mulf %559, %560 : vector<8x128xf32>
    %562 = arith.mulf %561, %462 : vector<8x128xf32>
    %cst_241 = arith.constant 6.000000e-01 : f32
    %563 = vector.broadcast %cst_241 : f32 to vector<8x128xf32>
    %564 = arith.subf %563, %405 : vector<8x128xf32>
    %cst_242 = arith.constant 2.500000e+00 : f32
    %565 = vector.broadcast %cst_242 : f32 to vector<8x128xf32>
    %566 = arith.mulf %564, %565 : vector<8x128xf32>
    %567 = arith.mulf %566, %470 : vector<8x128xf32>
    %568 = arith.addf %562, %567 : vector<8x128xf32>
    %cst_243 = arith.constant 2.000000e-01 : f32
    %569 = vector.broadcast %cst_243 : f32 to vector<8x128xf32>
    %570 = arith.subf %405, %569 : vector<8x128xf32>
    %cst_244 = arith.constant 2.500000e+00 : f32
    %571 = vector.broadcast %cst_244 : f32 to vector<8x128xf32>
    %572 = arith.mulf %570, %571 : vector<8x128xf32>
    %573 = arith.mulf %572, %470 : vector<8x128xf32>
    %cst_245 = arith.constant 1.000000e+00 : f32
    %574 = vector.broadcast %cst_245 : f32 to vector<8x128xf32>
    %575 = arith.subf %574, %405 : vector<8x128xf32>
    %cst_246 = arith.constant 2.500000e+00 : f32
    %576 = vector.broadcast %cst_246 : f32 to vector<8x128xf32>
    %577 = arith.mulf %575, %576 : vector<8x128xf32>
    %578 = arith.mulf %577, %478 : vector<8x128xf32>
    %579 = arith.addf %573, %578 : vector<8x128xf32>
    %cst_247 = arith.constant 6.000000e-01 : f32
    %580 = vector.broadcast %cst_247 : f32 to vector<8x128xf32>
    %581 = arith.subf %405, %580 : vector<8x128xf32>
    %cst_248 = arith.constant 2.500000e+00 : f32
    %582 = vector.broadcast %cst_248 : f32 to vector<8x128xf32>
    %583 = arith.mulf %581, %582 : vector<8x128xf32>
    %584 = arith.mulf %583, %478 : vector<8x128xf32>
    %cst_249 = arith.constant 1.400000e+00 : f32
    %585 = vector.broadcast %cst_249 : f32 to vector<8x128xf32>
    %586 = arith.subf %585, %405 : vector<8x128xf32>
    %cst_250 = arith.constant 2.500000e+00 : f32
    %587 = vector.broadcast %cst_250 : f32 to vector<8x128xf32>
    %588 = arith.mulf %586, %587 : vector<8x128xf32>
    %589 = arith.mulf %588, %486 : vector<8x128xf32>
    %590 = arith.addf %584, %589 : vector<8x128xf32>
    %cst_251 = arith.constant 1.000000e+00 : f32
    %591 = vector.broadcast %cst_251 : f32 to vector<8x128xf32>
    %592 = arith.subf %405, %591 : vector<8x128xf32>
    %cst_252 = arith.constant 2.500000e+00 : f32
    %593 = vector.broadcast %cst_252 : f32 to vector<8x128xf32>
    %594 = arith.mulf %592, %593 : vector<8x128xf32>
    %595 = arith.mulf %594, %486 : vector<8x128xf32>
    %cst_253 = arith.constant 1.800000e+00 : f32
    %596 = vector.broadcast %cst_253 : f32 to vector<8x128xf32>
    %597 = arith.subf %596, %405 : vector<8x128xf32>
    %cst_254 = arith.constant 2.500000e+00 : f32
    %598 = vector.broadcast %cst_254 : f32 to vector<8x128xf32>
    %599 = arith.mulf %597, %598 : vector<8x128xf32>
    %600 = arith.mulf %599, %494 : vector<8x128xf32>
    %601 = arith.addf %595, %600 : vector<8x128xf32>
    %cst_255 = arith.constant 1.400000e+00 : f32
    %602 = vector.broadcast %cst_255 : f32 to vector<8x128xf32>
    %603 = arith.subf %405, %602 : vector<8x128xf32>
    %cst_256 = arith.constant 2.500000e+00 : f32
    %604 = vector.broadcast %cst_256 : f32 to vector<8x128xf32>
    %605 = arith.mulf %603, %604 : vector<8x128xf32>
    %606 = arith.mulf %605, %494 : vector<8x128xf32>
    %cst_257 = arith.constant 2.200000e+00 : f32
    %607 = vector.broadcast %cst_257 : f32 to vector<8x128xf32>
    %608 = arith.subf %607, %405 : vector<8x128xf32>
    %cst_258 = arith.constant 2.500000e+00 : f32
    %609 = vector.broadcast %cst_258 : f32 to vector<8x128xf32>
    %610 = arith.mulf %608, %609 : vector<8x128xf32>
    %611 = arith.mulf %610, %502 : vector<8x128xf32>
    %612 = arith.addf %606, %611 : vector<8x128xf32>
    %cst_259 = arith.constant -2.200000e+00 : f32
    %613 = vector.broadcast %cst_259 : f32 to vector<8x128xf32>
    %614 = arith.subf %405, %613 : vector<8x128xf32>
    %cst_260 = arith.constant 1.250000e+00 : f32
    %615 = vector.broadcast %cst_260 : f32 to vector<8x128xf32>
    %616 = arith.mulf %614, %615 : vector<8x128xf32>
    %617 = arith.mulf %616, %513 : vector<8x128xf32>
    %cst_261 = arith.constant -1.000000e+00 : f32
    %618 = vector.broadcast %cst_261 : f32 to vector<8x128xf32>
    %619 = arith.subf %618, %405 : vector<8x128xf32>
    %cst_262 = arith.constant 1.250000e+00 : f32
    %620 = vector.broadcast %cst_262 : f32 to vector<8x128xf32>
    %621 = arith.mulf %619, %620 : vector<8x128xf32>
    %622 = arith.mulf %621, %524 : vector<8x128xf32>
    %623 = arith.addf %617, %622 : vector<8x128xf32>
    %cst_263 = arith.constant -1.800000e+00 : f32
    %624 = vector.broadcast %cst_263 : f32 to vector<8x128xf32>
    %625 = arith.subf %405, %624 : vector<8x128xf32>
    %cst_264 = arith.constant 1.250000e+00 : f32
    %626 = vector.broadcast %cst_264 : f32 to vector<8x128xf32>
    %627 = arith.mulf %625, %626 : vector<8x128xf32>
    %628 = arith.mulf %627, %524 : vector<8x128xf32>
    %cst_265 = arith.constant -6.000000e-01 : f32
    %629 = vector.broadcast %cst_265 : f32 to vector<8x128xf32>
    %630 = arith.subf %629, %405 : vector<8x128xf32>
    %cst_266 = arith.constant 1.250000e+00 : f32
    %631 = vector.broadcast %cst_266 : f32 to vector<8x128xf32>
    %632 = arith.mulf %630, %631 : vector<8x128xf32>
    %633 = arith.mulf %632, %535 : vector<8x128xf32>
    %634 = arith.addf %628, %633 : vector<8x128xf32>
    %cst_267 = arith.constant -1.400000e+00 : f32
    %635 = vector.broadcast %cst_267 : f32 to vector<8x128xf32>
    %636 = arith.subf %405, %635 : vector<8x128xf32>
    %cst_268 = arith.constant 1.250000e+00 : f32
    %637 = vector.broadcast %cst_268 : f32 to vector<8x128xf32>
    %638 = arith.mulf %636, %637 : vector<8x128xf32>
    %639 = arith.mulf %638, %535 : vector<8x128xf32>
    %cst_269 = arith.constant -2.000000e-01 : f32
    %640 = vector.broadcast %cst_269 : f32 to vector<8x128xf32>
    %641 = arith.subf %640, %405 : vector<8x128xf32>
    %cst_270 = arith.constant 1.250000e+00 : f32
    %642 = vector.broadcast %cst_270 : f32 to vector<8x128xf32>
    %643 = arith.mulf %641, %642 : vector<8x128xf32>
    %644 = arith.mulf %643, %546 : vector<8x128xf32>
    %645 = arith.addf %639, %644 : vector<8x128xf32>
    %cst_271 = arith.constant -1.000000e+00 : f32
    %646 = vector.broadcast %cst_271 : f32 to vector<8x128xf32>
    %647 = arith.subf %405, %646 : vector<8x128xf32>
    %cst_272 = arith.constant 1.250000e+00 : f32
    %648 = vector.broadcast %cst_272 : f32 to vector<8x128xf32>
    %649 = arith.mulf %647, %648 : vector<8x128xf32>
    %650 = arith.mulf %649, %546 : vector<8x128xf32>
    %cst_273 = arith.constant 2.000000e-01 : f32
    %651 = vector.broadcast %cst_273 : f32 to vector<8x128xf32>
    %652 = arith.subf %651, %405 : vector<8x128xf32>
    %cst_274 = arith.constant 1.250000e+00 : f32
    %653 = vector.broadcast %cst_274 : f32 to vector<8x128xf32>
    %654 = arith.mulf %652, %653 : vector<8x128xf32>
    %655 = arith.mulf %654, %557 : vector<8x128xf32>
    %656 = arith.addf %650, %655 : vector<8x128xf32>
    %cst_275 = arith.constant -6.000000e-01 : f32
    %657 = vector.broadcast %cst_275 : f32 to vector<8x128xf32>
    %658 = arith.subf %405, %657 : vector<8x128xf32>
    %cst_276 = arith.constant 1.250000e+00 : f32
    %659 = vector.broadcast %cst_276 : f32 to vector<8x128xf32>
    %660 = arith.mulf %658, %659 : vector<8x128xf32>
    %661 = arith.mulf %660, %557 : vector<8x128xf32>
    %cst_277 = arith.constant 6.000000e-01 : f32
    %662 = vector.broadcast %cst_277 : f32 to vector<8x128xf32>
    %663 = arith.subf %662, %405 : vector<8x128xf32>
    %cst_278 = arith.constant 1.250000e+00 : f32
    %664 = vector.broadcast %cst_278 : f32 to vector<8x128xf32>
    %665 = arith.mulf %663, %664 : vector<8x128xf32>
    %666 = arith.mulf %665, %568 : vector<8x128xf32>
    %667 = arith.addf %661, %666 : vector<8x128xf32>
    %cst_279 = arith.constant -2.000000e-01 : f32
    %668 = vector.broadcast %cst_279 : f32 to vector<8x128xf32>
    %669 = arith.subf %405, %668 : vector<8x128xf32>
    %cst_280 = arith.constant 1.250000e+00 : f32
    %670 = vector.broadcast %cst_280 : f32 to vector<8x128xf32>
    %671 = arith.mulf %669, %670 : vector<8x128xf32>
    %672 = arith.mulf %671, %568 : vector<8x128xf32>
    %cst_281 = arith.constant 1.000000e+00 : f32
    %673 = vector.broadcast %cst_281 : f32 to vector<8x128xf32>
    %674 = arith.subf %673, %405 : vector<8x128xf32>
    %cst_282 = arith.constant 1.250000e+00 : f32
    %675 = vector.broadcast %cst_282 : f32 to vector<8x128xf32>
    %676 = arith.mulf %674, %675 : vector<8x128xf32>
    %677 = arith.mulf %676, %579 : vector<8x128xf32>
    %678 = arith.addf %672, %677 : vector<8x128xf32>
    %cst_283 = arith.constant 2.000000e-01 : f32
    %679 = vector.broadcast %cst_283 : f32 to vector<8x128xf32>
    %680 = arith.subf %405, %679 : vector<8x128xf32>
    %cst_284 = arith.constant 1.250000e+00 : f32
    %681 = vector.broadcast %cst_284 : f32 to vector<8x128xf32>
    %682 = arith.mulf %680, %681 : vector<8x128xf32>
    %683 = arith.mulf %682, %579 : vector<8x128xf32>
    %cst_285 = arith.constant 1.400000e+00 : f32
    %684 = vector.broadcast %cst_285 : f32 to vector<8x128xf32>
    %685 = arith.subf %684, %405 : vector<8x128xf32>
    %cst_286 = arith.constant 1.250000e+00 : f32
    %686 = vector.broadcast %cst_286 : f32 to vector<8x128xf32>
    %687 = arith.mulf %685, %686 : vector<8x128xf32>
    %688 = arith.mulf %687, %590 : vector<8x128xf32>
    %689 = arith.addf %683, %688 : vector<8x128xf32>
    %cst_287 = arith.constant 6.000000e-01 : f32
    %690 = vector.broadcast %cst_287 : f32 to vector<8x128xf32>
    %691 = arith.subf %405, %690 : vector<8x128xf32>
    %cst_288 = arith.constant 1.250000e+00 : f32
    %692 = vector.broadcast %cst_288 : f32 to vector<8x128xf32>
    %693 = arith.mulf %691, %692 : vector<8x128xf32>
    %694 = arith.mulf %693, %590 : vector<8x128xf32>
    %cst_289 = arith.constant 1.800000e+00 : f32
    %695 = vector.broadcast %cst_289 : f32 to vector<8x128xf32>
    %696 = arith.subf %695, %405 : vector<8x128xf32>
    %cst_290 = arith.constant 1.250000e+00 : f32
    %697 = vector.broadcast %cst_290 : f32 to vector<8x128xf32>
    %698 = arith.mulf %696, %697 : vector<8x128xf32>
    %699 = arith.mulf %698, %601 : vector<8x128xf32>
    %700 = arith.addf %694, %699 : vector<8x128xf32>
    %cst_291 = arith.constant 1.000000e+00 : f32
    %701 = vector.broadcast %cst_291 : f32 to vector<8x128xf32>
    %702 = arith.subf %405, %701 : vector<8x128xf32>
    %cst_292 = arith.constant 1.250000e+00 : f32
    %703 = vector.broadcast %cst_292 : f32 to vector<8x128xf32>
    %704 = arith.mulf %702, %703 : vector<8x128xf32>
    %705 = arith.mulf %704, %601 : vector<8x128xf32>
    %cst_293 = arith.constant 2.200000e+00 : f32
    %706 = vector.broadcast %cst_293 : f32 to vector<8x128xf32>
    %707 = arith.subf %706, %405 : vector<8x128xf32>
    %cst_294 = arith.constant 1.250000e+00 : f32
    %708 = vector.broadcast %cst_294 : f32 to vector<8x128xf32>
    %709 = arith.mulf %707, %708 : vector<8x128xf32>
    %710 = arith.mulf %709, %612 : vector<8x128xf32>
    %711 = arith.addf %705, %710 : vector<8x128xf32>
    %cst_295 = arith.constant -2.200000e+00 : f32
    %712 = vector.broadcast %cst_295 : f32 to vector<8x128xf32>
    %713 = arith.subf %405, %712 : vector<8x128xf32>
    %cst_296 = arith.constant 0.833333313 : f32
    %714 = vector.broadcast %cst_296 : f32 to vector<8x128xf32>
    %715 = arith.mulf %713, %714 : vector<8x128xf32>
    %716 = arith.mulf %715, %623 : vector<8x128xf32>
    %cst_297 = arith.constant -6.000000e-01 : f32
    %717 = vector.broadcast %cst_297 : f32 to vector<8x128xf32>
    %718 = arith.subf %717, %405 : vector<8x128xf32>
    %cst_298 = arith.constant 0.833333313 : f32
    %719 = vector.broadcast %cst_298 : f32 to vector<8x128xf32>
    %720 = arith.mulf %718, %719 : vector<8x128xf32>
    %721 = arith.mulf %720, %634 : vector<8x128xf32>
    %722 = arith.addf %716, %721 : vector<8x128xf32>
    %cst_299 = arith.constant -1.800000e+00 : f32
    %723 = vector.broadcast %cst_299 : f32 to vector<8x128xf32>
    %724 = arith.subf %405, %723 : vector<8x128xf32>
    %cst_300 = arith.constant 0.833333313 : f32
    %725 = vector.broadcast %cst_300 : f32 to vector<8x128xf32>
    %726 = arith.mulf %724, %725 : vector<8x128xf32>
    %727 = arith.mulf %726, %634 : vector<8x128xf32>
    %cst_301 = arith.constant -2.000000e-01 : f32
    %728 = vector.broadcast %cst_301 : f32 to vector<8x128xf32>
    %729 = arith.subf %728, %405 : vector<8x128xf32>
    %cst_302 = arith.constant 0.833333313 : f32
    %730 = vector.broadcast %cst_302 : f32 to vector<8x128xf32>
    %731 = arith.mulf %729, %730 : vector<8x128xf32>
    %732 = arith.mulf %731, %645 : vector<8x128xf32>
    %733 = arith.addf %727, %732 : vector<8x128xf32>
    %cst_303 = arith.constant -1.400000e+00 : f32
    %734 = vector.broadcast %cst_303 : f32 to vector<8x128xf32>
    %735 = arith.subf %405, %734 : vector<8x128xf32>
    %cst_304 = arith.constant 0.833333313 : f32
    %736 = vector.broadcast %cst_304 : f32 to vector<8x128xf32>
    %737 = arith.mulf %735, %736 : vector<8x128xf32>
    %738 = arith.mulf %737, %645 : vector<8x128xf32>
    %cst_305 = arith.constant 2.000000e-01 : f32
    %739 = vector.broadcast %cst_305 : f32 to vector<8x128xf32>
    %740 = arith.subf %739, %405 : vector<8x128xf32>
    %cst_306 = arith.constant 0.833333313 : f32
    %741 = vector.broadcast %cst_306 : f32 to vector<8x128xf32>
    %742 = arith.mulf %740, %741 : vector<8x128xf32>
    %743 = arith.mulf %742, %656 : vector<8x128xf32>
    %744 = arith.addf %738, %743 : vector<8x128xf32>
    %cst_307 = arith.constant -1.000000e+00 : f32
    %745 = vector.broadcast %cst_307 : f32 to vector<8x128xf32>
    %746 = arith.subf %405, %745 : vector<8x128xf32>
    %cst_308 = arith.constant 0.833333313 : f32
    %747 = vector.broadcast %cst_308 : f32 to vector<8x128xf32>
    %748 = arith.mulf %746, %747 : vector<8x128xf32>
    %749 = arith.mulf %748, %656 : vector<8x128xf32>
    %cst_309 = arith.constant 6.000000e-01 : f32
    %750 = vector.broadcast %cst_309 : f32 to vector<8x128xf32>
    %751 = arith.subf %750, %405 : vector<8x128xf32>
    %cst_310 = arith.constant 0.833333313 : f32
    %752 = vector.broadcast %cst_310 : f32 to vector<8x128xf32>
    %753 = arith.mulf %751, %752 : vector<8x128xf32>
    %754 = arith.mulf %753, %667 : vector<8x128xf32>
    %755 = arith.addf %749, %754 : vector<8x128xf32>
    %cst_311 = arith.constant -6.000000e-01 : f32
    %756 = vector.broadcast %cst_311 : f32 to vector<8x128xf32>
    %757 = arith.subf %405, %756 : vector<8x128xf32>
    %cst_312 = arith.constant 0.833333313 : f32
    %758 = vector.broadcast %cst_312 : f32 to vector<8x128xf32>
    %759 = arith.mulf %757, %758 : vector<8x128xf32>
    %760 = arith.mulf %759, %667 : vector<8x128xf32>
    %cst_313 = arith.constant 1.000000e+00 : f32
    %761 = vector.broadcast %cst_313 : f32 to vector<8x128xf32>
    %762 = arith.subf %761, %405 : vector<8x128xf32>
    %cst_314 = arith.constant 0.833333313 : f32
    %763 = vector.broadcast %cst_314 : f32 to vector<8x128xf32>
    %764 = arith.mulf %762, %763 : vector<8x128xf32>
    %765 = arith.mulf %764, %678 : vector<8x128xf32>
    %766 = arith.addf %760, %765 : vector<8x128xf32>
    %cst_315 = arith.constant -2.000000e-01 : f32
    %767 = vector.broadcast %cst_315 : f32 to vector<8x128xf32>
    %768 = arith.subf %405, %767 : vector<8x128xf32>
    %cst_316 = arith.constant 0.833333313 : f32
    %769 = vector.broadcast %cst_316 : f32 to vector<8x128xf32>
    %770 = arith.mulf %768, %769 : vector<8x128xf32>
    %771 = arith.mulf %770, %678 : vector<8x128xf32>
    %cst_317 = arith.constant 1.400000e+00 : f32
    %772 = vector.broadcast %cst_317 : f32 to vector<8x128xf32>
    %773 = arith.subf %772, %405 : vector<8x128xf32>
    %cst_318 = arith.constant 0.833333313 : f32
    %774 = vector.broadcast %cst_318 : f32 to vector<8x128xf32>
    %775 = arith.mulf %773, %774 : vector<8x128xf32>
    %776 = arith.mulf %775, %689 : vector<8x128xf32>
    %777 = arith.addf %771, %776 : vector<8x128xf32>
    %cst_319 = arith.constant 2.000000e-01 : f32
    %778 = vector.broadcast %cst_319 : f32 to vector<8x128xf32>
    %779 = arith.subf %405, %778 : vector<8x128xf32>
    %cst_320 = arith.constant 0.833333313 : f32
    %780 = vector.broadcast %cst_320 : f32 to vector<8x128xf32>
    %781 = arith.mulf %779, %780 : vector<8x128xf32>
    %782 = arith.mulf %781, %689 : vector<8x128xf32>
    %cst_321 = arith.constant 1.800000e+00 : f32
    %783 = vector.broadcast %cst_321 : f32 to vector<8x128xf32>
    %784 = arith.subf %783, %405 : vector<8x128xf32>
    %cst_322 = arith.constant 0.833333313 : f32
    %785 = vector.broadcast %cst_322 : f32 to vector<8x128xf32>
    %786 = arith.mulf %784, %785 : vector<8x128xf32>
    %787 = arith.mulf %786, %700 : vector<8x128xf32>
    %788 = arith.addf %782, %787 : vector<8x128xf32>
    %cst_323 = arith.constant 6.000000e-01 : f32
    %789 = vector.broadcast %cst_323 : f32 to vector<8x128xf32>
    %790 = arith.subf %405, %789 : vector<8x128xf32>
    %cst_324 = arith.constant 0.833333313 : f32
    %791 = vector.broadcast %cst_324 : f32 to vector<8x128xf32>
    %792 = arith.mulf %790, %791 : vector<8x128xf32>
    %793 = arith.mulf %792, %700 : vector<8x128xf32>
    %cst_325 = arith.constant 2.200000e+00 : f32
    %794 = vector.broadcast %cst_325 : f32 to vector<8x128xf32>
    %795 = arith.subf %794, %405 : vector<8x128xf32>
    %cst_326 = arith.constant 0.833333313 : f32
    %796 = vector.broadcast %cst_326 : f32 to vector<8x128xf32>
    %797 = arith.mulf %795, %796 : vector<8x128xf32>
    %798 = arith.mulf %797, %711 : vector<8x128xf32>
    %799 = arith.addf %793, %798 : vector<8x128xf32>
    %c8 = arith.constant 8 : index
    %c0_327 = arith.constant 0 : index
    %800 = vector.load %arg11[%c8, %c0_327] : memref<72x128xf32, #tpu.memory_space<vmem>>, vector<8x128xf32>
    tpu.vector_store %arg11[%c8, %c0_327], %722 {strides = array<i32>} : memref<72x128xf32, #tpu.memory_space<vmem>>, vector<8x128xf32>,
    %c16_328 = arith.constant 16 : index
    %c0_329 = arith.constant 0 : index
    %801 = vector.load %arg11[%c16_328, %c0_329] : memref<72x128xf32, #tpu.memory_space<vmem>>, vector<8x128xf32>
    tpu.vector_store %arg11[%c16_328, %c0_329], %733 {strides = array<i32>} : memref<72x128xf32, #tpu.memory_space<vmem>>, vector<8x128xf32>,
    %c24 = arith.constant 24 : index
    %c0_330 = arith.constant 0 : index
    %802 = vector.load %arg11[%c24, %c0_330] : memref<72x128xf32, #tpu.memory_space<vmem>>, vector<8x128xf32>
    tpu.vector_store %arg11[%c24, %c0_330], %744 {strides = array<i32>} : memref<72x128xf32, #tpu.memory_space<vmem>>, vector<8x128xf32>,
    %c32_331 = arith.constant 32 : index
    %c0_332 = arith.constant 0 : index
    %803 = vector.load %arg11[%c32_331, %c0_332] : memref<72x128xf32, #tpu.memory_space<vmem>>, vector<8x128xf32>
    tpu.vector_store %arg11[%c32_331, %c0_332], %755 {strides = array<i32>} : memref<72x128xf32, #tpu.memory_space<vmem>>, vector<8x128xf32>,
    %c40 = arith.constant 40 : index
    %c0_333 = arith.constant 0 : index
    %804 = vector.load %arg11[%c40, %c0_333] : memref<72x128xf32, #tpu.memory_space<vmem>>, vector<8x128xf32>
    tpu.vector_store %arg11[%c40, %c0_333], %766 {strides = array<i32>} : memref<72x128xf32, #tpu.memory_space<vmem>>, vector<8x128xf32>,
    %c48_334 = arith.constant 48 : index
    %c0_335 = arith.constant 0 : index
    %805 = vector.load %arg11[%c48_334, %c0_335] : memref<72x128xf32, #tpu.memory_space<vmem>>, vector<8x128xf32>
    tpu.vector_store %arg11[%c48_334, %c0_335], %777 {strides = array<i32>} : memref<72x128xf32, #tpu.memory_space<vmem>>, vector<8x128xf32>,
    %c56 = arith.constant 56 : index
    %c0_336 = arith.constant 0 : index
    %806 = vector.load %arg11[%c56, %c0_336] : memref<72x128xf32, #tpu.memory_space<vmem>>, vector<8x128xf32>
    tpu.vector_store %arg11[%c56, %c0_336], %788 {strides = array<i32>} : memref<72x128xf32, #tpu.memory_space<vmem>>, vector<8x128xf32>,
    %c64_337 = arith.constant 64 : index
    %c0_338 = arith.constant 0 : index
    %807 = vector.load %arg11[%c64_337, %c0_338] : memref<72x128xf32, #tpu.memory_space<vmem>>, vector<8x128xf32>
    tpu.vector_store %arg11[%c64_337, %c0_338], %799 {strides = array<i32>} : memref<72x128xf32, #tpu.memory_space<vmem>>, vector<8x128xf32>,
    %c0_339 = arith.constant 0 : index
    %c0_340 = arith.constant 0 : index
    %808 = vector.load %arg5[%c0_339, %c0_340] : memref<8x72xf32, #tpu.memory_space<vmem>>, vector<8x72xf32>
    %c0_341 = arith.constant 0 : index
    %c0_342 = arith.constant 0 : index
    %809 = vector.load %arg11[%c0_341, %c0_342] : memref<72x128xf32, #tpu.memory_space<vmem>>, vector<72x128xf32>
    %cst_343 = arith.constant dense<0.000000e+00> : vector<8x128xf32>
    %810 = tpu.matmul %808, %809, %cst_343 {dimension_numbers = #tpu.dot_dimension_numbers<[1], [0], [0], [1], [0, 0, 1, 1], [], []>} : vector<8x72xf32>, vector<72x128xf32>, vector<8x128xf32> -> vector<8x128xf32>
    %c0_344 = arith.constant 0 : index
    %c0_345 = arith.constant 0 : index
    %811 = vector.load %arg2[%c0_344, %c0_345] : memref<8x128xf32, #tpu.memory_space<vmem>>, vector<8x128xf32>
    %812 = arith.addf %811, %810 : vector<8x128xf32>
    %c0_346 = arith.constant 0 : index
    %c0_347 = arith.constant 0 : index
    %813 = vector.load %arg8[%c0_346, %c0_347] : memref<8x128xf32, #tpu.memory_space<vmem>>, vector<8x128xf32>
    tpu.vector_store %arg8[%c0_346, %c0_347], %812 {strides = array<i32>} : memref<8x128xf32, #tpu.memory_space<vmem>>, vector<8x128xf32>,
    %cst_348 = arith.constant 0.000000e+00 : f32
    %814 = vector.broadcast %cst_348 : f32 to vector<8x128xf32>
    %815 = arith.subf %814, %812 : vector<8x128xf32>
    %816 = math.exp %815 : vector<8x128xf32>
    %cst_349 = arith.constant 1.000000e+00 : f32
    %817 = vector.broadcast %cst_349 : f32 to vector<8x128xf32>
    %818 = arith.addf %817, %816 : vector<8x128xf32>
    %cst_350 = arith.constant 1.000000e+00 : f32
    %819 = vector.broadcast %cst_350 : f32 to vector<8x128xf32>
    %820 = arith.divf %819, %818 : vector<8x128xf32>
    %821 = arith.mulf %812, %820 : vector<8x128xf32>
    %c0_351 = arith.constant 0 : index
    %c0_352 = arith.constant 0 : index
    %822 = vector.load %arg12[%c0_351, %c0_352] : memref<72x128xf32, #tpu.memory_space<vmem>>, vector<8x128xf32>
    tpu.vector_store %arg12[%c0_351, %c0_352], %821 {strides = array<i32>} : memref<72x128xf32, #tpu.memory_space<vmem>>, vector<8x128xf32>,
    %cst_353 = arith.constant -2.200000e+00 : f32
    %823 = vector.broadcast %cst_353 : f32 to vector<8x128xf32>
    %824 = arith.cmpf oge, %812, %823 : vector<8x128xf32>
    %cst_354 = arith.constant -1.800000e+00 : f32
    %825 = vector.broadcast %cst_354 : f32 to vector<8x128xf32>
    %826 = arith.cmpf olt, %812, %825 : vector<8x128xf32>
    %827 = arith.andi %824, %826 : vector<8x128xi1>
    %cst_355 = arith.constant 1.000000e+00 : f32
    %cst_356 = arith.constant 0.000000e+00 : f32
    %828 = vector.broadcast %cst_355 : f32 to vector<8x128xf32>
    %829 = vector.broadcast %cst_356 : f32 to vector<8x128xf32>
    %830 = arith.select %827, %828, %829 : vector<8x128xi1>, vector<8x128xf32>
    %cst_357 = arith.constant -1.800000e+00 : f32
    %831 = vector.broadcast %cst_357 : f32 to vector<8x128xf32>
    %832 = arith.cmpf oge, %812, %831 : vector<8x128xf32>
    %cst_358 = arith.constant -1.400000e+00 : f32
    %833 = vector.broadcast %cst_358 : f32 to vector<8x128xf32>
    %834 = arith.cmpf olt, %812, %833 : vector<8x128xf32>
    %835 = arith.andi %832, %834 : vector<8x128xi1>
    %cst_359 = arith.constant 1.000000e+00 : f32
    %cst_360 = arith.constant 0.000000e+00 : f32
    %836 = vector.broadcast %cst_359 : f32 to vector<8x128xf32>
    %837 = vector.broadcast %cst_360 : f32 to vector<8x128xf32>
    %838 = arith.select %835, %836, %837 : vector<8x128xi1>, vector<8x128xf32>
    %cst_361 = arith.constant -1.400000e+00 : f32
    %839 = vector.broadcast %cst_361 : f32 to vector<8x128xf32>
    %840 = arith.cmpf oge, %812, %839 : vector<8x128xf32>
    %cst_362 = arith.constant -1.000000e+00 : f32
    %841 = vector.broadcast %cst_362 : f32 to vector<8x128xf32>
    %842 = arith.cmpf olt, %812, %841 : vector<8x128xf32>
    %843 = arith.andi %840, %842 : vector<8x128xi1>
    %cst_363 = arith.constant 1.000000e+00 : f32
    %cst_364 = arith.constant 0.000000e+00 : f32
    %844 = vector.broadcast %cst_363 : f32 to vector<8x128xf32>
    %845 = vector.broadcast %cst_364 : f32 to vector<8x128xf32>
    %846 = arith.select %843, %844, %845 : vector<8x128xi1>, vector<8x128xf32>
    %cst_365 = arith.constant -1.000000e+00 : f32
    %847 = vector.broadcast %cst_365 : f32 to vector<8x128xf32>
    %848 = arith.cmpf oge, %812, %847 : vector<8x128xf32>
    %cst_366 = arith.constant -6.000000e-01 : f32
    %849 = vector.broadcast %cst_366 : f32 to vector<8x128xf32>
    %850 = arith.cmpf olt, %812, %849 : vector<8x128xf32>
    %851 = arith.andi %848, %850 : vector<8x128xi1>
    %cst_367 = arith.constant 1.000000e+00 : f32
    %cst_368 = arith.constant 0.000000e+00 : f32
    %852 = vector.broadcast %cst_367 : f32 to vector<8x128xf32>
    %853 = vector.broadcast %cst_368 : f32 to vector<8x128xf32>
    %854 = arith.select %851, %852, %853 : vector<8x128xi1>, vector<8x128xf32>
    %cst_369 = arith.constant -6.000000e-01 : f32
    %855 = vector.broadcast %cst_369 : f32 to vector<8x128xf32>
    %856 = arith.cmpf oge, %812, %855 : vector<8x128xf32>
    %cst_370 = arith.constant -2.000000e-01 : f32
    %857 = vector.broadcast %cst_370 : f32 to vector<8x128xf32>
    %858 = arith.cmpf olt, %812, %857 : vector<8x128xf32>
    %859 = arith.andi %856, %858 : vector<8x128xi1>
    %cst_371 = arith.constant 1.000000e+00 : f32
    %cst_372 = arith.constant 0.000000e+00 : f32
    %860 = vector.broadcast %cst_371 : f32 to vector<8x128xf32>
    %861 = vector.broadcast %cst_372 : f32 to vector<8x128xf32>
    %862 = arith.select %859, %860, %861 : vector<8x128xi1>, vector<8x128xf32>
    %cst_373 = arith.constant -2.000000e-01 : f32
    %863 = vector.broadcast %cst_373 : f32 to vector<8x128xf32>
    %864 = arith.cmpf oge, %812, %863 : vector<8x128xf32>
    %cst_374 = arith.constant 2.000000e-01 : f32
    %865 = vector.broadcast %cst_374 : f32 to vector<8x128xf32>
    %866 = arith.cmpf olt, %812, %865 : vector<8x128xf32>
    %867 = arith.andi %864, %866 : vector<8x128xi1>
    %cst_375 = arith.constant 1.000000e+00 : f32
    %cst_376 = arith.constant 0.000000e+00 : f32
    %868 = vector.broadcast %cst_375 : f32 to vector<8x128xf32>
    %869 = vector.broadcast %cst_376 : f32 to vector<8x128xf32>
    %870 = arith.select %867, %868, %869 : vector<8x128xi1>, vector<8x128xf32>
    %cst_377 = arith.constant 2.000000e-01 : f32
    %871 = vector.broadcast %cst_377 : f32 to vector<8x128xf32>
    %872 = arith.cmpf oge, %812, %871 : vector<8x128xf32>
    %cst_378 = arith.constant 6.000000e-01 : f32
    %873 = vector.broadcast %cst_378 : f32 to vector<8x128xf32>
    %874 = arith.cmpf olt, %812, %873 : vector<8x128xf32>
    %875 = arith.andi %872, %874 : vector<8x128xi1>
    %cst_379 = arith.constant 1.000000e+00 : f32
    %cst_380 = arith.constant 0.000000e+00 : f32
    %876 = vector.broadcast %cst_379 : f32 to vector<8x128xf32>
    %877 = vector.broadcast %cst_380 : f32 to vector<8x128xf32>
    %878 = arith.select %875, %876, %877 : vector<8x128xi1>, vector<8x128xf32>
    %cst_381 = arith.constant 6.000000e-01 : f32
    %879 = vector.broadcast %cst_381 : f32 to vector<8x128xf32>
    %880 = arith.cmpf oge, %812, %879 : vector<8x128xf32>
    %cst_382 = arith.constant 1.000000e+00 : f32
    %881 = vector.broadcast %cst_382 : f32 to vector<8x128xf32>
    %882 = arith.cmpf olt, %812, %881 : vector<8x128xf32>
    %883 = arith.andi %880, %882 : vector<8x128xi1>
    %cst_383 = arith.constant 1.000000e+00 : f32
    %cst_384 = arith.constant 0.000000e+00 : f32
    %884 = vector.broadcast %cst_383 : f32 to vector<8x128xf32>
    %885 = vector.broadcast %cst_384 : f32 to vector<8x128xf32>
    %886 = arith.select %883, %884, %885 : vector<8x128xi1>, vector<8x128xf32>
    %cst_385 = arith.constant 1.000000e+00 : f32
    %887 = vector.broadcast %cst_385 : f32 to vector<8x128xf32>
    %888 = arith.cmpf oge, %812, %887 : vector<8x128xf32>
    %cst_386 = arith.constant 1.400000e+00 : f32
    %889 = vector.broadcast %cst_386 : f32 to vector<8x128xf32>
    %890 = arith.cmpf olt, %812, %889 : vector<8x128xf32>
    %891 = arith.andi %888, %890 : vector<8x128xi1>
    %cst_387 = arith.constant 1.000000e+00 : f32
    %cst_388 = arith.constant 0.000000e+00 : f32
    %892 = vector.broadcast %cst_387 : f32 to vector<8x128xf32>
    %893 = vector.broadcast %cst_388 : f32 to vector<8x128xf32>
    %894 = arith.select %891, %892, %893 : vector<8x128xi1>, vector<8x128xf32>
    %cst_389 = arith.constant 1.400000e+00 : f32
    %895 = vector.broadcast %cst_389 : f32 to vector<8x128xf32>
    %896 = arith.cmpf oge, %812, %895 : vector<8x128xf32>
    %cst_390 = arith.constant 1.800000e+00 : f32
    %897 = vector.broadcast %cst_390 : f32 to vector<8x128xf32>
    %898 = arith.cmpf olt, %812, %897 : vector<8x128xf32>
    %899 = arith.andi %896, %898 : vector<8x128xi1>
    %cst_391 = arith.constant 1.000000e+00 : f32
    %cst_392 = arith.constant 0.000000e+00 : f32
    %900 = vector.broadcast %cst_391 : f32 to vector<8x128xf32>
    %901 = vector.broadcast %cst_392 : f32 to vector<8x128xf32>
    %902 = arith.select %899, %900, %901 : vector<8x128xi1>, vector<8x128xf32>
    %cst_393 = arith.constant 1.800000e+00 : f32
    %903 = vector.broadcast %cst_393 : f32 to vector<8x128xf32>
    %904 = arith.cmpf oge, %812, %903 : vector<8x128xf32>
    %cst_394 = arith.constant 2.200000e+00 : f32
    %905 = vector.broadcast %cst_394 : f32 to vector<8x128xf32>
    %906 = arith.cmpf olt, %812, %905 : vector<8x128xf32>
    %907 = arith.andi %904, %906 : vector<8x128xi1>
    %cst_395 = arith.constant 1.000000e+00 : f32
    %cst_396 = arith.constant 0.000000e+00 : f32
    %908 = vector.broadcast %cst_395 : f32 to vector<8x128xf32>
    %909 = vector.broadcast %cst_396 : f32 to vector<8x128xf32>
    %910 = arith.select %907, %908, %909 : vector<8x128xi1>, vector<8x128xf32>
    %cst_397 = arith.constant -2.200000e+00 : f32
    %911 = vector.broadcast %cst_397 : f32 to vector<8x128xf32>
    %912 = arith.subf %812, %911 : vector<8x128xf32>
    %cst_398 = arith.constant 2.500000e+00 : f32
    %913 = vector.broadcast %cst_398 : f32 to vector<8x128xf32>
    %914 = arith.mulf %912, %913 : vector<8x128xf32>
    %915 = arith.mulf %914, %830 : vector<8x128xf32>
    %cst_399 = arith.constant -1.400000e+00 : f32
    %916 = vector.broadcast %cst_399 : f32 to vector<8x128xf32>
    %917 = arith.subf %916, %812 : vector<8x128xf32>
    %cst_400 = arith.constant 2.500000e+00 : f32
    %918 = vector.broadcast %cst_400 : f32 to vector<8x128xf32>
    %919 = arith.mulf %917, %918 : vector<8x128xf32>
    %920 = arith.mulf %919, %838 : vector<8x128xf32>
    %921 = arith.addf %915, %920 : vector<8x128xf32>
    %cst_401 = arith.constant -1.800000e+00 : f32
    %922 = vector.broadcast %cst_401 : f32 to vector<8x128xf32>
    %923 = arith.subf %812, %922 : vector<8x128xf32>
    %cst_402 = arith.constant 2.500000e+00 : f32
    %924 = vector.broadcast %cst_402 : f32 to vector<8x128xf32>
    %925 = arith.mulf %923, %924 : vector<8x128xf32>
    %926 = arith.mulf %925, %838 : vector<8x128xf32>
    %cst_403 = arith.constant -1.000000e+00 : f32
    %927 = vector.broadcast %cst_403 : f32 to vector<8x128xf32>
    %928 = arith.subf %927, %812 : vector<8x128xf32>
    %cst_404 = arith.constant 2.500000e+00 : f32
    %929 = vector.broadcast %cst_404 : f32 to vector<8x128xf32>
    %930 = arith.mulf %928, %929 : vector<8x128xf32>
    %931 = arith.mulf %930, %846 : vector<8x128xf32>
    %932 = arith.addf %926, %931 : vector<8x128xf32>
    %cst_405 = arith.constant -1.400000e+00 : f32
    %933 = vector.broadcast %cst_405 : f32 to vector<8x128xf32>
    %934 = arith.subf %812, %933 : vector<8x128xf32>
    %cst_406 = arith.constant 2.500000e+00 : f32
    %935 = vector.broadcast %cst_406 : f32 to vector<8x128xf32>
    %936 = arith.mulf %934, %935 : vector<8x128xf32>
    %937 = arith.mulf %936, %846 : vector<8x128xf32>
    %cst_407 = arith.constant -6.000000e-01 : f32
    %938 = vector.broadcast %cst_407 : f32 to vector<8x128xf32>
    %939 = arith.subf %938, %812 : vector<8x128xf32>
    %cst_408 = arith.constant 2.500000e+00 : f32
    %940 = vector.broadcast %cst_408 : f32 to vector<8x128xf32>
    %941 = arith.mulf %939, %940 : vector<8x128xf32>
    %942 = arith.mulf %941, %854 : vector<8x128xf32>
    %943 = arith.addf %937, %942 : vector<8x128xf32>
    %cst_409 = arith.constant -1.000000e+00 : f32
    %944 = vector.broadcast %cst_409 : f32 to vector<8x128xf32>
    %945 = arith.subf %812, %944 : vector<8x128xf32>
    %cst_410 = arith.constant 2.500000e+00 : f32
    %946 = vector.broadcast %cst_410 : f32 to vector<8x128xf32>
    %947 = arith.mulf %945, %946 : vector<8x128xf32>
    %948 = arith.mulf %947, %854 : vector<8x128xf32>
    %cst_411 = arith.constant -2.000000e-01 : f32
    %949 = vector.broadcast %cst_411 : f32 to vector<8x128xf32>
    %950 = arith.subf %949, %812 : vector<8x128xf32>
    %cst_412 = arith.constant 2.500000e+00 : f32
    %951 = vector.broadcast %cst_412 : f32 to vector<8x128xf32>
    %952 = arith.mulf %950, %951 : vector<8x128xf32>
    %953 = arith.mulf %952, %862 : vector<8x128xf32>
    %954 = arith.addf %948, %953 : vector<8x128xf32>
    %cst_413 = arith.constant -6.000000e-01 : f32
    %955 = vector.broadcast %cst_413 : f32 to vector<8x128xf32>
    %956 = arith.subf %812, %955 : vector<8x128xf32>
    %cst_414 = arith.constant 2.500000e+00 : f32
    %957 = vector.broadcast %cst_414 : f32 to vector<8x128xf32>
    %958 = arith.mulf %956, %957 : vector<8x128xf32>
    %959 = arith.mulf %958, %862 : vector<8x128xf32>
    %cst_415 = arith.constant 2.000000e-01 : f32
    %960 = vector.broadcast %cst_415 : f32 to vector<8x128xf32>
    %961 = arith.subf %960, %812 : vector<8x128xf32>
    %cst_416 = arith.constant 2.500000e+00 : f32
    %962 = vector.broadcast %cst_416 : f32 to vector<8x128xf32>
    %963 = arith.mulf %961, %962 : vector<8x128xf32>
    %964 = arith.mulf %963, %870 : vector<8x128xf32>
    %965 = arith.addf %959, %964 : vector<8x128xf32>
    %cst_417 = arith.constant -2.000000e-01 : f32
    %966 = vector.broadcast %cst_417 : f32 to vector<8x128xf32>
    %967 = arith.subf %812, %966 : vector<8x128xf32>
    %cst_418 = arith.constant 2.500000e+00 : f32
    %968 = vector.broadcast %cst_418 : f32 to vector<8x128xf32>
    %969 = arith.mulf %967, %968 : vector<8x128xf32>
    %970 = arith.mulf %969, %870 : vector<8x128xf32>
    %cst_419 = arith.constant 6.000000e-01 : f32
    %971 = vector.broadcast %cst_419 : f32 to vector<8x128xf32>
    %972 = arith.subf %971, %812 : vector<8x128xf32>
    %cst_420 = arith.constant 2.500000e+00 : f32
    %973 = vector.broadcast %cst_420 : f32 to vector<8x128xf32>
    %974 = arith.mulf %972, %973 : vector<8x128xf32>
    %975 = arith.mulf %974, %878 : vector<8x128xf32>
    %976 = arith.addf %970, %975 : vector<8x128xf32>
    %cst_421 = arith.constant 2.000000e-01 : f32
    %977 = vector.broadcast %cst_421 : f32 to vector<8x128xf32>
    %978 = arith.subf %812, %977 : vector<8x128xf32>
    %cst_422 = arith.constant 2.500000e+00 : f32
    %979 = vector.broadcast %cst_422 : f32 to vector<8x128xf32>
    %980 = arith.mulf %978, %979 : vector<8x128xf32>
    %981 = arith.mulf %980, %878 : vector<8x128xf32>
    %cst_423 = arith.constant 1.000000e+00 : f32
    %982 = vector.broadcast %cst_423 : f32 to vector<8x128xf32>
    %983 = arith.subf %982, %812 : vector<8x128xf32>
    %cst_424 = arith.constant 2.500000e+00 : f32
    %984 = vector.broadcast %cst_424 : f32 to vector<8x128xf32>
    %985 = arith.mulf %983, %984 : vector<8x128xf32>
    %986 = arith.mulf %985, %886 : vector<8x128xf32>
    %987 = arith.addf %981, %986 : vector<8x128xf32>
    %cst_425 = arith.constant 6.000000e-01 : f32
    %988 = vector.broadcast %cst_425 : f32 to vector<8x128xf32>
    %989 = arith.subf %812, %988 : vector<8x128xf32>
    %cst_426 = arith.constant 2.500000e+00 : f32
    %990 = vector.broadcast %cst_426 : f32 to vector<8x128xf32>
    %991 = arith.mulf %989, %990 : vector<8x128xf32>
    %992 = arith.mulf %991, %886 : vector<8x128xf32>
    %cst_427 = arith.constant 1.400000e+00 : f32
    %993 = vector.broadcast %cst_427 : f32 to vector<8x128xf32>
    %994 = arith.subf %993, %812 : vector<8x128xf32>
    %cst_428 = arith.constant 2.500000e+00 : f32
    %995 = vector.broadcast %cst_428 : f32 to vector<8x128xf32>
    %996 = arith.mulf %994, %995 : vector<8x128xf32>
    %997 = arith.mulf %996, %894 : vector<8x128xf32>
    %998 = arith.addf %992, %997 : vector<8x128xf32>
    %cst_429 = arith.constant 1.000000e+00 : f32
    %999 = vector.broadcast %cst_429 : f32 to vector<8x128xf32>
    %1000 = arith.subf %812, %999 : vector<8x128xf32>
    %cst_430 = arith.constant 2.500000e+00 : f32
    %1001 = vector.broadcast %cst_430 : f32 to vector<8x128xf32>
    %1002 = arith.mulf %1000, %1001 : vector<8x128xf32>
    %1003 = arith.mulf %1002, %894 : vector<8x128xf32>
    %cst_431 = arith.constant 1.800000e+00 : f32
    %1004 = vector.broadcast %cst_431 : f32 to vector<8x128xf32>
    %1005 = arith.subf %1004, %812 : vector<8x128xf32>
    %cst_432 = arith.constant 2.500000e+00 : f32
    %1006 = vector.broadcast %cst_432 : f32 to vector<8x128xf32>
    %1007 = arith.mulf %1005, %1006 : vector<8x128xf32>
    %1008 = arith.mulf %1007, %902 : vector<8x128xf32>
    %1009 = arith.addf %1003, %1008 : vector<8x128xf32>
    %cst_433 = arith.constant 1.400000e+00 : f32
    %1010 = vector.broadcast %cst_433 : f32 to vector<8x128xf32>
    %1011 = arith.subf %812, %1010 : vector<8x128xf32>
    %cst_434 = arith.constant 2.500000e+00 : f32
    %1012 = vector.broadcast %cst_434 : f32 to vector<8x128xf32>
    %1013 = arith.mulf %1011, %1012 : vector<8x128xf32>
    %1014 = arith.mulf %1013, %902 : vector<8x128xf32>
    %cst_435 = arith.constant 2.200000e+00 : f32
    %1015 = vector.broadcast %cst_435 : f32 to vector<8x128xf32>
    %1016 = arith.subf %1015, %812 : vector<8x128xf32>
    %cst_436 = arith.constant 2.500000e+00 : f32
    %1017 = vector.broadcast %cst_436 : f32 to vector<8x128xf32>
    %1018 = arith.mulf %1016, %1017 : vector<8x128xf32>
    %1019 = arith.mulf %1018, %910 : vector<8x128xf32>
    %1020 = arith.addf %1014, %1019 : vector<8x128xf32>
    %cst_437 = arith.constant -2.200000e+00 : f32
    %1021 = vector.broadcast %cst_437 : f32 to vector<8x128xf32>
    %1022 = arith.subf %812, %1021 : vector<8x128xf32>
    %cst_438 = arith.constant 1.250000e+00 : f32
    %1023 = vector.broadcast %cst_438 : f32 to vector<8x128xf32>
    %1024 = arith.mulf %1022, %1023 : vector<8x128xf32>
    %1025 = arith.mulf %1024, %921 : vector<8x128xf32>
    %cst_439 = arith.constant -1.000000e+00 : f32
    %1026 = vector.broadcast %cst_439 : f32 to vector<8x128xf32>
    %1027 = arith.subf %1026, %812 : vector<8x128xf32>
    %cst_440 = arith.constant 1.250000e+00 : f32
    %1028 = vector.broadcast %cst_440 : f32 to vector<8x128xf32>
    %1029 = arith.mulf %1027, %1028 : vector<8x128xf32>
    %1030 = arith.mulf %1029, %932 : vector<8x128xf32>
    %1031 = arith.addf %1025, %1030 : vector<8x128xf32>
    %cst_441 = arith.constant -1.800000e+00 : f32
    %1032 = vector.broadcast %cst_441 : f32 to vector<8x128xf32>
    %1033 = arith.subf %812, %1032 : vector<8x128xf32>
    %cst_442 = arith.constant 1.250000e+00 : f32
    %1034 = vector.broadcast %cst_442 : f32 to vector<8x128xf32>
    %1035 = arith.mulf %1033, %1034 : vector<8x128xf32>
    %1036 = arith.mulf %1035, %932 : vector<8x128xf32>
    %cst_443 = arith.constant -6.000000e-01 : f32
    %1037 = vector.broadcast %cst_443 : f32 to vector<8x128xf32>
    %1038 = arith.subf %1037, %812 : vector<8x128xf32>
    %cst_444 = arith.constant 1.250000e+00 : f32
    %1039 = vector.broadcast %cst_444 : f32 to vector<8x128xf32>
    %1040 = arith.mulf %1038, %1039 : vector<8x128xf32>
    %1041 = arith.mulf %1040, %943 : vector<8x128xf32>
    %1042 = arith.addf %1036, %1041 : vector<8x128xf32>
    %cst_445 = arith.constant -1.400000e+00 : f32
    %1043 = vector.broadcast %cst_445 : f32 to vector<8x128xf32>
    %1044 = arith.subf %812, %1043 : vector<8x128xf32>
    %cst_446 = arith.constant 1.250000e+00 : f32
    %1045 = vector.broadcast %cst_446 : f32 to vector<8x128xf32>
    %1046 = arith.mulf %1044, %1045 : vector<8x128xf32>
    %1047 = arith.mulf %1046, %943 : vector<8x128xf32>
    %cst_447 = arith.constant -2.000000e-01 : f32
    %1048 = vector.broadcast %cst_447 : f32 to vector<8x128xf32>
    %1049 = arith.subf %1048, %812 : vector<8x128xf32>
    %cst_448 = arith.constant 1.250000e+00 : f32
    %1050 = vector.broadcast %cst_448 : f32 to vector<8x128xf32>
    %1051 = arith.mulf %1049, %1050 : vector<8x128xf32>
    %1052 = arith.mulf %1051, %954 : vector<8x128xf32>
    %1053 = arith.addf %1047, %1052 : vector<8x128xf32>
    %cst_449 = arith.constant -1.000000e+00 : f32
    %1054 = vector.broadcast %cst_449 : f32 to vector<8x128xf32>
    %1055 = arith.subf %812, %1054 : vector<8x128xf32>
    %cst_450 = arith.constant 1.250000e+00 : f32
    %1056 = vector.broadcast %cst_450 : f32 to vector<8x128xf32>
    %1057 = arith.mulf %1055, %1056 : vector<8x128xf32>
    %1058 = arith.mulf %1057, %954 : vector<8x128xf32>
    %cst_451 = arith.constant 2.000000e-01 : f32
    %1059 = vector.broadcast %cst_451 : f32 to vector<8x128xf32>
    %1060 = arith.subf %1059, %812 : vector<8x128xf32>
    %cst_452 = arith.constant 1.250000e+00 : f32
    %1061 = vector.broadcast %cst_452 : f32 to vector<8x128xf32>
    %1062 = arith.mulf %1060, %1061 : vector<8x128xf32>
    %1063 = arith.mulf %1062, %965 : vector<8x128xf32>
    %1064 = arith.addf %1058, %1063 : vector<8x128xf32>
    %cst_453 = arith.constant -6.000000e-01 : f32
    %1065 = vector.broadcast %cst_453 : f32 to vector<8x128xf32>
    %1066 = arith.subf %812, %1065 : vector<8x128xf32>
    %cst_454 = arith.constant 1.250000e+00 : f32
    %1067 = vector.broadcast %cst_454 : f32 to vector<8x128xf32>
    %1068 = arith.mulf %1066, %1067 : vector<8x128xf32>
    %1069 = arith.mulf %1068, %965 : vector<8x128xf32>
    %cst_455 = arith.constant 6.000000e-01 : f32
    %1070 = vector.broadcast %cst_455 : f32 to vector<8x128xf32>
    %1071 = arith.subf %1070, %812 : vector<8x128xf32>
    %cst_456 = arith.constant 1.250000e+00 : f32
    %1072 = vector.broadcast %cst_456 : f32 to vector<8x128xf32>
    %1073 = arith.mulf %1071, %1072 : vector<8x128xf32>
    %1074 = arith.mulf %1073, %976 : vector<8x128xf32>
    %1075 = arith.addf %1069, %1074 : vector<8x128xf32>
    %cst_457 = arith.constant -2.000000e-01 : f32
    %1076 = vector.broadcast %cst_457 : f32 to vector<8x128xf32>
    %1077 = arith.subf %812, %1076 : vector<8x128xf32>
    %cst_458 = arith.constant 1.250000e+00 : f32
    %1078 = vector.broadcast %cst_458 : f32 to vector<8x128xf32>
    %1079 = arith.mulf %1077, %1078 : vector<8x128xf32>
    %1080 = arith.mulf %1079, %976 : vector<8x128xf32>
    %cst_459 = arith.constant 1.000000e+00 : f32
    %1081 = vector.broadcast %cst_459 : f32 to vector<8x128xf32>
    %1082 = arith.subf %1081, %812 : vector<8x128xf32>
    %cst_460 = arith.constant 1.250000e+00 : f32
    %1083 = vector.broadcast %cst_460 : f32 to vector<8x128xf32>
    %1084 = arith.mulf %1082, %1083 : vector<8x128xf32>
    %1085 = arith.mulf %1084, %987 : vector<8x128xf32>
    %1086 = arith.addf %1080, %1085 : vector<8x128xf32>
    %cst_461 = arith.constant 2.000000e-01 : f32
    %1087 = vector.broadcast %cst_461 : f32 to vector<8x128xf32>
    %1088 = arith.subf %812, %1087 : vector<8x128xf32>
    %cst_462 = arith.constant 1.250000e+00 : f32
    %1089 = vector.broadcast %cst_462 : f32 to vector<8x128xf32>
    %1090 = arith.mulf %1088, %1089 : vector<8x128xf32>
    %1091 = arith.mulf %1090, %987 : vector<8x128xf32>
    %cst_463 = arith.constant 1.400000e+00 : f32
    %1092 = vector.broadcast %cst_463 : f32 to vector<8x128xf32>
    %1093 = arith.subf %1092, %812 : vector<8x128xf32>
    %cst_464 = arith.constant 1.250000e+00 : f32
    %1094 = vector.broadcast %cst_464 : f32 to vector<8x128xf32>
    %1095 = arith.mulf %1093, %1094 : vector<8x128xf32>
    %1096 = arith.mulf %1095, %998 : vector<8x128xf32>
    %1097 = arith.addf %1091, %1096 : vector<8x128xf32>
    %cst_465 = arith.constant 6.000000e-01 : f32
    %1098 = vector.broadcast %cst_465 : f32 to vector<8x128xf32>
    %1099 = arith.subf %812, %1098 : vector<8x128xf32>
    %cst_466 = arith.constant 1.250000e+00 : f32
    %1100 = vector.broadcast %cst_466 : f32 to vector<8x128xf32>
    %1101 = arith.mulf %1099, %1100 : vector<8x128xf32>
    %1102 = arith.mulf %1101, %998 : vector<8x128xf32>
    %cst_467 = arith.constant 1.800000e+00 : f32
    %1103 = vector.broadcast %cst_467 : f32 to vector<8x128xf32>
    %1104 = arith.subf %1103, %812 : vector<8x128xf32>
    %cst_468 = arith.constant 1.250000e+00 : f32
    %1105 = vector.broadcast %cst_468 : f32 to vector<8x128xf32>
    %1106 = arith.mulf %1104, %1105 : vector<8x128xf32>
    %1107 = arith.mulf %1106, %1009 : vector<8x128xf32>
    %1108 = arith.addf %1102, %1107 : vector<8x128xf32>
    %cst_469 = arith.constant 1.000000e+00 : f32
    %1109 = vector.broadcast %cst_469 : f32 to vector<8x128xf32>
    %1110 = arith.subf %812, %1109 : vector<8x128xf32>
    %cst_470 = arith.constant 1.250000e+00 : f32
    %1111 = vector.broadcast %cst_470 : f32 to vector<8x128xf32>
    %1112 = arith.mulf %1110, %1111 : vector<8x128xf32>
    %1113 = arith.mulf %1112, %1009 : vector<8x128xf32>
    %cst_471 = arith.constant 2.200000e+00 : f32
    %1114 = vector.broadcast %cst_471 : f32 to vector<8x128xf32>
    %1115 = arith.subf %1114, %812 : vector<8x128xf32>
    %cst_472 = arith.constant 1.250000e+00 : f32
    %1116 = vector.broadcast %cst_472 : f32 to vector<8x128xf32>
    %1117 = arith.mulf %1115, %1116 : vector<8x128xf32>
    %1118 = arith.mulf %1117, %1020 : vector<8x128xf32>
    %1119 = arith.addf %1113, %1118 : vector<8x128xf32>
    %cst_473 = arith.constant -2.200000e+00 : f32
    %1120 = vector.broadcast %cst_473 : f32 to vector<8x128xf32>
    %1121 = arith.subf %812, %1120 : vector<8x128xf32>
    %cst_474 = arith.constant 0.833333313 : f32
    %1122 = vector.broadcast %cst_474 : f32 to vector<8x128xf32>
    %1123 = arith.mulf %1121, %1122 : vector<8x128xf32>
    %1124 = arith.mulf %1123, %1031 : vector<8x128xf32>
    %cst_475 = arith.constant -6.000000e-01 : f32
    %1125 = vector.broadcast %cst_475 : f32 to vector<8x128xf32>
    %1126 = arith.subf %1125, %812 : vector<8x128xf32>
    %cst_476 = arith.constant 0.833333313 : f32
    %1127 = vector.broadcast %cst_476 : f32 to vector<8x128xf32>
    %1128 = arith.mulf %1126, %1127 : vector<8x128xf32>
    %1129 = arith.mulf %1128, %1042 : vector<8x128xf32>
    %1130 = arith.addf %1124, %1129 : vector<8x128xf32>
    %cst_477 = arith.constant -1.800000e+00 : f32
    %1131 = vector.broadcast %cst_477 : f32 to vector<8x128xf32>
    %1132 = arith.subf %812, %1131 : vector<8x128xf32>
    %cst_478 = arith.constant 0.833333313 : f32
    %1133 = vector.broadcast %cst_478 : f32 to vector<8x128xf32>
    %1134 = arith.mulf %1132, %1133 : vector<8x128xf32>
    %1135 = arith.mulf %1134, %1042 : vector<8x128xf32>
    %cst_479 = arith.constant -2.000000e-01 : f32
    %1136 = vector.broadcast %cst_479 : f32 to vector<8x128xf32>
    %1137 = arith.subf %1136, %812 : vector<8x128xf32>
    %cst_480 = arith.constant 0.833333313 : f32
    %1138 = vector.broadcast %cst_480 : f32 to vector<8x128xf32>
    %1139 = arith.mulf %1137, %1138 : vector<8x128xf32>
    %1140 = arith.mulf %1139, %1053 : vector<8x128xf32>
    %1141 = arith.addf %1135, %1140 : vector<8x128xf32>
    %cst_481 = arith.constant -1.400000e+00 : f32
    %1142 = vector.broadcast %cst_481 : f32 to vector<8x128xf32>
    %1143 = arith.subf %812, %1142 : vector<8x128xf32>
    %cst_482 = arith.constant 0.833333313 : f32
    %1144 = vector.broadcast %cst_482 : f32 to vector<8x128xf32>
    %1145 = arith.mulf %1143, %1144 : vector<8x128xf32>
    %1146 = arith.mulf %1145, %1053 : vector<8x128xf32>
    %cst_483 = arith.constant 2.000000e-01 : f32
    %1147 = vector.broadcast %cst_483 : f32 to vector<8x128xf32>
    %1148 = arith.subf %1147, %812 : vector<8x128xf32>
    %cst_484 = arith.constant 0.833333313 : f32
    %1149 = vector.broadcast %cst_484 : f32 to vector<8x128xf32>
    %1150 = arith.mulf %1148, %1149 : vector<8x128xf32>
    %1151 = arith.mulf %1150, %1064 : vector<8x128xf32>
    %1152 = arith.addf %1146, %1151 : vector<8x128xf32>
    %cst_485 = arith.constant -1.000000e+00 : f32
    %1153 = vector.broadcast %cst_485 : f32 to vector<8x128xf32>
    %1154 = arith.subf %812, %1153 : vector<8x128xf32>
    %cst_486 = arith.constant 0.833333313 : f32
    %1155 = vector.broadcast %cst_486 : f32 to vector<8x128xf32>
    %1156 = arith.mulf %1154, %1155 : vector<8x128xf32>
    %1157 = arith.mulf %1156, %1064 : vector<8x128xf32>
    %cst_487 = arith.constant 6.000000e-01 : f32
    %1158 = vector.broadcast %cst_487 : f32 to vector<8x128xf32>
    %1159 = arith.subf %1158, %812 : vector<8x128xf32>
    %cst_488 = arith.constant 0.833333313 : f32
    %1160 = vector.broadcast %cst_488 : f32 to vector<8x128xf32>
    %1161 = arith.mulf %1159, %1160 : vector<8x128xf32>
    %1162 = arith.mulf %1161, %1075 : vector<8x128xf32>
    %1163 = arith.addf %1157, %1162 : vector<8x128xf32>
    %cst_489 = arith.constant -6.000000e-01 : f32
    %1164 = vector.broadcast %cst_489 : f32 to vector<8x128xf32>
    %1165 = arith.subf %812, %1164 : vector<8x128xf32>
    %cst_490 = arith.constant 0.833333313 : f32
    %1166 = vector.broadcast %cst_490 : f32 to vector<8x128xf32>
    %1167 = arith.mulf %1165, %1166 : vector<8x128xf32>
    %1168 = arith.mulf %1167, %1075 : vector<8x128xf32>
    %cst_491 = arith.constant 1.000000e+00 : f32
    %1169 = vector.broadcast %cst_491 : f32 to vector<8x128xf32>
    %1170 = arith.subf %1169, %812 : vector<8x128xf32>
    %cst_492 = arith.constant 0.833333313 : f32
    %1171 = vector.broadcast %cst_492 : f32 to vector<8x128xf32>
    %1172 = arith.mulf %1170, %1171 : vector<8x128xf32>
    %1173 = arith.mulf %1172, %1086 : vector<8x128xf32>
    %1174 = arith.addf %1168, %1173 : vector<8x128xf32>
    %cst_493 = arith.constant -2.000000e-01 : f32
    %1175 = vector.broadcast %cst_493 : f32 to vector<8x128xf32>
    %1176 = arith.subf %812, %1175 : vector<8x128xf32>
    %cst_494 = arith.constant 0.833333313 : f32
    %1177 = vector.broadcast %cst_494 : f32 to vector<8x128xf32>
    %1178 = arith.mulf %1176, %1177 : vector<8x128xf32>
    %1179 = arith.mulf %1178, %1086 : vector<8x128xf32>
    %cst_495 = arith.constant 1.400000e+00 : f32
    %1180 = vector.broadcast %cst_495 : f32 to vector<8x128xf32>
    %1181 = arith.subf %1180, %812 : vector<8x128xf32>
    %cst_496 = arith.constant 0.833333313 : f32
    %1182 = vector.broadcast %cst_496 : f32 to vector<8x128xf32>
    %1183 = arith.mulf %1181, %1182 : vector<8x128xf32>
    %1184 = arith.mulf %1183, %1097 : vector<8x128xf32>
    %1185 = arith.addf %1179, %1184 : vector<8x128xf32>
    %cst_497 = arith.constant 2.000000e-01 : f32
    %1186 = vector.broadcast %cst_497 : f32 to vector<8x128xf32>
    %1187 = arith.subf %812, %1186 : vector<8x128xf32>
    %cst_498 = arith.constant 0.833333313 : f32
    %1188 = vector.broadcast %cst_498 : f32 to vector<8x128xf32>
    %1189 = arith.mulf %1187, %1188 : vector<8x128xf32>
    %1190 = arith.mulf %1189, %1097 : vector<8x128xf32>
    %cst_499 = arith.constant 1.800000e+00 : f32
    %1191 = vector.broadcast %cst_499 : f32 to vector<8x128xf32>
    %1192 = arith.subf %1191, %812 : vector<8x128xf32>
    %cst_500 = arith.constant 0.833333313 : f32
    %1193 = vector.broadcast %cst_500 : f32 to vector<8x128xf32>
    %1194 = arith.mulf %1192, %1193 : vector<8x128xf32>
    %1195 = arith.mulf %1194, %1108 : vector<8x128xf32>
    %1196 = arith.addf %1190, %1195 : vector<8x128xf32>
    %cst_501 = arith.constant 6.000000e-01 : f32
    %1197 = vector.broadcast %cst_501 : f32 to vector<8x128xf32>
    %1198 = arith.subf %812, %1197 : vector<8x128xf32>
    %cst_502 = arith.constant 0.833333313 : f32
    %1199 = vector.broadcast %cst_502 : f32 to vector<8x128xf32>
    %1200 = arith.mulf %1198, %1199 : vector<8x128xf32>
    %1201 = arith.mulf %1200, %1108 : vector<8x128xf32>
    %cst_503 = arith.constant 2.200000e+00 : f32
    %1202 = vector.broadcast %cst_503 : f32 to vector<8x128xf32>
    %1203 = arith.subf %1202, %812 : vector<8x128xf32>
    %cst_504 = arith.constant 0.833333313 : f32
    %1204 = vector.broadcast %cst_504 : f32 to vector<8x128xf32>
    %1205 = arith.mulf %1203, %1204 : vector<8x128xf32>
    %1206 = arith.mulf %1205, %1119 : vector<8x128xf32>
    %1207 = arith.addf %1201, %1206 : vector<8x128xf32>
    %c8_505 = arith.constant 8 : index
    %c0_506 = arith.constant 0 : index
    %1208 = vector.load %arg12[%c8_505, %c0_506] : memref<72x128xf32, #tpu.memory_space<vmem>>, vector<8x128xf32>
    tpu.vector_store %arg12[%c8_505, %c0_506], %1130 {strides = array<i32>} : memref<72x128xf32, #tpu.memory_space<vmem>>, vector<8x128xf32>,
    %c16_507 = arith.constant 16 : index
    %c0_508 = arith.constant 0 : index
    %1209 = vector.load %arg12[%c16_507, %c0_508] : memref<72x128xf32, #tpu.memory_space<vmem>>, vector<8x128xf32>
    tpu.vector_store %arg12[%c16_507, %c0_508], %1141 {strides = array<i32>} : memref<72x128xf32, #tpu.memory_space<vmem>>, vector<8x128xf32>,
    %c24_509 = arith.constant 24 : index
    %c0_510 = arith.constant 0 : index
    %1210 = vector.load %arg12[%c24_509, %c0_510] : memref<72x128xf32, #tpu.memory_space<vmem>>, vector<8x128xf32>
    tpu.vector_store %arg12[%c24_509, %c0_510], %1152 {strides = array<i32>} : memref<72x128xf32, #tpu.memory_space<vmem>>, vector<8x128xf32>,
    %c32_511 = arith.constant 32 : index
    %c0_512 = arith.constant 0 : index
    %1211 = vector.load %arg12[%c32_511, %c0_512] : memref<72x128xf32, #tpu.memory_space<vmem>>, vector<8x128xf32>
    tpu.vector_store %arg12[%c32_511, %c0_512], %1163 {strides = array<i32>} : memref<72x128xf32, #tpu.memory_space<vmem>>, vector<8x128xf32>,
    %c40_513 = arith.constant 40 : index
    %c0_514 = arith.constant 0 : index
    %1212 = vector.load %arg12[%c40_513, %c0_514] : memref<72x128xf32, #tpu.memory_space<vmem>>, vector<8x128xf32>
    tpu.vector_store %arg12[%c40_513, %c0_514], %1174 {strides = array<i32>} : memref<72x128xf32, #tpu.memory_space<vmem>>, vector<8x128xf32>,
    %c48_515 = arith.constant 48 : index
    %c0_516 = arith.constant 0 : index
    %1213 = vector.load %arg12[%c48_515, %c0_516] : memref<72x128xf32, #tpu.memory_space<vmem>>, vector<8x128xf32>
    tpu.vector_store %arg12[%c48_515, %c0_516], %1185 {strides = array<i32>} : memref<72x128xf32, #tpu.memory_space<vmem>>, vector<8x128xf32>,
    %c56_517 = arith.constant 56 : index
    %c0_518 = arith.constant 0 : index
    %1214 = vector.load %arg12[%c56_517, %c0_518] : memref<72x128xf32, #tpu.memory_space<vmem>>, vector<8x128xf32>
    tpu.vector_store %arg12[%c56_517, %c0_518], %1196 {strides = array<i32>} : memref<72x128xf32, #tpu.memory_space<vmem>>, vector<8x128xf32>,
    %c64_519 = arith.constant 64 : index
    %c0_520 = arith.constant 0 : index
    %1215 = vector.load %arg12[%c64_519, %c0_520] : memref<72x128xf32, #tpu.memory_space<vmem>>, vector<8x128xf32>
    tpu.vector_store %arg12[%c64_519, %c0_520], %1207 {strides = array<i32>} : memref<72x128xf32, #tpu.memory_space<vmem>>, vector<8x128xf32>,
    %c0_521 = arith.constant 0 : index
    %c0_522 = arith.constant 0 : index
    %1216 = vector.load %arg6[%c0_521, %c0_522] : memref<4x72xf32, #tpu.memory_space<vmem>>, vector<4x72xf32>
    %c0_523 = arith.constant 0 : index
    %c0_524 = arith.constant 0 : index
    %1217 = vector.load %arg12[%c0_523, %c0_524] : memref<72x128xf32, #tpu.memory_space<vmem>>, vector<72x128xf32>
    %cst_525 = arith.constant dense<0.000000e+00> : vector<4x128xf32>
    %1218 = tpu.matmul %1216, %1217, %cst_525 {dimension_numbers = #tpu.dot_dimension_numbers<[1], [0], [0], [1], [0, 0, 1, 1], [], []>} : vector<4x72xf32>, vector<72x128xf32>, vector<4x128xf32> -> vector<4x128xf32>
    %cst_526 = arith.constant 0.000000e+00 : f32
    %1219 = vector.broadcast %cst_526 : f32 to vector<72x128xf32>
    %c0_527 = arith.constant 0 : index
    %c0_528 = arith.constant 0 : index
    %1220 = vector.load %arg13[%c0_527, %c0_528] : memref<72x128xf32, #tpu.memory_space<vmem>>, vector<72x128xf32>
    tpu.vector_store %arg13[%c0_527, %c0_528], %1219 {strides = array<i32>} : memref<72x128xf32, #tpu.memory_space<vmem>>, vector<72x128xf32>,
    %cst_529 = arith.constant 0.000000e+00 : f32
    %1221 = vector.broadcast %cst_529 : f32 to vector<4x128xf32>
    %1222 = arith.subf %1221, %1218 : vector<4x128xf32>
    %1223 = math.exp %1222 : vector<4x128xf32>
    %cst_530 = arith.constant 1.000000e+00 : f32
    %1224 = vector.broadcast %cst_530 : f32 to vector<4x128xf32>
    %1225 = arith.addf %1224, %1223 : vector<4x128xf32>
    %cst_531 = arith.constant 1.000000e+00 : f32
    %1226 = vector.broadcast %cst_531 : f32 to vector<4x128xf32>
    %1227 = arith.divf %1226, %1225 : vector<4x128xf32>
    %1228 = arith.mulf %1218, %1227 : vector<4x128xf32>
    %c0_532 = arith.constant 0 : index
    %c0_533 = arith.constant 0 : index
    %1229 = vector.load %arg13[%c0_532, %c0_533] : memref<72x128xf32, #tpu.memory_space<vmem>>, vector<4x128xf32>
    tpu.vector_store %arg13[%c0_532, %c0_533], %1228 {strides = array<i32>} : memref<72x128xf32, #tpu.memory_space<vmem>>, vector<4x128xf32>,
    %cst_534 = arith.constant -2.200000e+00 : f32
    %1230 = vector.broadcast %cst_534 : f32 to vector<4x128xf32>
    %1231 = arith.cmpf oge, %1218, %1230 : vector<4x128xf32>
    %cst_535 = arith.constant -1.800000e+00 : f32
    %1232 = vector.broadcast %cst_535 : f32 to vector<4x128xf32>
    %1233 = arith.cmpf olt, %1218, %1232 : vector<4x128xf32>
    %1234 = arith.andi %1231, %1233 : vector<4x128xi1>
    %cst_536 = arith.constant 1.000000e+00 : f32
    %cst_537 = arith.constant 0.000000e+00 : f32
    %1235 = vector.broadcast %cst_536 : f32 to vector<4x128xf32>
    %1236 = vector.broadcast %cst_537 : f32 to vector<4x128xf32>
    %1237 = arith.select %1234, %1235, %1236 : vector<4x128xi1>, vector<4x128xf32>
    %cst_538 = arith.constant -1.800000e+00 : f32
    %1238 = vector.broadcast %cst_538 : f32 to vector<4x128xf32>
    %1239 = arith.cmpf oge, %1218, %1238 : vector<4x128xf32>
    %cst_539 = arith.constant -1.400000e+00 : f32
    %1240 = vector.broadcast %cst_539 : f32 to vector<4x128xf32>
    %1241 = arith.cmpf olt, %1218, %1240 : vector<4x128xf32>
    %1242 = arith.andi %1239, %1241 : vector<4x128xi1>
    %cst_540 = arith.constant 1.000000e+00 : f32
    %cst_541 = arith.constant 0.000000e+00 : f32
    %1243 = vector.broadcast %cst_540 : f32 to vector<4x128xf32>
    %1244 = vector.broadcast %cst_541 : f32 to vector<4x128xf32>
    %1245 = arith.select %1242, %1243, %1244 : vector<4x128xi1>, vector<4x128xf32>
    %cst_542 = arith.constant -1.400000e+00 : f32
    %1246 = vector.broadcast %cst_542 : f32 to vector<4x128xf32>
    %1247 = arith.cmpf oge, %1218, %1246 : vector<4x128xf32>
    %cst_543 = arith.constant -1.000000e+00 : f32
    %1248 = vector.broadcast %cst_543 : f32 to vector<4x128xf32>
    %1249 = arith.cmpf olt, %1218, %1248 : vector<4x128xf32>
    %1250 = arith.andi %1247, %1249 : vector<4x128xi1>
    %cst_544 = arith.constant 1.000000e+00 : f32
    %cst_545 = arith.constant 0.000000e+00 : f32
    %1251 = vector.broadcast %cst_544 : f32 to vector<4x128xf32>
    %1252 = vector.broadcast %cst_545 : f32 to vector<4x128xf32>
    %1253 = arith.select %1250, %1251, %1252 : vector<4x128xi1>, vector<4x128xf32>
    %cst_546 = arith.constant -1.000000e+00 : f32
    %1254 = vector.broadcast %cst_546 : f32 to vector<4x128xf32>
    %1255 = arith.cmpf oge, %1218, %1254 : vector<4x128xf32>
    %cst_547 = arith.constant -6.000000e-01 : f32
    %1256 = vector.broadcast %cst_547 : f32 to vector<4x128xf32>
    %1257 = arith.cmpf olt, %1218, %1256 : vector<4x128xf32>
    %1258 = arith.andi %1255, %1257 : vector<4x128xi1>
    %cst_548 = arith.constant 1.000000e+00 : f32
    %cst_549 = arith.constant 0.000000e+00 : f32
    %1259 = vector.broadcast %cst_548 : f32 to vector<4x128xf32>
    %1260 = vector.broadcast %cst_549 : f32 to vector<4x128xf32>
    %1261 = arith.select %1258, %1259, %1260 : vector<4x128xi1>, vector<4x128xf32>
    %cst_550 = arith.constant -6.000000e-01 : f32
    %1262 = vector.broadcast %cst_550 : f32 to vector<4x128xf32>
    %1263 = arith.cmpf oge, %1218, %1262 : vector<4x128xf32>
    %cst_551 = arith.constant -2.000000e-01 : f32
    %1264 = vector.broadcast %cst_551 : f32 to vector<4x128xf32>
    %1265 = arith.cmpf olt, %1218, %1264 : vector<4x128xf32>
    %1266 = arith.andi %1263, %1265 : vector<4x128xi1>
    %cst_552 = arith.constant 1.000000e+00 : f32
    %cst_553 = arith.constant 0.000000e+00 : f32
    %1267 = vector.broadcast %cst_552 : f32 to vector<4x128xf32>
    %1268 = vector.broadcast %cst_553 : f32 to vector<4x128xf32>
    %1269 = arith.select %1266, %1267, %1268 : vector<4x128xi1>, vector<4x128xf32>
    %cst_554 = arith.constant -2.000000e-01 : f32
    %1270 = vector.broadcast %cst_554 : f32 to vector<4x128xf32>
    %1271 = arith.cmpf oge, %1218, %1270 : vector<4x128xf32>
    %cst_555 = arith.constant 2.000000e-01 : f32
    %1272 = vector.broadcast %cst_555 : f32 to vector<4x128xf32>
    %1273 = arith.cmpf olt, %1218, %1272 : vector<4x128xf32>
    %1274 = arith.andi %1271, %1273 : vector<4x128xi1>
    %cst_556 = arith.constant 1.000000e+00 : f32
    %cst_557 = arith.constant 0.000000e+00 : f32
    %1275 = vector.broadcast %cst_556 : f32 to vector<4x128xf32>
    %1276 = vector.broadcast %cst_557 : f32 to vector<4x128xf32>
    %1277 = arith.select %1274, %1275, %1276 : vector<4x128xi1>, vector<4x128xf32>
    %cst_558 = arith.constant 2.000000e-01 : f32
    %1278 = vector.broadcast %cst_558 : f32 to vector<4x128xf32>
    %1279 = arith.cmpf oge, %1218, %1278 : vector<4x128xf32>
    %cst_559 = arith.constant 6.000000e-01 : f32
    %1280 = vector.broadcast %cst_559 : f32 to vector<4x128xf32>
    %1281 = arith.cmpf olt, %1218, %1280 : vector<4x128xf32>
    %1282 = arith.andi %1279, %1281 : vector<4x128xi1>
    %cst_560 = arith.constant 1.000000e+00 : f32
    %cst_561 = arith.constant 0.000000e+00 : f32
    %1283 = vector.broadcast %cst_560 : f32 to vector<4x128xf32>
    %1284 = vector.broadcast %cst_561 : f32 to vector<4x128xf32>
    %1285 = arith.select %1282, %1283, %1284 : vector<4x128xi1>, vector<4x128xf32>
    %cst_562 = arith.constant 6.000000e-01 : f32
    %1286 = vector.broadcast %cst_562 : f32 to vector<4x128xf32>
    %1287 = arith.cmpf oge, %1218, %1286 : vector<4x128xf32>
    %cst_563 = arith.constant 1.000000e+00 : f32
    %1288 = vector.broadcast %cst_563 : f32 to vector<4x128xf32>
    %1289 = arith.cmpf olt, %1218, %1288 : vector<4x128xf32>
    %1290 = arith.andi %1287, %1289 : vector<4x128xi1>
    %cst_564 = arith.constant 1.000000e+00 : f32
    %cst_565 = arith.constant 0.000000e+00 : f32
    %1291 = vector.broadcast %cst_564 : f32 to vector<4x128xf32>
    %1292 = vector.broadcast %cst_565 : f32 to vector<4x128xf32>
    %1293 = arith.select %1290, %1291, %1292 : vector<4x128xi1>, vector<4x128xf32>
    %cst_566 = arith.constant 1.000000e+00 : f32
    %1294 = vector.broadcast %cst_566 : f32 to vector<4x128xf32>
    %1295 = arith.cmpf oge, %1218, %1294 : vector<4x128xf32>
    %cst_567 = arith.constant 1.400000e+00 : f32
    %1296 = vector.broadcast %cst_567 : f32 to vector<4x128xf32>
    %1297 = arith.cmpf olt, %1218, %1296 : vector<4x128xf32>
    %1298 = arith.andi %1295, %1297 : vector<4x128xi1>
    %cst_568 = arith.constant 1.000000e+00 : f32
    %cst_569 = arith.constant 0.000000e+00 : f32
    %1299 = vector.broadcast %cst_568 : f32 to vector<4x128xf32>
    %1300 = vector.broadcast %cst_569 : f32 to vector<4x128xf32>
    %1301 = arith.select %1298, %1299, %1300 : vector<4x128xi1>, vector<4x128xf32>
    %cst_570 = arith.constant 1.400000e+00 : f32
    %1302 = vector.broadcast %cst_570 : f32 to vector<4x128xf32>
    %1303 = arith.cmpf oge, %1218, %1302 : vector<4x128xf32>
    %cst_571 = arith.constant 1.800000e+00 : f32
    %1304 = vector.broadcast %cst_571 : f32 to vector<4x128xf32>
    %1305 = arith.cmpf olt, %1218, %1304 : vector<4x128xf32>
    %1306 = arith.andi %1303, %1305 : vector<4x128xi1>
    %cst_572 = arith.constant 1.000000e+00 : f32
    %cst_573 = arith.constant 0.000000e+00 : f32
    %1307 = vector.broadcast %cst_572 : f32 to vector<4x128xf32>
    %1308 = vector.broadcast %cst_573 : f32 to vector<4x128xf32>
    %1309 = arith.select %1306, %1307, %1308 : vector<4x128xi1>, vector<4x128xf32>
    %cst_574 = arith.constant 1.800000e+00 : f32
    %1310 = vector.broadcast %cst_574 : f32 to vector<4x128xf32>
    %1311 = arith.cmpf oge, %1218, %1310 : vector<4x128xf32>
    %cst_575 = arith.constant 2.200000e+00 : f32
    %1312 = vector.broadcast %cst_575 : f32 to vector<4x128xf32>
    %1313 = arith.cmpf olt, %1218, %1312 : vector<4x128xf32>
    %1314 = arith.andi %1311, %1313 : vector<4x128xi1>
    %cst_576 = arith.constant 1.000000e+00 : f32
    %cst_577 = arith.constant 0.000000e+00 : f32
    %1315 = vector.broadcast %cst_576 : f32 to vector<4x128xf32>
    %1316 = vector.broadcast %cst_577 : f32 to vector<4x128xf32>
    %1317 = arith.select %1314, %1315, %1316 : vector<4x128xi1>, vector<4x128xf32>
    %cst_578 = arith.constant -2.200000e+00 : f32
    %1318 = vector.broadcast %cst_578 : f32 to vector<4x128xf32>
    %1319 = arith.subf %1218, %1318 : vector<4x128xf32>
    %cst_579 = arith.constant 2.500000e+00 : f32
    %1320 = vector.broadcast %cst_579 : f32 to vector<4x128xf32>
    %1321 = arith.mulf %1319, %1320 : vector<4x128xf32>
    %1322 = arith.mulf %1321, %1237 : vector<4x128xf32>
    %cst_580 = arith.constant -1.400000e+00 : f32
    %1323 = vector.broadcast %cst_580 : f32 to vector<4x128xf32>
    %1324 = arith.subf %1323, %1218 : vector<4x128xf32>
    %cst_581 = arith.constant 2.500000e+00 : f32
    %1325 = vector.broadcast %cst_581 : f32 to vector<4x128xf32>
    %1326 = arith.mulf %1324, %1325 : vector<4x128xf32>
    %1327 = arith.mulf %1326, %1245 : vector<4x128xf32>
    %1328 = arith.addf %1322, %1327 : vector<4x128xf32>
    %cst_582 = arith.constant -1.800000e+00 : f32
    %1329 = vector.broadcast %cst_582 : f32 to vector<4x128xf32>
    %1330 = arith.subf %1218, %1329 : vector<4x128xf32>
    %cst_583 = arith.constant 2.500000e+00 : f32
    %1331 = vector.broadcast %cst_583 : f32 to vector<4x128xf32>
    %1332 = arith.mulf %1330, %1331 : vector<4x128xf32>
    %1333 = arith.mulf %1332, %1245 : vector<4x128xf32>
    %cst_584 = arith.constant -1.000000e+00 : f32
    %1334 = vector.broadcast %cst_584 : f32 to vector<4x128xf32>
    %1335 = arith.subf %1334, %1218 : vector<4x128xf32>
    %cst_585 = arith.constant 2.500000e+00 : f32
    %1336 = vector.broadcast %cst_585 : f32 to vector<4x128xf32>
    %1337 = arith.mulf %1335, %1336 : vector<4x128xf32>
    %1338 = arith.mulf %1337, %1253 : vector<4x128xf32>
    %1339 = arith.addf %1333, %1338 : vector<4x128xf32>
    %cst_586 = arith.constant -1.400000e+00 : f32
    %1340 = vector.broadcast %cst_586 : f32 to vector<4x128xf32>
    %1341 = arith.subf %1218, %1340 : vector<4x128xf32>
    %cst_587 = arith.constant 2.500000e+00 : f32
    %1342 = vector.broadcast %cst_587 : f32 to vector<4x128xf32>
    %1343 = arith.mulf %1341, %1342 : vector<4x128xf32>
    %1344 = arith.mulf %1343, %1253 : vector<4x128xf32>
    %cst_588 = arith.constant -6.000000e-01 : f32
    %1345 = vector.broadcast %cst_588 : f32 to vector<4x128xf32>
    %1346 = arith.subf %1345, %1218 : vector<4x128xf32>
    %cst_589 = arith.constant 2.500000e+00 : f32
    %1347 = vector.broadcast %cst_589 : f32 to vector<4x128xf32>
    %1348 = arith.mulf %1346, %1347 : vector<4x128xf32>
    %1349 = arith.mulf %1348, %1261 : vector<4x128xf32>
    %1350 = arith.addf %1344, %1349 : vector<4x128xf32>
    %cst_590 = arith.constant -1.000000e+00 : f32
    %1351 = vector.broadcast %cst_590 : f32 to vector<4x128xf32>
    %1352 = arith.subf %1218, %1351 : vector<4x128xf32>
    %cst_591 = arith.constant 2.500000e+00 : f32
    %1353 = vector.broadcast %cst_591 : f32 to vector<4x128xf32>
    %1354 = arith.mulf %1352, %1353 : vector<4x128xf32>
    %1355 = arith.mulf %1354, %1261 : vector<4x128xf32>
    %cst_592 = arith.constant -2.000000e-01 : f32
    %1356 = vector.broadcast %cst_592 : f32 to vector<4x128xf32>
    %1357 = arith.subf %1356, %1218 : vector<4x128xf32>
    %cst_593 = arith.constant 2.500000e+00 : f32
    %1358 = vector.broadcast %cst_593 : f32 to vector<4x128xf32>
    %1359 = arith.mulf %1357, %1358 : vector<4x128xf32>
    %1360 = arith.mulf %1359, %1269 : vector<4x128xf32>
    %1361 = arith.addf %1355, %1360 : vector<4x128xf32>
    %cst_594 = arith.constant -6.000000e-01 : f32
    %1362 = vector.broadcast %cst_594 : f32 to vector<4x128xf32>
    %1363 = arith.subf %1218, %1362 : vector<4x128xf32>
    %cst_595 = arith.constant 2.500000e+00 : f32
    %1364 = vector.broadcast %cst_595 : f32 to vector<4x128xf32>
    %1365 = arith.mulf %1363, %1364 : vector<4x128xf32>
    %1366 = arith.mulf %1365, %1269 : vector<4x128xf32>
    %cst_596 = arith.constant 2.000000e-01 : f32
    %1367 = vector.broadcast %cst_596 : f32 to vector<4x128xf32>
    %1368 = arith.subf %1367, %1218 : vector<4x128xf32>
    %cst_597 = arith.constant 2.500000e+00 : f32
    %1369 = vector.broadcast %cst_597 : f32 to vector<4x128xf32>
    %1370 = arith.mulf %1368, %1369 : vector<4x128xf32>
    %1371 = arith.mulf %1370, %1277 : vector<4x128xf32>
    %1372 = arith.addf %1366, %1371 : vector<4x128xf32>
    %cst_598 = arith.constant -2.000000e-01 : f32
    %1373 = vector.broadcast %cst_598 : f32 to vector<4x128xf32>
    %1374 = arith.subf %1218, %1373 : vector<4x128xf32>
    %cst_599 = arith.constant 2.500000e+00 : f32
    %1375 = vector.broadcast %cst_599 : f32 to vector<4x128xf32>
    %1376 = arith.mulf %1374, %1375 : vector<4x128xf32>
    %1377 = arith.mulf %1376, %1277 : vector<4x128xf32>
    %cst_600 = arith.constant 6.000000e-01 : f32
    %1378 = vector.broadcast %cst_600 : f32 to vector<4x128xf32>
    %1379 = arith.subf %1378, %1218 : vector<4x128xf32>
    %cst_601 = arith.constant 2.500000e+00 : f32
    %1380 = vector.broadcast %cst_601 : f32 to vector<4x128xf32>
    %1381 = arith.mulf %1379, %1380 : vector<4x128xf32>
    %1382 = arith.mulf %1381, %1285 : vector<4x128xf32>
    %1383 = arith.addf %1377, %1382 : vector<4x128xf32>
    %cst_602 = arith.constant 2.000000e-01 : f32
    %1384 = vector.broadcast %cst_602 : f32 to vector<4x128xf32>
    %1385 = arith.subf %1218, %1384 : vector<4x128xf32>
    %cst_603 = arith.constant 2.500000e+00 : f32
    %1386 = vector.broadcast %cst_603 : f32 to vector<4x128xf32>
    %1387 = arith.mulf %1385, %1386 : vector<4x128xf32>
    %1388 = arith.mulf %1387, %1285 : vector<4x128xf32>
    %cst_604 = arith.constant 1.000000e+00 : f32
    %1389 = vector.broadcast %cst_604 : f32 to vector<4x128xf32>
    %1390 = arith.subf %1389, %1218 : vector<4x128xf32>
    %cst_605 = arith.constant 2.500000e+00 : f32
    %1391 = vector.broadcast %cst_605 : f32 to vector<4x128xf32>
    %1392 = arith.mulf %1390, %1391 : vector<4x128xf32>
    %1393 = arith.mulf %1392, %1293 : vector<4x128xf32>
    %1394 = arith.addf %1388, %1393 : vector<4x128xf32>
    %cst_606 = arith.constant 6.000000e-01 : f32
    %1395 = vector.broadcast %cst_606 : f32 to vector<4x128xf32>
    %1396 = arith.subf %1218, %1395 : vector<4x128xf32>
    %cst_607 = arith.constant 2.500000e+00 : f32
    %1397 = vector.broadcast %cst_607 : f32 to vector<4x128xf32>
    %1398 = arith.mulf %1396, %1397 : vector<4x128xf32>
    %1399 = arith.mulf %1398, %1293 : vector<4x128xf32>
    %cst_608 = arith.constant 1.400000e+00 : f32
    %1400 = vector.broadcast %cst_608 : f32 to vector<4x128xf32>
    %1401 = arith.subf %1400, %1218 : vector<4x128xf32>
    %cst_609 = arith.constant 2.500000e+00 : f32
    %1402 = vector.broadcast %cst_609 : f32 to vector<4x128xf32>
    %1403 = arith.mulf %1401, %1402 : vector<4x128xf32>
    %1404 = arith.mulf %1403, %1301 : vector<4x128xf32>
    %1405 = arith.addf %1399, %1404 : vector<4x128xf32>
    %cst_610 = arith.constant 1.000000e+00 : f32
    %1406 = vector.broadcast %cst_610 : f32 to vector<4x128xf32>
    %1407 = arith.subf %1218, %1406 : vector<4x128xf32>
    %cst_611 = arith.constant 2.500000e+00 : f32
    %1408 = vector.broadcast %cst_611 : f32 to vector<4x128xf32>
    %1409 = arith.mulf %1407, %1408 : vector<4x128xf32>
    %1410 = arith.mulf %1409, %1301 : vector<4x128xf32>
    %cst_612 = arith.constant 1.800000e+00 : f32
    %1411 = vector.broadcast %cst_612 : f32 to vector<4x128xf32>
    %1412 = arith.subf %1411, %1218 : vector<4x128xf32>
    %cst_613 = arith.constant 2.500000e+00 : f32
    %1413 = vector.broadcast %cst_613 : f32 to vector<4x128xf32>
    %1414 = arith.mulf %1412, %1413 : vector<4x128xf32>
    %1415 = arith.mulf %1414, %1309 : vector<4x128xf32>
    %1416 = arith.addf %1410, %1415 : vector<4x128xf32>
    %cst_614 = arith.constant 1.400000e+00 : f32
    %1417 = vector.broadcast %cst_614 : f32 to vector<4x128xf32>
    %1418 = arith.subf %1218, %1417 : vector<4x128xf32>
    %cst_615 = arith.constant 2.500000e+00 : f32
    %1419 = vector.broadcast %cst_615 : f32 to vector<4x128xf32>
    %1420 = arith.mulf %1418, %1419 : vector<4x128xf32>
    %1421 = arith.mulf %1420, %1309 : vector<4x128xf32>
    %cst_616 = arith.constant 2.200000e+00 : f32
    %1422 = vector.broadcast %cst_616 : f32 to vector<4x128xf32>
    %1423 = arith.subf %1422, %1218 : vector<4x128xf32>
    %cst_617 = arith.constant 2.500000e+00 : f32
    %1424 = vector.broadcast %cst_617 : f32 to vector<4x128xf32>
    %1425 = arith.mulf %1423, %1424 : vector<4x128xf32>
    %1426 = arith.mulf %1425, %1317 : vector<4x128xf32>
    %1427 = arith.addf %1421, %1426 : vector<4x128xf32>
    %cst_618 = arith.constant -2.200000e+00 : f32
    %1428 = vector.broadcast %cst_618 : f32 to vector<4x128xf32>
    %1429 = arith.subf %1218, %1428 : vector<4x128xf32>
    %cst_619 = arith.constant 1.250000e+00 : f32
    %1430 = vector.broadcast %cst_619 : f32 to vector<4x128xf32>
    %1431 = arith.mulf %1429, %1430 : vector<4x128xf32>
    %1432 = arith.mulf %1431, %1328 : vector<4x128xf32>
    %cst_620 = arith.constant -1.000000e+00 : f32
    %1433 = vector.broadcast %cst_620 : f32 to vector<4x128xf32>
    %1434 = arith.subf %1433, %1218 : vector<4x128xf32>
    %cst_621 = arith.constant 1.250000e+00 : f32
    %1435 = vector.broadcast %cst_621 : f32 to vector<4x128xf32>
    %1436 = arith.mulf %1434, %1435 : vector<4x128xf32>
    %1437 = arith.mulf %1436, %1339 : vector<4x128xf32>
    %1438 = arith.addf %1432, %1437 : vector<4x128xf32>
    %cst_622 = arith.constant -1.800000e+00 : f32
    %1439 = vector.broadcast %cst_622 : f32 to vector<4x128xf32>
    %1440 = arith.subf %1218, %1439 : vector<4x128xf32>
    %cst_623 = arith.constant 1.250000e+00 : f32
    %1441 = vector.broadcast %cst_623 : f32 to vector<4x128xf32>
    %1442 = arith.mulf %1440, %1441 : vector<4x128xf32>
    %1443 = arith.mulf %1442, %1339 : vector<4x128xf32>
    %cst_624 = arith.constant -6.000000e-01 : f32
    %1444 = vector.broadcast %cst_624 : f32 to vector<4x128xf32>
    %1445 = arith.subf %1444, %1218 : vector<4x128xf32>
    %cst_625 = arith.constant 1.250000e+00 : f32
    %1446 = vector.broadcast %cst_625 : f32 to vector<4x128xf32>
    %1447 = arith.mulf %1445, %1446 : vector<4x128xf32>
    %1448 = arith.mulf %1447, %1350 : vector<4x128xf32>
    %1449 = arith.addf %1443, %1448 : vector<4x128xf32>
    %cst_626 = arith.constant -1.400000e+00 : f32
    %1450 = vector.broadcast %cst_626 : f32 to vector<4x128xf32>
    %1451 = arith.subf %1218, %1450 : vector<4x128xf32>
    %cst_627 = arith.constant 1.250000e+00 : f32
    %1452 = vector.broadcast %cst_627 : f32 to vector<4x128xf32>
    %1453 = arith.mulf %1451, %1452 : vector<4x128xf32>
    %1454 = arith.mulf %1453, %1350 : vector<4x128xf32>
    %cst_628 = arith.constant -2.000000e-01 : f32
    %1455 = vector.broadcast %cst_628 : f32 to vector<4x128xf32>
    %1456 = arith.subf %1455, %1218 : vector<4x128xf32>
    %cst_629 = arith.constant 1.250000e+00 : f32
    %1457 = vector.broadcast %cst_629 : f32 to vector<4x128xf32>
    %1458 = arith.mulf %1456, %1457 : vector<4x128xf32>
    %1459 = arith.mulf %1458, %1361 : vector<4x128xf32>
    %1460 = arith.addf %1454, %1459 : vector<4x128xf32>
    %cst_630 = arith.constant -1.000000e+00 : f32
    %1461 = vector.broadcast %cst_630 : f32 to vector<4x128xf32>
    %1462 = arith.subf %1218, %1461 : vector<4x128xf32>
    %cst_631 = arith.constant 1.250000e+00 : f32
    %1463 = vector.broadcast %cst_631 : f32 to vector<4x128xf32>
    %1464 = arith.mulf %1462, %1463 : vector<4x128xf32>
    %1465 = arith.mulf %1464, %1361 : vector<4x128xf32>
    %cst_632 = arith.constant 2.000000e-01 : f32
    %1466 = vector.broadcast %cst_632 : f32 to vector<4x128xf32>
    %1467 = arith.subf %1466, %1218 : vector<4x128xf32>
    %cst_633 = arith.constant 1.250000e+00 : f32
    %1468 = vector.broadcast %cst_633 : f32 to vector<4x128xf32>
    %1469 = arith.mulf %1467, %1468 : vector<4x128xf32>
    %1470 = arith.mulf %1469, %1372 : vector<4x128xf32>
    %1471 = arith.addf %1465, %1470 : vector<4x128xf32>
    %cst_634 = arith.constant -6.000000e-01 : f32
    %1472 = vector.broadcast %cst_634 : f32 to vector<4x128xf32>
    %1473 = arith.subf %1218, %1472 : vector<4x128xf32>
    %cst_635 = arith.constant 1.250000e+00 : f32
    %1474 = vector.broadcast %cst_635 : f32 to vector<4x128xf32>
    %1475 = arith.mulf %1473, %1474 : vector<4x128xf32>
    %1476 = arith.mulf %1475, %1372 : vector<4x128xf32>
    %cst_636 = arith.constant 6.000000e-01 : f32
    %1477 = vector.broadcast %cst_636 : f32 to vector<4x128xf32>
    %1478 = arith.subf %1477, %1218 : vector<4x128xf32>
    %cst_637 = arith.constant 1.250000e+00 : f32
    %1479 = vector.broadcast %cst_637 : f32 to vector<4x128xf32>
    %1480 = arith.mulf %1478, %1479 : vector<4x128xf32>
    %1481 = arith.mulf %1480, %1383 : vector<4x128xf32>
    %1482 = arith.addf %1476, %1481 : vector<4x128xf32>
    %cst_638 = arith.constant -2.000000e-01 : f32
    %1483 = vector.broadcast %cst_638 : f32 to vector<4x128xf32>
    %1484 = arith.subf %1218, %1483 : vector<4x128xf32>
    %cst_639 = arith.constant 1.250000e+00 : f32
    %1485 = vector.broadcast %cst_639 : f32 to vector<4x128xf32>
    %1486 = arith.mulf %1484, %1485 : vector<4x128xf32>
    %1487 = arith.mulf %1486, %1383 : vector<4x128xf32>
    %cst_640 = arith.constant 1.000000e+00 : f32
    %1488 = vector.broadcast %cst_640 : f32 to vector<4x128xf32>
    %1489 = arith.subf %1488, %1218 : vector<4x128xf32>
    %cst_641 = arith.constant 1.250000e+00 : f32
    %1490 = vector.broadcast %cst_641 : f32 to vector<4x128xf32>
    %1491 = arith.mulf %1489, %1490 : vector<4x128xf32>
    %1492 = arith.mulf %1491, %1394 : vector<4x128xf32>
    %1493 = arith.addf %1487, %1492 : vector<4x128xf32>
    %cst_642 = arith.constant 2.000000e-01 : f32
    %1494 = vector.broadcast %cst_642 : f32 to vector<4x128xf32>
    %1495 = arith.subf %1218, %1494 : vector<4x128xf32>
    %cst_643 = arith.constant 1.250000e+00 : f32
    %1496 = vector.broadcast %cst_643 : f32 to vector<4x128xf32>
    %1497 = arith.mulf %1495, %1496 : vector<4x128xf32>
    %1498 = arith.mulf %1497, %1394 : vector<4x128xf32>
    %cst_644 = arith.constant 1.400000e+00 : f32
    %1499 = vector.broadcast %cst_644 : f32 to vector<4x128xf32>
    %1500 = arith.subf %1499, %1218 : vector<4x128xf32>
    %cst_645 = arith.constant 1.250000e+00 : f32
    %1501 = vector.broadcast %cst_645 : f32 to vector<4x128xf32>
    %1502 = arith.mulf %1500, %1501 : vector<4x128xf32>
    %1503 = arith.mulf %1502, %1405 : vector<4x128xf32>
    %1504 = arith.addf %1498, %1503 : vector<4x128xf32>
    %cst_646 = arith.constant 6.000000e-01 : f32
    %1505 = vector.broadcast %cst_646 : f32 to vector<4x128xf32>
    %1506 = arith.subf %1218, %1505 : vector<4x128xf32>
    %cst_647 = arith.constant 1.250000e+00 : f32
    %1507 = vector.broadcast %cst_647 : f32 to vector<4x128xf32>
    %1508 = arith.mulf %1506, %1507 : vector<4x128xf32>
    %1509 = arith.mulf %1508, %1405 : vector<4x128xf32>
    %cst_648 = arith.constant 1.800000e+00 : f32
    %1510 = vector.broadcast %cst_648 : f32 to vector<4x128xf32>
    %1511 = arith.subf %1510, %1218 : vector<4x128xf32>
    %cst_649 = arith.constant 1.250000e+00 : f32
    %1512 = vector.broadcast %cst_649 : f32 to vector<4x128xf32>
    %1513 = arith.mulf %1511, %1512 : vector<4x128xf32>
    %1514 = arith.mulf %1513, %1416 : vector<4x128xf32>
    %1515 = arith.addf %1509, %1514 : vector<4x128xf32>
    %cst_650 = arith.constant 1.000000e+00 : f32
    %1516 = vector.broadcast %cst_650 : f32 to vector<4x128xf32>
    %1517 = arith.subf %1218, %1516 : vector<4x128xf32>
    %cst_651 = arith.constant 1.250000e+00 : f32
    %1518 = vector.broadcast %cst_651 : f32 to vector<4x128xf32>
    %1519 = arith.mulf %1517, %1518 : vector<4x128xf32>
    %1520 = arith.mulf %1519, %1416 : vector<4x128xf32>
    %cst_652 = arith.constant 2.200000e+00 : f32
    %1521 = vector.broadcast %cst_652 : f32 to vector<4x128xf32>
    %1522 = arith.subf %1521, %1218 : vector<4x128xf32>
    %cst_653 = arith.constant 1.250000e+00 : f32
    %1523 = vector.broadcast %cst_653 : f32 to vector<4x128xf32>
    %1524 = arith.mulf %1522, %1523 : vector<4x128xf32>
    %1525 = arith.mulf %1524, %1427 : vector<4x128xf32>
    %1526 = arith.addf %1520, %1525 : vector<4x128xf32>
    %cst_654 = arith.constant -2.200000e+00 : f32
    %1527 = vector.broadcast %cst_654 : f32 to vector<4x128xf32>
    %1528 = arith.subf %1218, %1527 : vector<4x128xf32>
    %cst_655 = arith.constant 0.833333313 : f32
    %1529 = vector.broadcast %cst_655 : f32 to vector<4x128xf32>
    %1530 = arith.mulf %1528, %1529 : vector<4x128xf32>
    %1531 = arith.mulf %1530, %1438 : vector<4x128xf32>
    %cst_656 = arith.constant -6.000000e-01 : f32
    %1532 = vector.broadcast %cst_656 : f32 to vector<4x128xf32>
    %1533 = arith.subf %1532, %1218 : vector<4x128xf32>
    %cst_657 = arith.constant 0.833333313 : f32
    %1534 = vector.broadcast %cst_657 : f32 to vector<4x128xf32>
    %1535 = arith.mulf %1533, %1534 : vector<4x128xf32>
    %1536 = arith.mulf %1535, %1449 : vector<4x128xf32>
    %1537 = arith.addf %1531, %1536 : vector<4x128xf32>
    %cst_658 = arith.constant -1.800000e+00 : f32
    %1538 = vector.broadcast %cst_658 : f32 to vector<4x128xf32>
    %1539 = arith.subf %1218, %1538 : vector<4x128xf32>
    %cst_659 = arith.constant 0.833333313 : f32
    %1540 = vector.broadcast %cst_659 : f32 to vector<4x128xf32>
    %1541 = arith.mulf %1539, %1540 : vector<4x128xf32>
    %1542 = arith.mulf %1541, %1449 : vector<4x128xf32>
    %cst_660 = arith.constant -2.000000e-01 : f32
    %1543 = vector.broadcast %cst_660 : f32 to vector<4x128xf32>
    %1544 = arith.subf %1543, %1218 : vector<4x128xf32>
    %cst_661 = arith.constant 0.833333313 : f32
    %1545 = vector.broadcast %cst_661 : f32 to vector<4x128xf32>
    %1546 = arith.mulf %1544, %1545 : vector<4x128xf32>
    %1547 = arith.mulf %1546, %1460 : vector<4x128xf32>
    %1548 = arith.addf %1542, %1547 : vector<4x128xf32>
    %cst_662 = arith.constant -1.400000e+00 : f32
    %1549 = vector.broadcast %cst_662 : f32 to vector<4x128xf32>
    %1550 = arith.subf %1218, %1549 : vector<4x128xf32>
    %cst_663 = arith.constant 0.833333313 : f32
    %1551 = vector.broadcast %cst_663 : f32 to vector<4x128xf32>
    %1552 = arith.mulf %1550, %1551 : vector<4x128xf32>
    %1553 = arith.mulf %1552, %1460 : vector<4x128xf32>
    %cst_664 = arith.constant 2.000000e-01 : f32
    %1554 = vector.broadcast %cst_664 : f32 to vector<4x128xf32>
    %1555 = arith.subf %1554, %1218 : vector<4x128xf32>
    %cst_665 = arith.constant 0.833333313 : f32
    %1556 = vector.broadcast %cst_665 : f32 to vector<4x128xf32>
    %1557 = arith.mulf %1555, %1556 : vector<4x128xf32>
    %1558 = arith.mulf %1557, %1471 : vector<4x128xf32>
    %1559 = arith.addf %1553, %1558 : vector<4x128xf32>
    %cst_666 = arith.constant -1.000000e+00 : f32
    %1560 = vector.broadcast %cst_666 : f32 to vector<4x128xf32>
    %1561 = arith.subf %1218, %1560 : vector<4x128xf32>
    %cst_667 = arith.constant 0.833333313 : f32
    %1562 = vector.broadcast %cst_667 : f32 to vector<4x128xf32>
    %1563 = arith.mulf %1561, %1562 : vector<4x128xf32>
    %1564 = arith.mulf %1563, %1471 : vector<4x128xf32>
    %cst_668 = arith.constant 6.000000e-01 : f32
    %1565 = vector.broadcast %cst_668 : f32 to vector<4x128xf32>
    %1566 = arith.subf %1565, %1218 : vector<4x128xf32>
    %cst_669 = arith.constant 0.833333313 : f32
    %1567 = vector.broadcast %cst_669 : f32 to vector<4x128xf32>
    %1568 = arith.mulf %1566, %1567 : vector<4x128xf32>
    %1569 = arith.mulf %1568, %1482 : vector<4x128xf32>
    %1570 = arith.addf %1564, %1569 : vector<4x128xf32>
    %cst_670 = arith.constant -6.000000e-01 : f32
    %1571 = vector.broadcast %cst_670 : f32 to vector<4x128xf32>
    %1572 = arith.subf %1218, %1571 : vector<4x128xf32>
    %cst_671 = arith.constant 0.833333313 : f32
    %1573 = vector.broadcast %cst_671 : f32 to vector<4x128xf32>
    %1574 = arith.mulf %1572, %1573 : vector<4x128xf32>
    %1575 = arith.mulf %1574, %1482 : vector<4x128xf32>
    %cst_672 = arith.constant 1.000000e+00 : f32
    %1576 = vector.broadcast %cst_672 : f32 to vector<4x128xf32>
    %1577 = arith.subf %1576, %1218 : vector<4x128xf32>
    %cst_673 = arith.constant 0.833333313 : f32
    %1578 = vector.broadcast %cst_673 : f32 to vector<4x128xf32>
    %1579 = arith.mulf %1577, %1578 : vector<4x128xf32>
    %1580 = arith.mulf %1579, %1493 : vector<4x128xf32>
    %1581 = arith.addf %1575, %1580 : vector<4x128xf32>
    %cst_674 = arith.constant -2.000000e-01 : f32
    %1582 = vector.broadcast %cst_674 : f32 to vector<4x128xf32>
    %1583 = arith.subf %1218, %1582 : vector<4x128xf32>
    %cst_675 = arith.constant 0.833333313 : f32
    %1584 = vector.broadcast %cst_675 : f32 to vector<4x128xf32>
    %1585 = arith.mulf %1583, %1584 : vector<4x128xf32>
    %1586 = arith.mulf %1585, %1493 : vector<4x128xf32>
    %cst_676 = arith.constant 1.400000e+00 : f32
    %1587 = vector.broadcast %cst_676 : f32 to vector<4x128xf32>
    %1588 = arith.subf %1587, %1218 : vector<4x128xf32>
    %cst_677 = arith.constant 0.833333313 : f32
    %1589 = vector.broadcast %cst_677 : f32 to vector<4x128xf32>
    %1590 = arith.mulf %1588, %1589 : vector<4x128xf32>
    %1591 = arith.mulf %1590, %1504 : vector<4x128xf32>
    %1592 = arith.addf %1586, %1591 : vector<4x128xf32>
    %cst_678 = arith.constant 2.000000e-01 : f32
    %1593 = vector.broadcast %cst_678 : f32 to vector<4x128xf32>
    %1594 = arith.subf %1218, %1593 : vector<4x128xf32>
    %cst_679 = arith.constant 0.833333313 : f32
    %1595 = vector.broadcast %cst_679 : f32 to vector<4x128xf32>
    %1596 = arith.mulf %1594, %1595 : vector<4x128xf32>
    %1597 = arith.mulf %1596, %1504 : vector<4x128xf32>
    %cst_680 = arith.constant 1.800000e+00 : f32
    %1598 = vector.broadcast %cst_680 : f32 to vector<4x128xf32>
    %1599 = arith.subf %1598, %1218 : vector<4x128xf32>
    %cst_681 = arith.constant 0.833333313 : f32
    %1600 = vector.broadcast %cst_681 : f32 to vector<4x128xf32>
    %1601 = arith.mulf %1599, %1600 : vector<4x128xf32>
    %1602 = arith.mulf %1601, %1515 : vector<4x128xf32>
    %1603 = arith.addf %1597, %1602 : vector<4x128xf32>
    %cst_682 = arith.constant 6.000000e-01 : f32
    %1604 = vector.broadcast %cst_682 : f32 to vector<4x128xf32>
    %1605 = arith.subf %1218, %1604 : vector<4x128xf32>
    %cst_683 = arith.constant 0.833333313 : f32
    %1606 = vector.broadcast %cst_683 : f32 to vector<4x128xf32>
    %1607 = arith.mulf %1605, %1606 : vector<4x128xf32>
    %1608 = arith.mulf %1607, %1515 : vector<4x128xf32>
    %cst_684 = arith.constant 2.200000e+00 : f32
    %1609 = vector.broadcast %cst_684 : f32 to vector<4x128xf32>
    %1610 = arith.subf %1609, %1218 : vector<4x128xf32>
    %cst_685 = arith.constant 0.833333313 : f32
    %1611 = vector.broadcast %cst_685 : f32 to vector<4x128xf32>
    %1612 = arith.mulf %1610, %1611 : vector<4x128xf32>
    %1613 = arith.mulf %1612, %1526 : vector<4x128xf32>
    %1614 = arith.addf %1608, %1613 : vector<4x128xf32>
    %c8_686 = arith.constant 8 : index
    %c0_687 = arith.constant 0 : index
    %1615 = vector.load %arg13[%c8_686, %c0_687] : memref<72x128xf32, #tpu.memory_space<vmem>>, vector<4x128xf32>
    tpu.vector_store %arg13[%c8_686, %c0_687], %1537 {strides = array<i32>} : memref<72x128xf32, #tpu.memory_space<vmem>>, vector<4x128xf32>,
    %c16_688 = arith.constant 16 : index
    %c0_689 = arith.constant 0 : index
    %1616 = vector.load %arg13[%c16_688, %c0_689] : memref<72x128xf32, #tpu.memory_space<vmem>>, vector<4x128xf32>
    tpu.vector_store %arg13[%c16_688, %c0_689], %1548 {strides = array<i32>} : memref<72x128xf32, #tpu.memory_space<vmem>>, vector<4x128xf32>,
    %c24_690 = arith.constant 24 : index
    %c0_691 = arith.constant 0 : index
    %1617 = vector.load %arg13[%c24_690, %c0_691] : memref<72x128xf32, #tpu.memory_space<vmem>>, vector<4x128xf32>
    tpu.vector_store %arg13[%c24_690, %c0_691], %1559 {strides = array<i32>} : memref<72x128xf32, #tpu.memory_space<vmem>>, vector<4x128xf32>,
    %c32_692 = arith.constant 32 : index
    %c0_693 = arith.constant 0 : index
    %1618 = vector.load %arg13[%c32_692, %c0_693] : memref<72x128xf32, #tpu.memory_space<vmem>>, vector<4x128xf32>
    tpu.vector_store %arg13[%c32_692, %c0_693], %1570 {strides = array<i32>} : memref<72x128xf32, #tpu.memory_space<vmem>>, vector<4x128xf32>,
    %c40_694 = arith.constant 40 : index
    %c0_695 = arith.constant 0 : index
    %1619 = vector.load %arg13[%c40_694, %c0_695] : memref<72x128xf32, #tpu.memory_space<vmem>>, vector<4x128xf32>
    tpu.vector_store %arg13[%c40_694, %c0_695], %1581 {strides = array<i32>} : memref<72x128xf32, #tpu.memory_space<vmem>>, vector<4x128xf32>,
    %c48_696 = arith.constant 48 : index
    %c0_697 = arith.constant 0 : index
    %1620 = vector.load %arg13[%c48_696, %c0_697] : memref<72x128xf32, #tpu.memory_space<vmem>>, vector<4x128xf32>
    tpu.vector_store %arg13[%c48_696, %c0_697], %1592 {strides = array<i32>} : memref<72x128xf32, #tpu.memory_space<vmem>>, vector<4x128xf32>,
    %c56_698 = arith.constant 56 : index
    %c0_699 = arith.constant 0 : index
    %1621 = vector.load %arg13[%c56_698, %c0_699] : memref<72x128xf32, #tpu.memory_space<vmem>>, vector<4x128xf32>
    tpu.vector_store %arg13[%c56_698, %c0_699], %1603 {strides = array<i32>} : memref<72x128xf32, #tpu.memory_space<vmem>>, vector<4x128xf32>,
    %c64_700 = arith.constant 64 : index
    %c0_701 = arith.constant 0 : index
    %1622 = vector.load %arg13[%c64_700, %c0_701] : memref<72x128xf32, #tpu.memory_space<vmem>>, vector<4x128xf32>
    tpu.vector_store %arg13[%c64_700, %c0_701], %1614 {strides = array<i32>} : memref<72x128xf32, #tpu.memory_space<vmem>>, vector<4x128xf32>,
    %c0_702 = arith.constant 0 : index
    %c0_703 = arith.constant 0 : index
    %1623 = vector.load %arg7[%c0_702, %c0_703] : memref<4x72xf32, #tpu.memory_space<vmem>>, vector<4x72xf32>
    %c0_704 = arith.constant 0 : index
    %c0_705 = arith.constant 0 : index
    %1624 = vector.load %arg13[%c0_704, %c0_705] : memref<72x128xf32, #tpu.memory_space<vmem>>, vector<72x128xf32>
    %cst_706 = arith.constant dense<0.000000e+00> : vector<4x128xf32>
    %1625 = tpu.matmul %1623, %1624, %cst_706 {dimension_numbers = #tpu.dot_dimension_numbers<[1], [0], [0], [1], [0, 0, 1, 1], [], []>} : vector<4x72xf32>, vector<72x128xf32>, vector<4x128xf32> -> vector<4x128xf32>
    %c0_707 = arith.constant 0 : index
    %c0_708 = arith.constant 0 : index
    %1626 = vector.load %arg3[%c0_707, %c0_708] : memref<4x128xf32, #tpu.memory_space<vmem>>, vector<4x128xf32>
    %1627 = arith.addf %1626, %1625 : vector<4x128xf32>
    %c0_709 = arith.constant 0 : index
    %c0_710 = arith.constant 0 : index
    %1628 = vector.load %arg9[%c0_709, %c0_710] : memref<4x128xf32, #tpu.memory_space<vmem>>, vector<4x128xf32>
    tpu.vector_store %arg9[%c0_709, %c0_710], %1627 {strides = array<i32>} : memref<4x128xf32, #tpu.memory_space<vmem>>, vector<4x128xf32>,
    return
  }
  func.func @transform_0(%arg0: i32) -> (i32, i32) {
    %c0_i32 = arith.constant 0 : i32
    %c0_i32_0 = arith.constant 0 : i32
    return %c0_i32, %arg0 : i32, i32
  }
  func.func @transform_1(%arg0: i32) -> (i32, i32) {
    %c0_i32 = arith.constant 0 : i32
    %c0_i32_0 = arith.constant 0 : i32
    return %c0_i32, %arg0 : i32, i32
  }
  func.func @transform_2(%arg0: i32) -> (i32, i32) {
    %c0_i32 = arith.constant 0 : i32
    %c0_i32_0 = arith.constant 0 : i32
    return %c0_i32, %arg0 : i32, i32
  }
  func.func @transform_3(%arg0: i32) -> (i32, i32) {
    %c0_i32 = arith.constant 0 : i32
    %c0_i32_0 = arith.constant 0 : i32
    %c0_i32_1 = arith.constant 0 : i32
    return %c0_i32, %c0_i32_0 : i32, i32
  }
  func.func @transform_4(%arg0: i32) -> (i32, i32) {
    %c0_i32 = arith.constant 0 : i32
    %c0_i32_0 = arith.constant 0 : i32
    %c0_i32_1 = arith.constant 0 : i32
    return %c0_i32, %c0_i32_0 : i32, i32
  }
  func.func @transform_5(%arg0: i32) -> (i32, i32) {
    %c0_i32 = arith.constant 0 : i32
    %c0_i32_0 = arith.constant 0 : i32
    %c0_i32_1 = arith.constant 0 : i32
    return %c0_i32, %c0_i32_0 : i32, i32
  }
  func.func @transform_6(%arg0: i32) -> (i32, i32) {
    %c0_i32 = arith.constant 0 : i32
    %c0_i32_0 = arith.constant 0 : i32
    %c0_i32_1 = arith.constant 0 : i32
    return %c0_i32, %c0_i32_0 : i32, i32
  }
  func.func @transform_7(%arg0: i32) -> (i32, i32) {
    %c0_i32 = arith.constant 0 : i32
    %c0_i32_0 = arith.constant 0 : i32
    return %c0_i32, %arg0 : i32, i32
  }
  func.func @transform_8(%arg0: i32) -> (i32, i32) {
    %c0_i32 = arith.constant 0 : i32
    %c0_i32_0 = arith.constant 0 : i32
    return %c0_i32, %arg0 : i32, i32
  }
}

</mosaic_0001>

<llo_original>
// kernel: tpu_custom_call.1
$region0: #{tpu_custom_call.1}
  #allocation0 [shape = 'u32[]', space=smem, size = 0x4, offset = 0x4, fixed_abs, tag = 'smem constant byte address 0x4 - core index']
  #allocation1 [shape = 'u32[72,128]{1,0:T(1,128)}', space=vmem, size = 0x9000, scoped, tag = 'internal scratch']
  #allocation2 [shape = 'f32[144,128]{1,0:T(8,128)}', space=vmem, size = 0x12000, scoped, tag = 'scratch operand']
  #allocation3 [shape = 'f32[72,128]{1,0:T(8,128)}', space=vmem, size = 0x9000, scoped, tag = 'scratch operand']
  #allocation4 [shape = 'f32[72,128]{1,0:T(8,128)}', space=vmem, size = 0x9000, scoped, tag = 'scratch operand']
  #allocation5 [shape = 'f32[72,128]{1,0:T(8,128)}', space=vmem, size = 0x9000, scoped, tag = 'scratch operand']
  %s0 = inlined_call_operand.hbm [shape: f32[16,128], index: 0, kind: input, shape index: {}]
  %s1 = inlined_call_operand.hbm [shape: f32[8,128], index: 1, kind: input, shape index: {}]
  %s2 = inlined_call_operand.hbm [shape: f32[4,128], index: 2, kind: input, shape index: {}]
  %s3 = inlined_call_operand.hbm [shape: f32[8,144], index: 3, kind: input, shape index: {}]
  %s4 = inlined_call_operand.hbm [shape: f32[8,72], index: 4, kind: input, shape index: {}]
  %s5 = inlined_call_operand.vmem [shape: f32[4,72], index: 5, kind: input, shape index: {}]
  %s6 = inlined_call_operand.hbm [shape: f32[4,72], index: 6, kind: input, shape index: {}]
  %s7 = inlined_call_operand.hbm [shape: f32[8,128], index: 7, kind: output, shape index: {0}]
  %s8 = inlined_call_operand.hbm [shape: f32[4,128], index: 8, kind: output, shape index: {1}]
  %9 = xla_tuple %s7, %s8
  %s10 = sld [smem:[#allocation0]]
  $region70: #{tpu_custom_call.1} parent=0
    _
  %s12 = ssub.s32 1, %s10
  %s13 = scalar_select 0, %s12, %s10
  $region1: #{tpu_custom_call.1} parent=0
    #allocation6 [shape = 'u8[8192]{0}', space=vmem, size = 0x2000, scoped, tag = 'input window, operand 0, single buffered']
    #allocation7 [shape = 's32[1]{0}', space=sflag, size = 0x4, scoped, tag = 'scoped memory for tpu_custom_call.1']
    #allocation8 [shape = 's32[1]{0}', space=sflag, size = 0x4, scoped, tag = 'scoped memory for tpu_custom_call.1']
    #allocation9 [shape = 'u8[4096]{0}', space=vmem, size = 0x1000, scoped, tag = 'input window, operand 1, single buffered']
    #allocation10 [shape = 's32[1]{0}', space=sflag, size = 0x4, scoped, tag = 'scoped memory for tpu_custom_call.1']
    #allocation11 [shape = 'u8[2048]{0}', space=vmem, size = 0x800, scoped, tag = 'input window, operand 2, single buffered']
    #allocation12 [shape = 'u8[8192]{0}', space=vmem, size = 0x2000, scoped, tag = 'input window, operand 3, single buffered']
    #allocation13 [shape = 's32[1]{0}', space=sflag, size = 0x4, scoped, tag = 'scoped memory for tpu_custom_call.1']
    #allocation14 [shape = 'u8[4096]{0}', space=vmem, size = 0x1000, scoped, tag = 'input window, operand 4, single buffered']
    #allocation15 [shape = 'u8[2048]{0}', space=vmem, size = 0x800, scoped, tag = 'input window, operand 6, single buffered']
    #allocation16 [shape = 's32[1]{0}', space=sflag, size = 0x4, scoped, tag = 'scoped memory for tpu_custom_call.1']
    #allocation17 [shape = 'u8[4096]{0}', space=vmem, size = 0x1000, scoped, tag = 'output window, operand 0, single buffered']
    #allocation18 [shape = 'u8[2048]{0}', space=vmem, size = 0x800, scoped, tag = 'output window, operand 1, single buffered']
    #allocation19 [shape = 's32[1]{0}', space=sflag, size = 0x4, scoped, tag = 'scoped memory for tpu_custom_call.1']
    %14 = vsyncpa [#allocation7], 0
    %15 = vsyncpa [#allocation10], 0
    %16 = vsyncpa [#allocation13], 0
    %17 = vsyncpa [#allocation16], 0
    %18 = vsyncpa [#allocation8], 0
    %19 = vsyncpa [#allocation19], 0
    // Predicated region
    $region2: #{tpu_custom_call.1} parent=1 // pred_check
      _
    $region3: #{tpu_custom_call.1} parent=1 // pred_check_branch
      %21 = sbr.rel (0) target = $region5
    $region4: #{tpu_custom_call.1} parent=1 // pred_region
      %23 = vsyncadd [#allocation7], 0
      %s24 = sshll.u32 %s0, 4
      %s25 = int_to_ptr.hbm [resolvable:$true] %s24
      %s26 = sshll.u32 [#allocation6], 4
      %s27 = int_to_ptr.vmem [resolvable:$true] %s26
      %32 = dma.hbm_to_vmem [thread:$0]  %s25, 256, %s27, [#allocation7], 128, 128, 8
    $region5: #{tpu_custom_call.1} parent=1 // pred_fallthru
      _
    // Predicated region
    $region6: #{tpu_custom_call.1} parent=1 // pred_check
      _
    $region7: #{tpu_custom_call.1} parent=1 // pred_check_branch
      %34 = sbr.rel (0) target = $region9
    $region8: #{tpu_custom_call.1} parent=1 // pred_region
      %36 = vsyncadd [#allocation10], 0
      %s38 = sshll.u32 %s1, 4
      %s39 = int_to_ptr.hbm [resolvable:$true] %s38
      %s40 = sshll.u32 [#allocation9], 4
      %s41 = int_to_ptr.vmem [resolvable:$true] %s40
      %43 = dma.hbm_to_vmem [thread:$0]  %s39, 128, %s41, [#allocation10]
    $region9: #{tpu_custom_call.1} parent=1 // pred_fallthru
      _
    // Predicated region
    $region10: #{tpu_custom_call.1} parent=1 // pred_check
      _
    $region11: #{tpu_custom_call.1} parent=1 // pred_check_branch
      %45 = sbr.rel (0) target = $region13
    $region12: #{tpu_custom_call.1} parent=1 // pred_region
      %47 = vsyncadd [#allocation10], 0
      %s49 = sshll.u32 %s2, 4
      %s50 = int_to_ptr.hbm [resolvable:$true] %s49
      %s51 = sshll.u32 [#allocation11], 4
      %s52 = int_to_ptr.vmem [resolvable:$true] %s51
      %54 = dma.hbm_to_vmem [thread:$0]  %s50, 64, %s52, [#allocation10]
    $region13: #{tpu_custom_call.1} parent=1 // pred_fallthru
      _
    // Predicated region
    $region14: #{tpu_custom_call.1} parent=1 // pred_check
      _
    $region15: #{tpu_custom_call.1} parent=1 // pred_check_branch
      %56 = sbr.rel (0) target = $region17
    $region16: #{tpu_custom_call.1} parent=1 // pred_region
      %58 = vsyncadd [#allocation13], 0
      %s60 = sshll.u32 %s3, 4
      %s61 = int_to_ptr.hbm [resolvable:$true] %s60
      %s62 = sshll.u32 [#allocation12], 4
      %s63 = int_to_ptr.vmem [resolvable:$true] %s62
      %65 = dma.hbm_to_vmem [thread:$0]  %s61, 256, %s63, [#allocation13]
    $region17: #{tpu_custom_call.1} parent=1 // pred_fallthru
      _
    // Predicated region
    $region18: #{tpu_custom_call.1} parent=1 // pred_check
      _
    $region19: #{tpu_custom_call.1} parent=1 // pred_check_branch
      %67 = sbr.rel (0) target = $region21
    $region20: #{tpu_custom_call.1} parent=1 // pred_region
      %69 = vsyncadd [#allocation13], 0
      %s71 = sshll.u32 %s4, 4
      %s72 = int_to_ptr.hbm [resolvable:$true] %s71
      %s73 = sshll.u32 [#allocation14], 4
      %s74 = int_to_ptr.vmem [resolvable:$true] %s73
      %76 = dma.hbm_to_vmem [thread:$0]  %s72, 128, %s74, [#allocation13]
    $region21: #{tpu_custom_call.1} parent=1 // pred_fallthru
      _
    // Predicated region
    $region22: #{tpu_custom_call.1} parent=1 // pred_check
      _
    $region23: #{tpu_custom_call.1} parent=1 // pred_check_branch
      %78 = sbr.rel (0) target = $region25
    $region24: #{tpu_custom_call.1} parent=1 // pred_region
      _
    $region25: #{tpu_custom_call.1} parent=1 // pred_fallthru
      _
    // Predicated region
    $region26: #{tpu_custom_call.1} parent=1 // pred_check
      _
    $region27: #{tpu_custom_call.1} parent=1 // pred_check_branch
      %80 = sbr.rel (0) target = $region29
    $region28: #{tpu_custom_call.1} parent=1 // pred_region
      %82 = vsyncadd [#allocation16], 0
      %s84 = sshll.u32 %s6, 4
      %s85 = int_to_ptr.hbm [resolvable:$true] %s84
      %s86 = sshll.u32 [#allocation15], 4
      %s87 = int_to_ptr.vmem [resolvable:$true] %s86
      %89 = dma.hbm_to_vmem [thread:$0]  %s85, 64, %s87, [#allocation16]
    $region29: #{tpu_custom_call.1} parent=1 // pred_fallthru
      _
    // Predicated region
    $region30: #{tpu_custom_call.1} parent=1 // pred_check
      _
    $region31: #{tpu_custom_call.1} parent=1 // pred_check_branch
      %91 = sbr.rel (0) target = $region33
    $region32: #{tpu_custom_call.1} parent=1 // pred_region
      %93 = dma.done [#allocation7], 256
    $region33: #{tpu_custom_call.1} parent=1 // pred_fallthru
      _
    // Predicated region
    $region34: #{tpu_custom_call.1} parent=1 // pred_check
      _
    $region35: #{tpu_custom_call.1} parent=1 // pred_check_branch
      %95 = sbr.rel (0) target = $region37
    $region36: #{tpu_custom_call.1} parent=1 // pred_region
      %97 = dma.done [#allocation10], 128
    $region37: #{tpu_custom_call.1} parent=1 // pred_fallthru
      _
    // Predicated region
    $region38: #{tpu_custom_call.1} parent=1 // pred_check
      _
    $region39: #{tpu_custom_call.1} parent=1 // pred_check_branch
      %99 = sbr.rel (0) target = $region41
    $region40: #{tpu_custom_call.1} parent=1 // pred_region
      %101 = dma.done [#allocation10], 64
    $region41: #{tpu_custom_call.1} parent=1 // pred_fallthru
      _
    // Predicated region
    $region42: #{tpu_custom_call.1} parent=1 // pred_check
      _
    $region43: #{tpu_custom_call.1} parent=1 // pred_check_branch
      %103 = sbr.rel (0) target = $region45
    $region44: #{tpu_custom_call.1} parent=1 // pred_region
      %105 = dma.done [#allocation13], 256
    $region45: #{tpu_custom_call.1} parent=1 // pred_fallthru
      _
    // Predicated region
    $region46: #{tpu_custom_call.1} parent=1 // pred_check
      _
    $region47: #{tpu_custom_call.1} parent=1 // pred_check_branch
      %107 = sbr.rel (0) target = $region49
    $region48: #{tpu_custom_call.1} parent=1 // pred_region
      %109 = dma.done [#allocation13], 128
    $region49: #{tpu_custom_call.1} parent=1 // pred_fallthru
      _
    // Predicated region
    $region50: #{tpu_custom_call.1} parent=1 // pred_check
      _
    $region51: #{tpu_custom_call.1} parent=1 // pred_check_branch
      %111 = sbr.rel (0) target = $region53
    $region52: #{tpu_custom_call.1} parent=1 // pred_region
      %113 = dma.done [#allocation16], 64
    $region53: #{tpu_custom_call.1} parent=1 // pred_fallthru
      _
    %v114 = vld [vmem:[#allocation6] sm:$0xff]
    %v115 = vld [vmem:[#allocation6 + $0x8] sm:$0xff]
    %v116 = vsub.f32 0.0, %v114
    %v117 = vsub.f32 0.0, %v115
    %v118 = vmul.f32 %v116, 1.442695
    %v119 = vpow.pop %v118
    %v120 = vmul.f32 %v117, 1.442695
    %v121 = vpow.pop %v120
    %v122 = vadd.f32 %v119, 1.0
    %v123 = vadd.f32 %v121, 1.0
    %v124 = vrcp.pop %v122
    %v125 = vmul.f32 %v122, %v124
    %v126 = vsub.f32 1.0, %v125
    %v127 = vmul.f32 %v124, %v126
    %v128 = vadd.f32 %v124, %v127
    %vm129 = vweird.f32 %v122
    %vm130 = vweird.f32 %v124
    %vm131 = vmor %vm129, %vm130
    %v132 = vsel %vm131, %v124, %v128
    %v133 = vand.u32 2147483647, %v122
    %vm134 = vcmp.eq.f32.partialorder %v133, 8.507059e+37
    %v135 = vand.u32 %v122, 2147483648
    %v136 = vor.u32 1.1754944e-38, %v135
    %v137 = vsel %vm134, %v136, %v132
    %v138 = vmul.f32 1.0, %v137
    %v139 = vrcp.pop %v123
    %v140 = vmul.f32 %v123, %v139
    %v141 = vsub.f32 1.0, %v140
    %v142 = vmul.f32 %v139, %v141
    %v143 = vadd.f32 %v139, %v142
    %vm144 = vweird.f32 %v123
    %vm145 = vweird.f32 %v139
    %vm146 = vmor %vm144, %vm145
    %v147 = vsel %vm146, %v139, %v143
    %v148 = vand.u32 2147483647, %v123
    %vm149 = vcmp.eq.f32.partialorder %v148, 8.507059e+37
    %v150 = vand.u32 %v123, 2147483648
    %v151 = vor.u32 1.1754944e-38, %v150
    %v152 = vsel %vm149, %v151, %v147
    %v153 = vmul.f32 1.0, %v152
    %v154 = vmul.f32 %v114, %v138
    %v155 = vmul.f32 %v115, %v153
    %156 = vst [vmem:[#allocation2] sm:$0xff] %v154
    %157 = vst [vmem:[#allocation2 + $0x8] sm:$0xff] %v155
    %vm158 = vcmp.ge.f32.partialorder %v114, -2.2
    %vm159 = vcmp.ge.f32.partialorder %v115, -2.2
    %vm160 = vcmp.lt.f32.partialorder %v114, -1.8
    %vm161 = vcmp.lt.f32.partialorder %v115, -1.8
    %vm162 = vmand %vm158, %vm160
    %vm163 = vmand %vm159, %vm161
    %v164 = vsel %vm162, 1.0, 0.0
    %v165 = vsel %vm163, 1.0, 0.0
    %vm166 = vcmp.ge.f32.partialorder %v114, -1.8
    %vm167 = vcmp.ge.f32.partialorder %v115, -1.8
    %vm168 = vcmp.lt.f32.partialorder %v114, -1.4
    %vm169 = vcmp.lt.f32.partialorder %v115, -1.4
    %vm170 = vmand %vm166, %vm168
    %vm171 = vmand %vm167, %vm169
    %v172 = vsel %vm170, 1.0, 0.0
    %v173 = vsel %vm171, 1.0, 0.0
    %vm174 = vcmp.ge.f32.partialorder %v114, -1.4
    %vm175 = vcmp.ge.f32.partialorder %v115, -1.4
    %vm176 = vcmp.lt.f32.partialorder %v114, -1.0
    %vm177 = vcmp.lt.f32.partialorder %v115, -1.0
    %vm178 = vmand %vm174, %vm176
    %vm179 = vmand %vm175, %vm177
    %v180 = vsel %vm178, 1.0, 0.0
    %v181 = vsel %vm179, 1.0, 0.0
    %vm182 = vcmp.ge.f32.partialorder %v114, -1.0
    %vm183 = vcmp.ge.f32.partialorder %v115, -1.0
    %vm184 = vcmp.lt.f32.partialorder %v114, -0.6
    %vm185 = vcmp.lt.f32.partialorder %v115, -0.6
    %vm186 = vmand %vm182, %vm184
    %vm187 = vmand %vm183, %vm185
    %v188 = vsel %vm186, 1.0, 0.0
    %v189 = vsel %vm187, 1.0, 0.0
    %vm190 = vcmp.ge.f32.partialorder %v114, -0.6
    %vm191 = vcmp.ge.f32.partialorder %v115, -0.6
    %vm192 = vcmp.lt.f32.partialorder %v114, -0.2
    %vm193 = vcmp.lt.f32.partialorder %v115, -0.2
    %vm194 = vmand %vm190, %vm192
    %vm195 = vmand %vm191, %vm193
    %v196 = vsel %vm194, 1.0, 0.0
    %v197 = vsel %vm195, 1.0, 0.0
    %vm198 = vcmp.ge.f32.partialorder %v114, -0.2
    %vm199 = vcmp.ge.f32.partialorder %v115, -0.2
    %vm200 = vcmp.lt.f32.partialorder %v114, 0.2
    %vm201 = vcmp.lt.f32.partialorder %v115, 0.2
    %vm202 = vmand %vm198, %vm200
    %vm203 = vmand %vm199, %vm201
    %v204 = vsel %vm202, 1.0, 0.0
    %v205 = vsel %vm203, 1.0, 0.0
    %vm206 = vcmp.ge.f32.partialorder %v114, 0.2
    %vm207 = vcmp.ge.f32.partialorder %v115, 0.2
    %vm208 = vcmp.lt.f32.partialorder %v114, 0.6
    %vm209 = vcmp.lt.f32.partialorder %v115, 0.6
    %vm210 = vmand %vm206, %vm208
    %vm211 = vmand %vm207, %vm209
    %v212 = vsel %vm210, 1.0, 0.0
    %v213 = vsel %vm211, 1.0, 0.0
    %vm214 = vcmp.ge.f32.partialorder %v114, 0.6
    %vm215 = vcmp.ge.f32.partialorder %v115, 0.6
    %vm216 = vcmp.lt.f32.partialorder %v114, 1.0
    %vm217 = vcmp.lt.f32.partialorder %v115, 1.0
    %vm218 = vmand %vm214, %vm216
    %vm219 = vmand %vm215, %vm217
    %v220 = vsel %vm218, 1.0, 0.0
    %v221 = vsel %vm219, 1.0, 0.0
    %vm222 = vcmp.ge.f32.partialorder %v114, 1.0
    %vm223 = vcmp.ge.f32.partialorder %v115, 1.0
    %vm224 = vcmp.lt.f32.partialorder %v114, 1.4
    %vm225 = vcmp.lt.f32.partialorder %v115, 1.4
    %vm226 = vmand %vm222, %vm224
    %vm227 = vmand %vm223, %vm225
    %v228 = vsel %vm226, 1.0, 0.0
    %v229 = vsel %vm227, 1.0, 0.0
    %vm230 = vcmp.ge.f32.partialorder %v114, 1.4
    %vm231 = vcmp.ge.f32.partialorder %v115, 1.4
    %vm232 = vcmp.lt.f32.partialorder %v114, 1.8
    %vm233 = vcmp.lt.f32.partialorder %v115, 1.8
    %vm234 = vmand %vm230, %vm232
    %vm235 = vmand %vm231, %vm233
    %v236 = vsel %vm234, 1.0, 0.0
    %v237 = vsel %vm235, 1.0, 0.0
    %vm238 = vcmp.ge.f32.partialorder %v114, 1.8
    %vm239 = vcmp.ge.f32.partialorder %v115, 1.8
    %vm240 = vcmp.lt.f32.partialorder %v114, 2.2
    %vm241 = vcmp.lt.f32.partialorder %v115, 2.2
    %vm242 = vmand %vm238, %vm240
    %vm243 = vmand %vm239, %vm241
    %v244 = vsel %vm242, 1.0, 0.0
    %v245 = vsel %vm243, 1.0, 0.0
    %v246 = vsub.f32 %v114, -2.2
    %v247 = vsub.f32 %v115, -2.2
    %v248 = vmul.f32 %v246, 2.5
    %v249 = vmul.f32 %v247, 2.5
    %v250 = vmul.f32 %v248, %v164
    %v251 = vmul.f32 %v249, %v165
    %v252 = vsub.f32 -1.4, %v114
    %v253 = vsub.f32 -1.4, %v115
    %v254 = vmul.f32 %v252, 2.5
    %v255 = vmul.f32 %v253, 2.5
    %v256 = vmul.f32 %v254, %v172
    %v257 = vmul.f32 %v255, %v173
    %v258 = vadd.f32 %v250, %v256
    %v259 = vadd.f32 %v251, %v257
    %v260 = vsub.f32 %v114, -1.8
    %v261 = vsub.f32 %v115, -1.8
    %v262 = vmul.f32 %v260, 2.5
    %v263 = vmul.f32 %v261, 2.5
    %v264 = vmul.f32 %v262, %v172
    %v265 = vmul.f32 %v263, %v173
    %v266 = vsub.f32 -1.0, %v114
    %v267 = vsub.f32 -1.0, %v115
    %v268 = vmul.f32 %v266, 2.5
    %v269 = vmul.f32 %v267, 2.5
    %v270 = vmul.f32 %v268, %v180
    %v271 = vmul.f32 %v269, %v181
    %v272 = vadd.f32 %v264, %v270
    %v273 = vadd.f32 %v265, %v271
    %v274 = vsub.f32 %v114, -1.4
    %v275 = vsub.f32 %v115, -1.4
    %v276 = vmul.f32 %v274, 2.5
    %v277 = vmul.f32 %v275, 2.5
    %v278 = vmul.f32 %v276, %v180
    %v279 = vmul.f32 %v277, %v181
    %v280 = vsub.f32 -0.6, %v114
    %v281 = vsub.f32 -0.6, %v115
    %v282 = vmul.f32 %v280, 2.5
    %v283 = vmul.f32 %v281, 2.5
    %v284 = vmul.f32 %v282, %v188
    %v285 = vmul.f32 %v283, %v189
    %v286 = vadd.f32 %v278, %v284
    %v287 = vadd.f32 %v279, %v285
    %v288 = vsub.f32 %v114, -1.0
    %v289 = vsub.f32 %v115, -1.0
    %v290 = vmul.f32 %v288, 2.5
    %v291 = vmul.f32 %v289, 2.5
    %v292 = vmul.f32 %v290, %v188
    %v293 = vmul.f32 %v291, %v189
    %v294 = vsub.f32 -0.2, %v114
    %v295 = vsub.f32 -0.2, %v115
    %v296 = vmul.f32 %v294, 2.5
    %v297 = vmul.f32 %v295, 2.5
    %v298 = vmul.f32 %v296, %v196
    %v299 = vmul.f32 %v297, %v197
    %v300 = vadd.f32 %v292, %v298
    %v301 = vadd.f32 %v293, %v299
    %v302 = vsub.f32 %v114, -0.6
    %v303 = vsub.f32 %v115, -0.6
    %v304 = vmul.f32 %v302, 2.5
    %v305 = vmul.f32 %v303, 2.5
    %v306 = vmul.f32 %v304, %v196
    %v307 = vmul.f32 %v305, %v197
    %v308 = vsub.f32 0.2, %v114
    %v309 = vsub.f32 0.2, %v115
    %v310 = vmul.f32 %v308, 2.5
    %v311 = vmul.f32 %v309, 2.5
    %v312 = vmul.f32 %v310, %v204
    %v313 = vmul.f32 %v311, %v205
    %v314 = vadd.f32 %v306, %v312
    %v315 = vadd.f32 %v307, %v313
    %v316 = vsub.f32 %v114, -0.2
    %v317 = vsub.f32 %v115, -0.2
    %v318 = vmul.f32 %v316, 2.5
    %v319 = vmul.f32 %v317, 2.5
    %v320 = vmul.f32 %v318, %v204
    %v321 = vmul.f32 %v319, %v205
    %v322 = vsub.f32 0.6, %v114
    %v323 = vsub.f32 0.6, %v115
    %v324 = vmul.f32 %v322, 2.5
    %v325 = vmul.f32 %v323, 2.5
    %v326 = vmul.f32 %v324, %v212
    %v327 = vmul.f32 %v325, %v213
    %v328 = vadd.f32 %v320, %v326
    %v329 = vadd.f32 %v321, %v327
    %v330 = vsub.f32 %v114, 0.2
    %v331 = vsub.f32 %v115, 0.2
    %v332 = vmul.f32 %v330, 2.5
    %v333 = vmul.f32 %v331, 2.5
    %v334 = vmul.f32 %v332, %v212
    %v335 = vmul.f32 %v333, %v213
    %v336 = vsub.f32 1.0, %v114
    %v337 = vsub.f32 1.0, %v115
    %v338 = vmul.f32 %v336, 2.5
    %v339 = vmul.f32 %v337, 2.5
    %v340 = vmul.f32 %v338, %v220
    %v341 = vmul.f32 %v339, %v221
    %v342 = vadd.f32 %v334, %v340
    %v343 = vadd.f32 %v335, %v341
    %v344 = vsub.f32 %v114, 0.6
    %v345 = vsub.f32 %v115, 0.6
    %v346 = vmul.f32 %v344, 2.5
    %v347 = vmul.f32 %v345, 2.5
    %v348 = vmul.f32 %v346, %v220
    %v349 = vmul.f32 %v347, %v221
    %v350 = vsub.f32 1.4, %v114
    %v351 = vsub.f32 1.4, %v115
    %v352 = vmul.f32 %v350, 2.5
    %v353 = vmul.f32 %v351, 2.5
    %v354 = vmul.f32 %v352, %v228
    %v355 = vmul.f32 %v353, %v229
    %v356 = vadd.f32 %v348, %v354
    %v357 = vadd.f32 %v349, %v355
    %v358 = vsub.f32 %v114, 1.0
    %v359 = vsub.f32 %v115, 1.0
    %v360 = vmul.f32 %v358, 2.5
    %v361 = vmul.f32 %v359, 2.5
    %v362 = vmul.f32 %v360, %v228
    %v363 = vmul.f32 %v361, %v229
    %v364 = vsub.f32 1.8, %v114
    %v365 = vsub.f32 1.8, %v115
    %v366 = vmul.f32 %v364, 2.5
    %v367 = vmul.f32 %v365, 2.5
    %v368 = vmul.f32 %v366, %v236
    %v369 = vmul.f32 %v367, %v237
    %v370 = vadd.f32 %v362, %v368
    %v371 = vadd.f32 %v363, %v369
    %v372 = vsub.f32 %v114, 1.4
    %v373 = vsub.f32 %v115, 1.4
    %v374 = vmul.f32 %v372, 2.5
    %v375 = vmul.f32 %v373, 2.5
    %v376 = vmul.f32 %v374, %v236
    %v377 = vmul.f32 %v375, %v237
    %v378 = vsub.f32 2.2, %v114
    %v379 = vsub.f32 2.2, %v115
    %v380 = vmul.f32 %v378, 2.5
    %v381 = vmul.f32 %v379, 2.5
    %v382 = vmul.f32 %v380, %v244
    %v383 = vmul.f32 %v381, %v245
    %v384 = vadd.f32 %v376, %v382
    %v385 = vadd.f32 %v377, %v383
    %v386 = vmul.f32 %v246, 1.25
    %v387 = vmul.f32 %v247, 1.25
    %v388 = vmul.f32 %v386, %v258
    %v389 = vmul.f32 %v387, %v259
    %v390 = vmul.f32 %v266, 1.25
    %v391 = vmul.f32 %v267, 1.25
    %v392 = vmul.f32 %v390, %v272
    %v393 = vmul.f32 %v391, %v273
    %v394 = vadd.f32 %v388, %v392
    %v395 = vadd.f32 %v389, %v393
    %v396 = vmul.f32 %v260, 1.25
    %v397 = vmul.f32 %v261, 1.25
    %v398 = vmul.f32 %v396, %v272
    %v399 = vmul.f32 %v397, %v273
    %v400 = vmul.f32 %v280, 1.25
    %v401 = vmul.f32 %v281, 1.25
    %v402 = vmul.f32 %v400, %v286
    %v403 = vmul.f32 %v401, %v287
    %v404 = vadd.f32 %v398, %v402
    %v405 = vadd.f32 %v399, %v403
    %v406 = vmul.f32 %v274, 1.25
    %v407 = vmul.f32 %v275, 1.25
    %v408 = vmul.f32 %v406, %v286
    %v409 = vmul.f32 %v407, %v287
    %v410 = vmul.f32 %v294, 1.25
    %v411 = vmul.f32 %v295, 1.25
    %v412 = vmul.f32 %v410, %v300
    %v413 = vmul.f32 %v411, %v301
    %v414 = vadd.f32 %v408, %v412
    %v415 = vadd.f32 %v409, %v413
    %v416 = vmul.f32 %v288, 1.25
    %v417 = vmul.f32 %v289, 1.25
    %v418 = vmul.f32 %v416, %v300
    %v419 = vmul.f32 %v417, %v301
    %v420 = vmul.f32 %v308, 1.25
    %v421 = vmul.f32 %v309, 1.25
    %v422 = vmul.f32 %v420, %v314
    %v423 = vmul.f32 %v421, %v315
    %v424 = vadd.f32 %v418, %v422
    %v425 = vadd.f32 %v419, %v423
    %v426 = vmul.f32 %v302, 1.25
    %v427 = vmul.f32 %v303, 1.25
    %v428 = vmul.f32 %v426, %v314
    %v429 = vmul.f32 %v427, %v315
    %v430 = vmul.f32 %v322, 1.25
    %v431 = vmul.f32 %v323, 1.25
    %v432 = vmul.f32 %v430, %v328
    %v433 = vmul.f32 %v431, %v329
    %v434 = vadd.f32 %v428, %v432
    %v435 = vadd.f32 %v429, %v433
    %v436 = vmul.f32 %v316, 1.25
    %v437 = vmul.f32 %v317, 1.25
    %v438 = vmul.f32 %v436, %v328
    %v439 = vmul.f32 %v437, %v329
    %v440 = vmul.f32 %v336, 1.25
    %v441 = vmul.f32 %v337, 1.25
    %v442 = vmul.f32 %v440, %v342
    %v443 = vmul.f32 %v441, %v343
    %v444 = vadd.f32 %v438, %v442
    %v445 = vadd.f32 %v439, %v443
    %v446 = vmul.f32 %v330, 1.25
    %v447 = vmul.f32 %v331, 1.25
    %v448 = vmul.f32 %v446, %v342
    %v449 = vmul.f32 %v447, %v343
    %v450 = vmul.f32 %v350, 1.25
    %v451 = vmul.f32 %v351, 1.25
    %v452 = vmul.f32 %v450, %v356
    %v453 = vmul.f32 %v451, %v357
    %v454 = vadd.f32 %v448, %v452
    %v455 = vadd.f32 %v449, %v453
    %v456 = vmul.f32 %v344, 1.25
    %v457 = vmul.f32 %v345, 1.25
    %v458 = vmul.f32 %v456, %v356
    %v459 = vmul.f32 %v457, %v357
    %v460 = vmul.f32 %v364, 1.25
    %v461 = vmul.f32 %v365, 1.25
    %v462 = vmul.f32 %v460, %v370
    %v463 = vmul.f32 %v461, %v371
    %v464 = vadd.f32 %v458, %v462
    %v465 = vadd.f32 %v459, %v463
    %v466 = vmul.f32 %v358, 1.25
    %v467 = vmul.f32 %v359, 1.25
    %v468 = vmul.f32 %v466, %v370
    %v469 = vmul.f32 %v467, %v371
    %v470 = vmul.f32 %v378, 1.25
    %v471 = vmul.f32 %v379, 1.25
    %v472 = vmul.f32 %v470, %v384
    %v473 = vmul.f32 %v471, %v385
    %v474 = vadd.f32 %v468, %v472
    %v475 = vadd.f32 %v469, %v473
    %v476 = vmul.f32 %v246, 0.8333333
    %v477 = vmul.f32 %v247, 0.8333333
    %v478 = vmul.f32 %v476, %v394
    %v479 = vmul.f32 %v477, %v395
    %v480 = vmul.f32 %v280, 0.8333333
    %v481 = vmul.f32 %v281, 0.8333333
    %v482 = vmul.f32 %v480, %v404
    %v483 = vmul.f32 %v481, %v405
    %v484 = vadd.f32 %v478, %v482
    %v485 = vadd.f32 %v479, %v483
    %v486 = vmul.f32 %v260, 0.8333333
    %v487 = vmul.f32 %v261, 0.8333333
    %v488 = vmul.f32 %v486, %v404
    %v489 = vmul.f32 %v487, %v405
    %v490 = vmul.f32 %v294, 0.8333333
    %v491 = vmul.f32 %v295, 0.8333333
    %v492 = vmul.f32 %v490, %v414
    %v493 = vmul.f32 %v491, %v415
    %v494 = vadd.f32 %v488, %v492
    %v495 = vadd.f32 %v489, %v493
    %v496 = vmul.f32 %v274, 0.8333333
    %v497 = vmul.f32 %v275, 0.8333333
    %v498 = vmul.f32 %v496, %v414
    %v499 = vmul.f32 %v497, %v415
    %v500 = vmul.f32 %v308, 0.8333333
    %v501 = vmul.f32 %v309, 0.8333333
    %v502 = vmul.f32 %v500, %v424
    %v503 = vmul.f32 %v501, %v425
    %v504 = vadd.f32 %v498, %v502
    %v505 = vadd.f32 %v499, %v503
    %v506 = vmul.f32 %v288, 0.8333333
    %v507 = vmul.f32 %v289, 0.8333333
    %v508 = vmul.f32 %v506, %v424
    %v509 = vmul.f32 %v507, %v425
    %v510 = vmul.f32 %v322, 0.8333333
    %v511 = vmul.f32 %v323, 0.8333333
    %v512 = vmul.f32 %v510, %v434
    %v513 = vmul.f32 %v511, %v435
    %v514 = vadd.f32 %v508, %v512
    %v515 = vadd.f32 %v509, %v513
    %v516 = vmul.f32 %v302, 0.8333333
    %v517 = vmul.f32 %v303, 0.8333333
    %v518 = vmul.f32 %v516, %v434
    %v519 = vmul.f32 %v517, %v435
    %v520 = vmul.f32 %v336, 0.8333333
    %v521 = vmul.f32 %v337, 0.8333333
    %v522 = vmul.f32 %v520, %v444
    %v523 = vmul.f32 %v521, %v445
    %v524 = vadd.f32 %v518, %v522
    %v525 = vadd.f32 %v519, %v523
    %v526 = vmul.f32 %v316, 0.8333333
    %v527 = vmul.f32 %v317, 0.8333333
    %v528 = vmul.f32 %v526, %v444
    %v529 = vmul.f32 %v527, %v445
    %v530 = vmul.f32 %v350, 0.8333333
    %v531 = vmul.f32 %v351, 0.8333333
    %v532 = vmul.f32 %v530, %v454
    %v533 = vmul.f32 %v531, %v455
    %v534 = vadd.f32 %v528, %v532
    %v535 = vadd.f32 %v529, %v533
    %v536 = vmul.f32 %v330, 0.8333333
    %v537 = vmul.f32 %v331, 0.8333333
    %v538 = vmul.f32 %v536, %v454
    %v539 = vmul.f32 %v537, %v455
    %v540 = vmul.f32 %v364, 0.8333333
    %v541 = vmul.f32 %v365, 0.8333333
    %v542 = vmul.f32 %v540, %v464
    %v543 = vmul.f32 %v541, %v465
    %v544 = vadd.f32 %v538, %v542
    %v545 = vadd.f32 %v539, %v543
    %v546 = vmul.f32 %v344, 0.8333333
    %v547 = vmul.f32 %v345, 0.8333333
    %v548 = vmul.f32 %v546, %v464
    %v549 = vmul.f32 %v547, %v465
    %v550 = vmul.f32 %v378, 0.8333333
    %v551 = vmul.f32 %v379, 0.8333333
    %v552 = vmul.f32 %v550, %v474
    %v553 = vmul.f32 %v551, %v475
    %v554 = vadd.f32 %v548, %v552
    %v555 = vadd.f32 %v549, %v553
    %556 = vst [vmem:[#allocation2 + $0x10] sm:$0xff] %v484
    %557 = vst [vmem:[#allocation2 + $0x18] sm:$0xff] %v485
    %558 = vst [vmem:[#allocation2 + $0x20] sm:$0xff] %v494
    %559 = vst [vmem:[#allocation2 + $0x28] sm:$0xff] %v495
    %560 = vst [vmem:[#allocation2 + $0x30] sm:$0xff] %v504
    %561 = vst [vmem:[#allocation2 + $0x38] sm:$0xff] %v505
    %562 = vst [vmem:[#allocation2 + $0x40] sm:$0xff] %v514
    %563 = vst [vmem:[#allocation2 + $0x48] sm:$0xff] %v515
    %564 = vst [vmem:[#allocation2 + $0x50] sm:$0xff] %v524
    %565 = vst [vmem:[#allocation2 + $0x58] sm:$0xff] %v525
    %566 = vst [vmem:[#allocation2 + $0x60] sm:$0xff] %v534
    %567 = vst [vmem:[#allocation2 + $0x68] sm:$0xff] %v535
    %568 = vst [vmem:[#allocation2 + $0x70] sm:$0xff] %v544
    %569 = vst [vmem:[#allocation2 + $0x78] sm:$0xff] %v545
    %570 = vst [vmem:[#allocation2 + $0x80] sm:$0xff] %v554
    %571 = vst [vmem:[#allocation2 + $0x88] sm:$0xff] %v555
    %v572 = vld [vmem:[#allocation12] sm:$0xff]
    %v573 = vld [vmem:[#allocation12 + $0x8] sm:$0xff]
    %v574 = vld [vmem:[#allocation2] sm:$0xff]
    %v575 = vld [vmem:[#allocation2 + $0x8] sm:$0xff]
    %v576 = vld [vmem:[#allocation2 + $0x10] sm:$0xff]
    %v577 = vld [vmem:[#allocation2 + $0x18] sm:$0xff]
    %v578 = vld [vmem:[#allocation2 + $0x20] sm:$0xff]
    %v579 = vld [vmem:[#allocation2 + $0x28] sm:$0xff]
    %v580 = vld [vmem:[#allocation2 + $0x30] sm:$0xff]
    %v581 = vld [vmem:[#allocation2 + $0x38] sm:$0xff]
    %v582 = vld [vmem:[#allocation2 + $0x40] sm:$0xff]
    %v583 = vld [vmem:[#allocation2 + $0x48] sm:$0xff]
    %v584 = vld [vmem:[#allocation2 + $0x50] sm:$0xff]
    %v585 = vld [vmem:[#allocation2 + $0x58] sm:$0xff]
    %v586 = vld [vmem:[#allocation2 + $0x60] sm:$0xff]
    %v587 = vld [vmem:[#allocation2 + $0x68] sm:$0xff]
    %v588 = vld [vmem:[#allocation2 + $0x70] sm:$0xff]
    %v589 = vld [vmem:[#allocation2 + $0x78] sm:$0xff]
    %v590 = vld [vmem:[#allocation2 + $0x80] sm:$0xff]
    %v591 = vld [vmem:[#allocation2 + $0x88] sm:$0xff]
    %vm592 = vcmask 130048
    %v594 = vsel %vm592, %v573, 0
    %596 = vmatpush.msra.mxu0 %v589
    %597 = vmatpush.msra.mxu0 %v588
    %598 = vmatpush.msra.mxu0 %v587
    %599 = vmatpush.msra.mxu0 %v586
    %600 = vmatpush.msra.mxu0 %v585
    %601 = vmatpush.msra.mxu0 %v584
    %602 = vmatpush.msra.mxu0 %v583
    %603 = vmatpush.msra.mxu0 %v582
    %604 = vmatpush.msra.mxu0 %v581
    %605 = vmatpush.msra.mxu0 %v580
    %606 = vmatpush.msra.mxu0 %v579
    %607 = vmatpush.msra.mxu0 %v578
    %608 = vmatpush.msra.mxu0 %v577
    %609 = vmatpush.msra.mxu0 %v576
    %610 = vmatpush.msra.mxu0 %v575
    %611 = vmatpush.msra.mxu0 %v574
    %612 = vmatmul.f32.gmra.mxu0 %v572
    %v613 = vpop.f32.mrf.mxu0
    %v614 = vadd.f32 0.0, %v613
    %615 = vdwg.mxu0
    %616 = vmatpush.msra.mxu0 0.0
    %617 = vmatpush.msra.mxu0 0.0
    %618 = vmatpush.msra.mxu0 0.0
    %619 = vmatpush.msra.mxu0 0.0
    %620 = vmatpush.msra.mxu0 0.0
    %621 = vmatpush.msra.mxu0 0.0
    %622 = vmatpush.msra.mxu0 0.0
    %623 = vmatpush.msra.mxu0 0.0
    %624 = vmatpush.msra.mxu0 0.0
    %625 = vmatpush.msra.mxu0 0.0
    %626 = vmatpush.msra.mxu0 0.0
    %627 = vmatpush.msra.mxu0 0.0
    %628 = vmatpush.msra.mxu0 0.0
    %629 = vmatpush.msra.mxu0 0.0
    %630 = vmatpush.msra.mxu0 %v591
    %631 = vmatpush.msra.mxu0 %v590
    %632 = vmatmul.f32.gmra.mxu0 %v594
    %v633 = vpop.f32.mrf.mxu0
    %v634 = vadd.f32 %v614, %v633
    %635 = vdwg.mxu0
    %v636 = vsub.f32 0.0, %v634
    %v637 = vmul.f32 %v636, 1.442695
    %v638 = vpow.pop %v637
    %v639 = vadd.f32 %v638, 1.0
    %v640 = vrcp.pop %v639
    %v641 = vmul.f32 %v639, %v640
    %v642 = vsub.f32 1.0, %v641
    %v643 = vmul.f32 %v640, %v642
    %v644 = vadd.f32 %v640, %v643
    %vm645 = vweird.f32 %v639
    %vm646 = vweird.f32 %v640
    %vm647 = vmor %vm645, %vm646
    %v648 = vsel %vm647, %v640, %v644
    %v649 = vand.u32 2147483647, %v639
    %vm650 = vcmp.eq.f32.partialorder %v649, 8.507059e+37
    %v651 = vand.u32 %v639, 2147483648
    %v652 = vor.u32 1.1754944e-38, %v651
    %v653 = vsel %vm650, %v652, %v648
    %v654 = vmul.f32 1.0, %v653
    %v655 = vmul.f32 %v634, %v654
    %656 = vst [vmem:[#allocation3] sm:$0xff] %v655
    %vm657 = vcmp.ge.f32.partialorder %v634, -2.2
    %vm658 = vcmp.lt.f32.partialorder %v634, -1.8
    %vm659 = vmand %vm657, %vm658
    %v660 = vsel %vm659, 1.0, 0.0
    %vm661 = vcmp.ge.f32.partialorder %v634, -1.8
    %vm662 = vcmp.lt.f32.partialorder %v634, -1.4
    %vm663 = vmand %vm661, %vm662
    %v664 = vsel %vm663, 1.0, 0.0
    %vm665 = vcmp.ge.f32.partialorder %v634, -1.4
    %vm666 = vcmp.lt.f32.partialorder %v634, -1.0
    %vm667 = vmand %vm665, %vm666
    %v668 = vsel %vm667, 1.0, 0.0
    %vm669 = vcmp.ge.f32.partialorder %v634, -1.0
    %vm670 = vcmp.lt.f32.partialorder %v634, -0.6
    %vm671 = vmand %vm669, %vm670
    %v672 = vsel %vm671, 1.0, 0.0
    %vm673 = vcmp.ge.f32.partialorder %v634, -0.6
    %vm674 = vcmp.lt.f32.partialorder %v634, -0.2
    %vm675 = vmand %vm673, %vm674
    %v676 = vsel %vm675, 1.0, 0.0
    %vm677 = vcmp.ge.f32.partialorder %v634, -0.2
    %vm678 = vcmp.lt.f32.partialorder %v634, 0.2
    %vm679 = vmand %vm677, %vm678
    %v680 = vsel %vm679, 1.0, 0.0
    %vm681 = vcmp.ge.f32.partialorder %v634, 0.2
    %vm682 = vcmp.lt.f32.partialorder %v634, 0.6
    %vm683 = vmand %vm681, %vm682
    %v684 = vsel %vm683, 1.0, 0.0
    %vm685 = vcmp.ge.f32.partialorder %v634, 0.6
    %vm686 = vcmp.lt.f32.partialorder %v634, 1.0
    %vm687 = vmand %vm685, %vm686
    %v688 = vsel %vm687, 1.0, 0.0
    %vm689 = vcmp.ge.f32.partialorder %v634, 1.0
    %vm690 = vcmp.lt.f32.partialorder %v634, 1.4
    %vm691 = vmand %vm689, %vm690
    %v692 = vsel %vm691, 1.0, 0.0
    %vm693 = vcmp.ge.f32.partialorder %v634, 1.4
    %vm694 = vcmp.lt.f32.partialorder %v634, 1.8
    %vm695 = vmand %vm693, %vm694
    %v696 = vsel %vm695, 1.0, 0.0
    %vm697 = vcmp.ge.f32.partialorder %v634, 1.8
    %vm698 = vcmp.lt.f32.partialorder %v634, 2.2
    %vm699 = vmand %vm697, %vm698
    %v700 = vsel %vm699, 1.0, 0.0
    %v701 = vsub.f32 %v634, -2.2
    %v702 = vmul.f32 %v701, 2.5
    %v703 = vmul.f32 %v702, %v660
    %v704 = vsub.f32 -1.4, %v634
    %v705 = vmul.f32 %v704, 2.5
    %v706 = vmul.f32 %v705, %v664
    %v707 = vadd.f32 %v703, %v706
    %v708 = vsub.f32 %v634, -1.8
    %v709 = vmul.f32 %v708, 2.5
    %v710 = vmul.f32 %v709, %v664
    %v711 = vsub.f32 -1.0, %v634
    %v712 = vmul.f32 %v711, 2.5
    %v713 = vmul.f32 %v712, %v668
    %v714 = vadd.f32 %v710, %v713
    %v715 = vsub.f32 %v634, -1.4
    %v716 = vmul.f32 %v715, 2.5
    %v717 = vmul.f32 %v716, %v668
    %v718 = vsub.f32 -0.6, %v634
    %v719 = vmul.f32 %v718, 2.5
    %v720 = vmul.f32 %v719, %v672
    %v721 = vadd.f32 %v717, %v720
    %v722 = vsub.f32 %v634, -1.0
    %v723 = vmul.f32 %v722, 2.5
    %v724 = vmul.f32 %v723, %v672
    %v725 = vsub.f32 -0.2, %v634
    %v726 = vmul.f32 %v725, 2.5
    %v727 = vmul.f32 %v726, %v676
    %v728 = vadd.f32 %v724, %v727
    %v729 = vsub.f32 %v634, -0.6
    %v730 = vmul.f32 %v729, 2.5
    %v731 = vmul.f32 %v730, %v676
    %v732 = vsub.f32 0.2, %v634
    %v733 = vmul.f32 %v732, 2.5
    %v734 = vmul.f32 %v733, %v680
    %v735 = vadd.f32 %v731, %v734
    %v736 = vsub.f32 %v634, -0.2
    %v737 = vmul.f32 %v736, 2.5
    %v738 = vmul.f32 %v737, %v680
    %v739 = vsub.f32 0.6, %v634
    %v740 = vmul.f32 %v739, 2.5
    %v741 = vmul.f32 %v740, %v684
    %v742 = vadd.f32 %v738, %v741
    %v743 = vsub.f32 %v634, 0.2
    %v744 = vmul.f32 %v743, 2.5
    %v745 = vmul.f32 %v744, %v684
    %v746 = vsub.f32 1.0, %v634
    %v747 = vmul.f32 %v746, 2.5
    %v748 = vmul.f32 %v747, %v688
    %v749 = vadd.f32 %v745, %v748
    %v750 = vsub.f32 %v634, 0.6
    %v751 = vmul.f32 %v750, 2.5
    %v752 = vmul.f32 %v751, %v688
    %v753 = vsub.f32 1.4, %v634
    %v754 = vmul.f32 %v753, 2.5
    %v755 = vmul.f32 %v754, %v692
    %v756 = vadd.f32 %v752, %v755
    %v757 = vsub.f32 %v634, 1.0
    %v758 = vmul.f32 %v757, 2.5
    %v759 = vmul.f32 %v758, %v692
    %v760 = vsub.f32 1.8, %v634
    %v761 = vmul.f32 %v760, 2.5
    %v762 = vmul.f32 %v761, %v696
    %v763 = vadd.f32 %v759, %v762
    %v764 = vsub.f32 %v634, 1.4
    %v765 = vmul.f32 %v764, 2.5
    %v766 = vmul.f32 %v765, %v696
    %v767 = vsub.f32 2.2, %v634
    %v768 = vmul.f32 %v767, 2.5
    %v769 = vmul.f32 %v768, %v700
    %v770 = vadd.f32 %v766, %v769
    %v771 = vmul.f32 %v701, 1.25
    %v772 = vmul.f32 %v771, %v707
    %v773 = vmul.f32 %v711, 1.25
    %v774 = vmul.f32 %v773, %v714
    %v775 = vadd.f32 %v772, %v774
    %v776 = vmul.f32 %v708, 1.25
    %v777 = vmul.f32 %v776, %v714
    %v778 = vmul.f32 %v718, 1.25
    %v779 = vmul.f32 %v778, %v721
    %v780 = vadd.f32 %v777, %v779
    %v781 = vmul.f32 %v715, 1.25
    %v782 = vmul.f32 %v781, %v721
    %v783 = vmul.f32 %v725, 1.25
    %v784 = vmul.f32 %v783, %v728
    %v785 = vadd.f32 %v782, %v784
    %v786 = vmul.f32 %v722, 1.25
    %v787 = vmul.f32 %v786, %v728
    %v788 = vmul.f32 %v732, 1.25
    %v789 = vmul.f32 %v788, %v735
    %v790 = vadd.f32 %v787, %v789
    %v791 = vmul.f32 %v729, 1.25
    %v792 = vmul.f32 %v791, %v735
    %v793 = vmul.f32 %v739, 1.25
    %v794 = vmul.f32 %v793, %v742
    %v795 = vadd.f32 %v792, %v794
    %v796 = vmul.f32 %v736, 1.25
    %v797 = vmul.f32 %v796, %v742
    %v798 = vmul.f32 %v746, 1.25
    %v799 = vmul.f32 %v798, %v749
    %v800 = vadd.f32 %v797, %v799
    %v801 = vmul.f32 %v743, 1.25
    %v802 = vmul.f32 %v801, %v749
    %v803 = vmul.f32 %v753, 1.25
    %v804 = vmul.f32 %v803, %v756
    %v805 = vadd.f32 %v802, %v804
    %v806 = vmul.f32 %v750, 1.25
    %v807 = vmul.f32 %v806, %v756
    %v808 = vmul.f32 %v760, 1.25
    %v809 = vmul.f32 %v808, %v763
    %v810 = vadd.f32 %v807, %v809
    %v811 = vmul.f32 %v757, 1.25
    %v812 = vmul.f32 %v811, %v763
    %v813 = vmul.f32 %v767, 1.25
    %v814 = vmul.f32 %v813, %v770
    %v815 = vadd.f32 %v812, %v814
    %v816 = vmul.f32 %v701, 0.8333333
    %v817 = vmul.f32 %v816, %v775
    %v818 = vmul.f32 %v718, 0.8333333
    %v819 = vmul.f32 %v818, %v780
    %v820 = vadd.f32 %v817, %v819
    %v821 = vmul.f32 %v708, 0.8333333
    %v822 = vmul.f32 %v821, %v780
    %v823 = vmul.f32 %v725, 0.8333333
    %v824 = vmul.f32 %v823, %v785
    %v825 = vadd.f32 %v822, %v824
    %v826 = vmul.f32 %v715, 0.8333333
    %v827 = vmul.f32 %v826, %v785
    %v828 = vmul.f32 %v732, 0.8333333
    %v829 = vmul.f32 %v828, %v790
    %v830 = vadd.f32 %v827, %v829
    %v831 = vmul.f32 %v722, 0.8333333
    %v832 = vmul.f32 %v831, %v790
    %v833 = vmul.f32 %v739, 0.8333333
    %v834 = vmul.f32 %v833, %v795
    %v835 = vadd.f32 %v832, %v834
    %v836 = vmul.f32 %v729, 0.8333333
    %v837 = vmul.f32 %v836, %v795
    %v838 = vmul.f32 %v746, 0.8333333
    %v839 = vmul.f32 %v838, %v800
    %v840 = vadd.f32 %v837, %v839
    %v841 = vmul.f32 %v736, 0.8333333
    %v842 = vmul.f32 %v841, %v800
    %v843 = vmul.f32 %v753, 0.8333333
    %v844 = vmul.f32 %v843, %v805
    %v845 = vadd.f32 %v842, %v844
    %v846 = vmul.f32 %v743, 0.8333333
    %v847 = vmul.f32 %v846, %v805
    %v848 = vmul.f32 %v760, 0.8333333
    %v849 = vmul.f32 %v848, %v810
    %v850 = vadd.f32 %v847, %v849
    %v851 = vmul.f32 %v750, 0.8333333
    %v852 = vmul.f32 %v851, %v810
    %v853 = vmul.f32 %v767, 0.8333333
    %v854 = vmul.f32 %v853, %v815
    %v855 = vadd.f32 %v852, %v854
    %856 = vst [vmem:[#allocation3 + $0x8] sm:$0xff] %v820
    %857 = vst [vmem:[#allocation3 + $0x10] sm:$0xff] %v825
    %858 = vst [vmem:[#allocation3 + $0x18] sm:$0xff] %v830
    %859 = vst [vmem:[#allocation3 + $0x20] sm:$0xff] %v835
    %860 = vst [vmem:[#allocation3 + $0x28] sm:$0xff] %v840
    %861 = vst [vmem:[#allocation3 + $0x30] sm:$0xff] %v845
    %862 = vst [vmem:[#allocation3 + $0x38] sm:$0xff] %v850
    %863 = vst [vmem:[#allocation3 + $0x40] sm:$0xff] %v855
    %v864 = vld [vmem:[#allocation14] sm:$0xff]
    %v865 = vld [vmem:[#allocation3] sm:$0xff]
    %v866 = vld [vmem:[#allocation3 + $0x8] sm:$0xff]
    %v867 = vld [vmem:[#allocation3 + $0x10] sm:$0xff]
    %v868 = vld [vmem:[#allocation3 + $0x18] sm:$0xff]
    %v869 = vld [vmem:[#allocation3 + $0x20] sm:$0xff]
    %v870 = vld [vmem:[#allocation3 + $0x28] sm:$0xff]
    %v871 = vld [vmem:[#allocation3 + $0x30] sm:$0xff]
    %v872 = vld [vmem:[#allocation3 + $0x38] sm:$0xff]
    %v873 = vld [vmem:[#allocation3 + $0x40] sm:$0xff]
    %vm874 = vcmask 588800
    %v876 = vsel %vm874, %v864, 0
    %878 = vmatpush.msra.mxu0 0.0
    %879 = vmatpush.msra.mxu0 0.0
    %880 = vmatpush.msra.mxu0 0.0
    %881 = vmatpush.msra.mxu0 0.0
    %882 = vmatpush.msra.mxu0 0.0
    %883 = vmatpush.msra.mxu0 0.0
    %884 = vmatpush.msra.mxu0 0.0
    %885 = vmatpush.msra.mxu0 %v873
    %886 = vmatpush.msra.mxu0 %v872
    %887 = vmatpush.msra.mxu0 %v871
    %888 = vmatpush.msra.mxu0 %v870
    %889 = vmatpush.msra.mxu0 %v869
    %890 = vmatpush.msra.mxu0 %v868
    %891 = vmatpush.msra.mxu0 %v867
    %892 = vmatpush.msra.mxu0 %v866
    %893 = vmatpush.msra.mxu0 %v865
    %894 = vmatmul.f32.gmra.mxu0 %v876
    %v895 = vpop.f32.mrf.mxu0
    %v896 = vadd.f32 0.0, %v895
    %897 = vdwg.mxu0
    %v898 = vld [vmem:[#allocation9] sm:$0xff]
    %v899 = vadd.f32 %v898, %v896
    %900 = vst [vmem:[#allocation17] sm:$0xff] %v899
    %v901 = vsub.f32 0.0, %v899
    %v902 = vmul.f32 %v901, 1.442695
    %v903 = vpow.pop %v902
    %v904 = vadd.f32 %v903, 1.0
    %v905 = vrcp.pop %v904
    %v906 = vmul.f32 %v904, %v905
    %v907 = vsub.f32 1.0, %v906
    %v908 = vmul.f32 %v905, %v907
    %v909 = vadd.f32 %v905, %v908
    %vm910 = vweird.f32 %v904
    %vm911 = vweird.f32 %v905
    %vm912 = vmor %vm910, %vm911
    %v913 = vsel %vm912, %v905, %v909
    %v914 = vand.u32 2147483647, %v904
    %vm915 = vcmp.eq.f32.partialorder %v914, 8.507059e+37
    %v916 = vand.u32 %v904, 2147483648
    %v917 = vor.u32 1.1754944e-38, %v916
    %v918 = vsel %vm915, %v917, %v913
    %v919 = vmul.f32 1.0, %v918
    %v920 = vmul.f32 %v899, %v919
    %921 = vst [vmem:[#allocation4] sm:$0xff] %v920
    %vm922 = vcmp.ge.f32.partialorder %v899, -2.2
    %vm923 = vcmp.lt.f32.partialorder %v899, -1.8
    %vm924 = vmand %vm922, %vm923
    %v925 = vsel %vm924, 1.0, 0.0
    %vm926 = vcmp.ge.f32.partialorder %v899, -1.8
    %vm927 = vcmp.lt.f32.partialorder %v899, -1.4
    %vm928 = vmand %vm926, %vm927
    %v929 = vsel %vm928, 1.0, 0.0
    %vm930 = vcmp.ge.f32.partialorder %v899, -1.4
    %vm931 = vcmp.lt.f32.partialorder %v899, -1.0
    %vm932 = vmand %vm930, %vm931
    %v933 = vsel %vm932, 1.0, 0.0
    %vm934 = vcmp.ge.f32.partialorder %v899, -1.0
    %vm935 = vcmp.lt.f32.partialorder %v899, -0.6
    %vm936 = vmand %vm934, %vm935
    %v937 = vsel %vm936, 1.0, 0.0
    %vm938 = vcmp.ge.f32.partialorder %v899, -0.6
    %vm939 = vcmp.lt.f32.partialorder %v899, -0.2
    %vm940 = vmand %vm938, %vm939
    %v941 = vsel %vm940, 1.0, 0.0
    %vm942 = vcmp.ge.f32.partialorder %v899, -0.2
    %vm943 = vcmp.lt.f32.partialorder %v899, 0.2
    %vm944 = vmand %vm942, %vm943
    %v945 = vsel %vm944, 1.0, 0.0
    %vm946 = vcmp.ge.f32.partialorder %v899, 0.2
    %vm947 = vcmp.lt.f32.partialorder %v899, 0.6
    %vm948 = vmand %vm946, %vm947
    %v949 = vsel %vm948, 1.0, 0.0
    %vm950 = vcmp.ge.f32.partialorder %v899, 0.6
    %vm951 = vcmp.lt.f32.partialorder %v899, 1.0
    %vm952 = vmand %vm950, %vm951
    %v953 = vsel %vm952, 1.0, 0.0
    %vm954 = vcmp.ge.f32.partialorder %v899, 1.0
    %vm955 = vcmp.lt.f32.partialorder %v899, 1.4
    %vm956 = vmand %vm954, %vm955
    %v957 = vsel %vm956, 1.0, 0.0
    %vm958 = vcmp.ge.f32.partialorder %v899, 1.4
    %vm959 = vcmp.lt.f32.partialorder %v899, 1.8
    %vm960 = vmand %vm958, %vm959
    %v961 = vsel %vm960, 1.0, 0.0
    %vm962 = vcmp.ge.f32.partialorder %v899, 1.8
    %vm963 = vcmp.lt.f32.partialorder %v899, 2.2
    %vm964 = vmand %vm962, %vm963
    %v965 = vsel %vm964, 1.0, 0.0
    %v966 = vsub.f32 %v899, -2.2
    %v967 = vmul.f32 %v966, 2.5
    %v968 = vmul.f32 %v967, %v925
    %v969 = vsub.f32 -1.4, %v899
    %v970 = vmul.f32 %v969, 2.5
    %v971 = vmul.f32 %v970, %v929
    %v972 = vadd.f32 %v968, %v971
    %v973 = vsub.f32 %v899, -1.8
    %v974 = vmul.f32 %v973, 2.5
    %v975 = vmul.f32 %v974, %v929
    %v976 = vsub.f32 -1.0, %v899
    %v977 = vmul.f32 %v976, 2.5
    %v978 = vmul.f32 %v977, %v933
    %v979 = vadd.f32 %v975, %v978
    %v980 = vsub.f32 %v899, -1.4
    %v981 = vmul.f32 %v980, 2.5
    %v982 = vmul.f32 %v981, %v933
    %v983 = vsub.f32 -0.6, %v899
    %v984 = vmul.f32 %v983, 2.5
    %v985 = vmul.f32 %v984, %v937
    %v986 = vadd.f32 %v982, %v985
    %v987 = vsub.f32 %v899, -1.0
    %v988 = vmul.f32 %v987, 2.5
    %v989 = vmul.f32 %v988, %v937
    %v990 = vsub.f32 -0.2, %v899
    %v991 = vmul.f32 %v990, 2.5
    %v992 = vmul.f32 %v991, %v941
    %v993 = vadd.f32 %v989, %v992
    %v994 = vsub.f32 %v899, -0.6
    %v995 = vmul.f32 %v994, 2.5
    %v996 = vmul.f32 %v995, %v941
    %v997 = vsub.f32 0.2, %v899
    %v998 = vmul.f32 %v997, 2.5
    %v999 = vmul.f32 %v998, %v945
    %v1000 = vadd.f32 %v996, %v999
    %v1001 = vsub.f32 %v899, -0.2
    %v1002 = vmul.f32 %v1001, 2.5
    %v1003 = vmul.f32 %v1002, %v945
    %v1004 = vsub.f32 0.6, %v899
    %v1005 = vmul.f32 %v1004, 2.5
    %v1006 = vmul.f32 %v1005, %v949
    %v1007 = vadd.f32 %v1003, %v1006
    %v1008 = vsub.f32 %v899, 0.2
    %v1009 = vmul.f32 %v1008, 2.5
    %v1010 = vmul.f32 %v1009, %v949
    %v1011 = vsub.f32 1.0, %v899
    %v1012 = vmul.f32 %v1011, 2.5
    %v1013 = vmul.f32 %v1012, %v953
    %v1014 = vadd.f32 %v1010, %v1013
    %v1015 = vsub.f32 %v899, 0.6
    %v1016 = vmul.f32 %v1015, 2.5
    %v1017 = vmul.f32 %v1016, %v953
    %v1018 = vsub.f32 1.4, %v899
    %v1019 = vmul.f32 %v1018, 2.5
    %v1020 = vmul.f32 %v1019, %v957
    %v1021 = vadd.f32 %v1017, %v1020
    %v1022 = vsub.f32 %v899, 1.0
    %v1023 = vmul.f32 %v1022, 2.5
    %v1024 = vmul.f32 %v1023, %v957
    %v1025 = vsub.f32 1.8, %v899
    %v1026 = vmul.f32 %v1025, 2.5
    %v1027 = vmul.f32 %v1026, %v961
    %v1028 = vadd.f32 %v1024, %v1027
    %v1029 = vsub.f32 %v899, 1.4
    %v1030 = vmul.f32 %v1029, 2.5
    %v1031 = vmul.f32 %v1030, %v961
    %v1032 = vsub.f32 2.2, %v899
    %v1033 = vmul.f32 %v1032, 2.5
    %v1034 = vmul.f32 %v1033, %v965
    %v1035 = vadd.f32 %v1031, %v1034
    %v1036 = vmul.f32 %v966, 1.25
    %v1037 = vmul.f32 %v1036, %v972
    %v1038 = vmul.f32 %v976, 1.25
    %v1039 = vmul.f32 %v1038, %v979
    %v1040 = vadd.f32 %v1037, %v1039
    %v1041 = vmul.f32 %v973, 1.25
    %v1042 = vmul.f32 %v1041, %v979
    %v1043 = vmul.f32 %v983, 1.25
    %v1044 = vmul.f32 %v1043, %v986
    %v1045 = vadd.f32 %v1042, %v1044
    %v1046 = vmul.f32 %v980, 1.25
    %v1047 = vmul.f32 %v1046, %v986
    %v1048 = vmul.f32 %v990, 1.25
    %v1049 = vmul.f32 %v1048, %v993
    %v1050 = vadd.f32 %v1047, %v1049
    %v1051 = vmul.f32 %v987, 1.25
    %v1052 = vmul.f32 %v1051, %v993
    %v1053 = vmul.f32 %v997, 1.25
    %v1054 = vmul.f32 %v1053, %v1000
    %v1055 = vadd.f32 %v1052, %v1054
    %v1056 = vmul.f32 %v994, 1.25
    %v1057 = vmul.f32 %v1056, %v1000
    %v1058 = vmul.f32 %v1004, 1.25
    %v1059 = vmul.f32 %v1058, %v1007
    %v1060 = vadd.f32 %v1057, %v1059
    %v1061 = vmul.f32 %v1001, 1.25
    %v1062 = vmul.f32 %v1061, %v1007
    %v1063 = vmul.f32 %v1011, 1.25
    %v1064 = vmul.f32 %v1063, %v1014
    %v1065 = vadd.f32 %v1062, %v1064
    %v1066 = vmul.f32 %v1008, 1.25
    %v1067 = vmul.f32 %v1066, %v1014
    %v1068 = vmul.f32 %v1018, 1.25
    %v1069 = vmul.f32 %v1068, %v1021
    %v1070 = vadd.f32 %v1067, %v1069
    %v1071 = vmul.f32 %v1015, 1.25
    %v1072 = vmul.f32 %v1071, %v1021
    %v1073 = vmul.f32 %v1025, 1.25
    %v1074 = vmul.f32 %v1073, %v1028
    %v1075 = vadd.f32 %v1072, %v1074
    %v1076 = vmul.f32 %v1022, 1.25
    %v1077 = vmul.f32 %v1076, %v1028
    %v1078 = vmul.f32 %v1032, 1.25
    %v1079 = vmul.f32 %v1078, %v1035
    %v1080 = vadd.f32 %v1077, %v1079
    %v1081 = vmul.f32 %v966, 0.8333333
    %v1082 = vmul.f32 %v1081, %v1040
    %v1083 = vmul.f32 %v983, 0.8333333
    %v1084 = vmul.f32 %v1083, %v1045
    %v1085 = vadd.f32 %v1082, %v1084
    %v1086 = vmul.f32 %v973, 0.8333333
    %v1087 = vmul.f32 %v1086, %v1045
    %v1088 = vmul.f32 %v990, 0.8333333
    %v1089 = vmul.f32 %v1088, %v1050
    %v1090 = vadd.f32 %v1087, %v1089
    %v1091 = vmul.f32 %v980, 0.8333333
    %v1092 = vmul.f32 %v1091, %v1050
    %v1093 = vmul.f32 %v997, 0.8333333
    %v1094 = vmul.f32 %v1093, %v1055
    %v1095 = vadd.f32 %v1092, %v1094
    %v1096 = vmul.f32 %v987, 0.8333333
    %v1097 = vmul.f32 %v1096, %v1055
    %v1098 = vmul.f32 %v1004, 0.8333333
    %v1099 = vmul.f32 %v1098, %v1060
    %v1100 = vadd.f32 %v1097, %v1099
    %v1101 = vmul.f32 %v994, 0.8333333
    %v1102 = vmul.f32 %v1101, %v1060
    %v1103 = vmul.f32 %v1011, 0.8333333
    %v1104 = vmul.f32 %v1103, %v1065
    %v1105 = vadd.f32 %v1102, %v1104
    %v1106 = vmul.f32 %v1001, 0.8333333
    %v1107 = vmul.f32 %v1106, %v1065
    %v1108 = vmul.f32 %v1018, 0.8333333
    %v1109 = vmul.f32 %v1108, %v1070
    %v1110 = vadd.f32 %v1107, %v1109
    %v1111 = vmul.f32 %v1008, 0.8333333
    %v1112 = vmul.f32 %v1111, %v1070
    %v1113 = vmul.f32 %v1025, 0.8333333
    %v1114 = vmul.f32 %v1113, %v1075
    %v1115 = vadd.f32 %v1112, %v1114
    %v1116 = vmul.f32 %v1015, 0.8333333
    %v1117 = vmul.f32 %v1116, %v1075
    %v1118 = vmul.f32 %v1032, 0.8333333
    %v1119 = vmul.f32 %v1118, %v1080
    %v1120 = vadd.f32 %v1117, %v1119
    %1121 = vst [vmem:[#allocation4 + $0x8] sm:$0xff] %v1085
    %1122 = vst [vmem:[#allocation4 + $0x10] sm:$0xff] %v1090
    %1123 = vst [vmem:[#allocation4 + $0x18] sm:$0xff] %v1095
    %1124 = vst [vmem:[#allocation4 + $0x20] sm:$0xff] %v1100
    %1125 = vst [vmem:[#allocation4 + $0x28] sm:$0xff] %v1105
    %1126 = vst [vmem:[#allocation4 + $0x30] sm:$0xff] %v1110
    %1127 = vst [vmem:[#allocation4 + $0x38] sm:$0xff] %v1115
    %1128 = vst [vmem:[#allocation4 + $0x40] sm:$0xff] %v1120
    %v1129 = vld [vmem:[%s5] sm:$0xf]
    %v1130 = vld [vmem:[#allocation4] sm:$0xff]
    %v1131 = vld [vmem:[#allocation4 + $0x8] sm:$0xff]
    %v1132 = vld [vmem:[#allocation4 + $0x10] sm:$0xff]
    %v1133 = vld [vmem:[#allocation4 + $0x18] sm:$0xff]
    %v1134 = vld [vmem:[#allocation4 + $0x20] sm:$0xff]
    %v1135 = vld [vmem:[#allocation4 + $0x28] sm:$0xff]
    %v1136 = vld [vmem:[#allocation4 + $0x30] sm:$0xff]
    %v1137 = vld [vmem:[#allocation4 + $0x38] sm:$0xff]
    %v1138 = vld [vmem:[#allocation4 + $0x40] sm:$0xff]
    %v1140 = vsel %vm874, %v1129, 0
    %1142 = vmatpush.msra.mxu0 0.0
    %1143 = vmatpush.msra.mxu0 0.0
    %1144 = vmatpush.msra.mxu0 0.0
    %1145 = vmatpush.msra.mxu0 0.0
    %1146 = vmatpush.msra.mxu0 0.0
    %1147 = vmatpush.msra.mxu0 0.0
    %1148 = vmatpush.msra.mxu0 0.0
    %1149 = vmatpush.msra.mxu0 %v1138
    %1150 = vmatpush.msra.mxu0 %v1137
    %1151 = vmatpush.msra.mxu0 %v1136
    %1152 = vmatpush.msra.mxu0 %v1135
    %1153 = vmatpush.msra.mxu0 %v1134
    %1154 = vmatpush.msra.mxu0 %v1133
    %1155 = vmatpush.msra.mxu0 %v1132
    %1156 = vmatpush.msra.mxu0 %v1131
    %1157 = vmatpush.msra.mxu0 %v1130
    %1158 = vmatmul.f32.gmra.mxu0 %v1140
    %v1159 = vpop.f32.mrf.mxu0
    %v1160 = vadd.f32 0.0, %v1159
    %1161 = vdwg.mxu0
    %1162 = vst [vmem:[#allocation5] sm:$0xff] 0.0
    %1163 = vst [vmem:[#allocation5 + $0x8] sm:$0xff] 0.0
    %1164 = vst [vmem:[#allocation5 + $0x10] sm:$0xff] 0.0
    %1165 = vst [vmem:[#allocation5 + $0x18] sm:$0xff] 0.0
    %1166 = vst [vmem:[#allocation5 + $0x20] sm:$0xff] 0.0
    %1167 = vst [vmem:[#allocation5 + $0x28] sm:$0xff] 0.0
    %1168 = vst [vmem:[#allocation5 + $0x30] sm:$0xff] 0.0
    %1169 = vst [vmem:[#allocation5 + $0x38] sm:$0xff] 0.0
    %1170 = vst [vmem:[#allocation5 + $0x40] sm:$0xff] 0.0
    %v1171 = vsub.f32 0.0, %v1160
    %v1172 = vmul.f32 %v1171, 1.442695
    %v1173 = vpow.pop %v1172
    %v1174 = vadd.f32 %v1173, 1.0
    %v1175 = vrcp.pop %v1174
    %v1176 = vmul.f32 %v1174, %v1175
    %v1177 = vsub.f32 1.0, %v1176
    %v1178 = vmul.f32 %v1175, %v1177
    %v1179 = vadd.f32 %v1175, %v1178
    %vm1180 = vweird.f32 %v1174
    %vm1181 = vweird.f32 %v1175
    %vm1182 = vmor %vm1180, %vm1181
    %v1183 = vsel %vm1182, %v1175, %v1179
    %v1184 = vand.u32 2147483647, %v1174
    %vm1185 = vcmp.eq.f32.partialorder %v1184, 8.507059e+37
    %v1186 = vand.u32 %v1174, 2147483648
    %v1187 = vor.u32 1.1754944e-38, %v1186
    %v1188 = vsel %vm1185, %v1187, %v1183
    %v1189 = vmul.f32 1.0, %v1188
    %v1190 = vmul.f32 %v1160, %v1189
    %1191 = vst [vmem:[#allocation5] sm:$0xf] %v1190
    %vm1192 = vcmp.ge.f32.partialorder %v1160, -2.2
    %vm1193 = vcmp.lt.f32.partialorder %v1160, -1.8
    %vm1194 = vmand %vm1192, %vm1193
    %v1195 = vsel %vm1194, 1.0, 0.0
    %vm1196 = vcmp.ge.f32.partialorder %v1160, -1.8
    %vm1197 = vcmp.lt.f32.partialorder %v1160, -1.4
    %vm1198 = vmand %vm1196, %vm1197
    %v1199 = vsel %vm1198, 1.0, 0.0
    %vm1200 = vcmp.ge.f32.partialorder %v1160, -1.4
    %vm1201 = vcmp.lt.f32.partialorder %v1160, -1.0
    %vm1202 = vmand %vm1200, %vm1201
    %v1203 = vsel %vm1202, 1.0, 0.0
    %vm1204 = vcmp.ge.f32.partialorder %v1160, -1.0
    %vm1205 = vcmp.lt.f32.partialorder %v1160, -0.6
    %vm1206 = vmand %vm1204, %vm1205
    %v1207 = vsel %vm1206, 1.0, 0.0
    %vm1208 = vcmp.ge.f32.partialorder %v1160, -0.6
    %vm1209 = vcmp.lt.f32.partialorder %v1160, -0.2
    %vm1210 = vmand %vm1208, %vm1209
    %v1211 = vsel %vm1210, 1.0, 0.0
    %vm1212 = vcmp.ge.f32.partialorder %v1160, -0.2
    %vm1213 = vcmp.lt.f32.partialorder %v1160, 0.2
    %vm1214 = vmand %vm1212, %vm1213
    %v1215 = vsel %vm1214, 1.0, 0.0
    %vm1216 = vcmp.ge.f32.partialorder %v1160, 0.2
    %vm1217 = vcmp.lt.f32.partialorder %v1160, 0.6
    %vm1218 = vmand %vm1216, %vm1217
    %v1219 = vsel %vm1218, 1.0, 0.0
    %vm1220 = vcmp.ge.f32.partialorder %v1160, 0.6
    %vm1221 = vcmp.lt.f32.partialorder %v1160, 1.0
    %vm1222 = vmand %vm1220, %vm1221
    %v1223 = vsel %vm1222, 1.0, 0.0
    %vm1224 = vcmp.ge.f32.partialorder %v1160, 1.0
    %vm1225 = vcmp.lt.f32.partialorder %v1160, 1.4
    %vm1226 = vmand %vm1224, %vm1225
    %v1227 = vsel %vm1226, 1.0, 0.0
    %vm1228 = vcmp.ge.f32.partialorder %v1160, 1.4
    %vm1229 = vcmp.lt.f32.partialorder %v1160, 1.8
    %vm1230 = vmand %vm1228, %vm1229
    %v1231 = vsel %vm1230, 1.0, 0.0
    %vm1232 = vcmp.ge.f32.partialorder %v1160, 1.8
    %vm1233 = vcmp.lt.f32.partialorder %v1160, 2.2
    %vm1234 = vmand %vm1232, %vm1233
    %v1235 = vsel %vm1234, 1.0, 0.0
    %v1236 = vsub.f32 %v1160, -2.2
    %v1237 = vmul.f32 %v1236, 2.5
    %v1238 = vmul.f32 %v1237, %v1195
    %v1239 = vsub.f32 -1.4, %v1160
    %v1240 = vmul.f32 %v1239, 2.5
    %v1241 = vmul.f32 %v1240, %v1199
    %v1242 = vadd.f32 %v1238, %v1241
    %v1243 = vsub.f32 %v1160, -1.8
    %v1244 = vmul.f32 %v1243, 2.5
    %v1245 = vmul.f32 %v1244, %v1199
    %v1246 = vsub.f32 -1.0, %v1160
    %v1247 = vmul.f32 %v1246, 2.5
    %v1248 = vmul.f32 %v1247, %v1203
    %v1249 = vadd.f32 %v1245, %v1248
    %v1250 = vsub.f32 %v1160, -1.4
    %v1251 = vmul.f32 %v1250, 2.5
    %v1252 = vmul.f32 %v1251, %v1203
    %v1253 = vsub.f32 -0.6, %v1160
    %v1254 = vmul.f32 %v1253, 2.5
    %v1255 = vmul.f32 %v1254, %v1207
    %v1256 = vadd.f32 %v1252, %v1255
    %v1257 = vsub.f32 %v1160, -1.0
    %v1258 = vmul.f32 %v1257, 2.5
    %v1259 = vmul.f32 %v1258, %v1207
    %v1260 = vsub.f32 -0.2, %v1160
    %v1261 = vmul.f32 %v1260, 2.5
    %v1262 = vmul.f32 %v1261, %v1211
    %v1263 = vadd.f32 %v1259, %v1262
    %v1264 = vsub.f32 %v1160, -0.6
    %v1265 = vmul.f32 %v1264, 2.5
    %v1266 = vmul.f32 %v1265, %v1211
    %v1267 = vsub.f32 0.2, %v1160
    %v1268 = vmul.f32 %v1267, 2.5
    %v1269 = vmul.f32 %v1268, %v1215
    %v1270 = vadd.f32 %v1266, %v1269
    %v1271 = vsub.f32 %v1160, -0.2
    %v1272 = vmul.f32 %v1271, 2.5
    %v1273 = vmul.f32 %v1272, %v1215
    %v1274 = vsub.f32 0.6, %v1160
    %v1275 = vmul.f32 %v1274, 2.5
    %v1276 = vmul.f32 %v1275, %v1219
    %v1277 = vadd.f32 %v1273, %v1276
    %v1278 = vsub.f32 %v1160, 0.2
    %v1279 = vmul.f32 %v1278, 2.5
    %v1280 = vmul.f32 %v1279, %v1219
    %v1281 = vsub.f32 1.0, %v1160
    %v1282 = vmul.f32 %v1281, 2.5
    %v1283 = vmul.f32 %v1282, %v1223
    %v1284 = vadd.f32 %v1280, %v1283
    %v1285 = vsub.f32 %v1160, 0.6
    %v1286 = vmul.f32 %v1285, 2.5
    %v1287 = vmul.f32 %v1286, %v1223
    %v1288 = vsub.f32 1.4, %v1160
    %v1289 = vmul.f32 %v1288, 2.5
    %v1290 = vmul.f32 %v1289, %v1227
    %v1291 = vadd.f32 %v1287, %v1290
    %v1292 = vsub.f32 %v1160, 1.0
    %v1293 = vmul.f32 %v1292, 2.5
    %v1294 = vmul.f32 %v1293, %v1227
    %v1295 = vsub.f32 1.8, %v1160
    %v1296 = vmul.f32 %v1295, 2.5
    %v1297 = vmul.f32 %v1296, %v1231
    %v1298 = vadd.f32 %v1294, %v1297
    %v1299 = vsub.f32 %v1160, 1.4
    %v1300 = vmul.f32 %v1299, 2.5
    %v1301 = vmul.f32 %v1300, %v1231
    %v1302 = vsub.f32 2.2, %v1160
    %v1303 = vmul.f32 %v1302, 2.5
    %v1304 = vmul.f32 %v1303, %v1235
    %v1305 = vadd.f32 %v1301, %v1304
    %v1306 = vmul.f32 %v1236, 1.25
    %v1307 = vmul.f32 %v1306, %v1242
    %v1308 = vmul.f32 %v1246, 1.25
    %v1309 = vmul.f32 %v1308, %v1249
    %v1310 = vadd.f32 %v1307, %v1309
    %v1311 = vmul.f32 %v1243, 1.25
    %v1312 = vmul.f32 %v1311, %v1249
    %v1313 = vmul.f32 %v1253, 1.25
    %v1314 = vmul.f32 %v1313, %v1256
    %v1315 = vadd.f32 %v1312, %v1314
    %v1316 = vmul.f32 %v1250, 1.25
    %v1317 = vmul.f32 %v1316, %v1256
    %v1318 = vmul.f32 %v1260, 1.25
    %v1319 = vmul.f32 %v1318, %v1263
    %v1320 = vadd.f32 %v1317, %v1319
    %v1321 = vmul.f32 %v1257, 1.25
    %v1322 = vmul.f32 %v1321, %v1263
    %v1323 = vmul.f32 %v1267, 1.25
    %v1324 = vmul.f32 %v1323, %v1270
    %v1325 = vadd.f32 %v1322, %v1324
    %v1326 = vmul.f32 %v1264, 1.25
    %v1327 = vmul.f32 %v1326, %v1270
    %v1328 = vmul.f32 %v1274, 1.25
    %v1329 = vmul.f32 %v1328, %v1277
    %v1330 = vadd.f32 %v1327, %v1329
    %v1331 = vmul.f32 %v1271, 1.25
    %v1332 = vmul.f32 %v1331, %v1277
    %v1333 = vmul.f32 %v1281, 1.25
    %v1334 = vmul.f32 %v1333, %v1284
    %v1335 = vadd.f32 %v1332, %v1334
    %v1336 = vmul.f32 %v1278, 1.25
    %v1337 = vmul.f32 %v1336, %v1284
    %v1338 = vmul.f32 %v1288, 1.25
    %v1339 = vmul.f32 %v1338, %v1291
    %v1340 = vadd.f32 %v1337, %v1339
    %v1341 = vmul.f32 %v1285, 1.25
    %v1342 = vmul.f32 %v1341, %v1291
    %v1343 = vmul.f32 %v1295, 1.25
    %v1344 = vmul.f32 %v1343, %v1298
    %v1345 = vadd.f32 %v1342, %v1344
    %v1346 = vmul.f32 %v1292, 1.25
    %v1347 = vmul.f32 %v1346, %v1298
    %v1348 = vmul.f32 %v1302, 1.25
    %v1349 = vmul.f32 %v1348, %v1305
    %v1350 = vadd.f32 %v1347, %v1349
    %v1351 = vmul.f32 %v1236, 0.8333333
    %v1352 = vmul.f32 %v1351, %v1310
    %v1353 = vmul.f32 %v1253, 0.8333333
    %v1354 = vmul.f32 %v1353, %v1315
    %v1355 = vadd.f32 %v1352, %v1354
    %v1356 = vmul.f32 %v1243, 0.8333333
    %v1357 = vmul.f32 %v1356, %v1315
    %v1358 = vmul.f32 %v1260, 0.8333333
    %v1359 = vmul.f32 %v1358, %v1320
    %v1360 = vadd.f32 %v1357, %v1359
    %v1361 = vmul.f32 %v1250, 0.8333333
    %v1362 = vmul.f32 %v1361, %v1320
    %v1363 = vmul.f32 %v1267, 0.8333333
    %v1364 = vmul.f32 %v1363, %v1325
    %v1365 = vadd.f32 %v1362, %v1364
    %v1366 = vmul.f32 %v1257, 0.8333333
    %v1367 = vmul.f32 %v1366, %v1325
    %v1368 = vmul.f32 %v1274, 0.8333333
    %v1369 = vmul.f32 %v1368, %v1330
    %v1370 = vadd.f32 %v1367, %v1369
    %v1371 = vmul.f32 %v1264, 0.8333333
    %v1372 = vmul.f32 %v1371, %v1330
    %v1373 = vmul.f32 %v1281, 0.8333333
    %v1374 = vmul.f32 %v1373, %v1335
    %v1375 = vadd.f32 %v1372, %v1374
    %v1376 = vmul.f32 %v1271, 0.8333333
    %v1377 = vmul.f32 %v1376, %v1335
    %v1378 = vmul.f32 %v1288, 0.8333333
    %v1379 = vmul.f32 %v1378, %v1340
    %v1380 = vadd.f32 %v1377, %v1379
    %v1381 = vmul.f32 %v1278, 0.8333333
    %v1382 = vmul.f32 %v1381, %v1340
    %v1383 = vmul.f32 %v1295, 0.8333333
    %v1384 = vmul.f32 %v1383, %v1345
    %v1385 = vadd.f32 %v1382, %v1384
    %v1386 = vmul.f32 %v1285, 0.8333333
    %v1387 = vmul.f32 %v1386, %v1345
    %v1388 = vmul.f32 %v1302, 0.8333333
    %v1389 = vmul.f32 %v1388, %v1350
    %v1390 = vadd.f32 %v1387, %v1389
    %1391 = vst [vmem:[#allocation5 + $0x8] sm:$0xf] %v1355
    %1392 = vst [vmem:[#allocation5 + $0x10] sm:$0xf] %v1360
    %1393 = vst [vmem:[#allocation5 + $0x18] sm:$0xf] %v1365
    %1394 = vst [vmem:[#allocation5 + $0x20] sm:$0xf] %v1370
    %1395 = vst [vmem:[#allocation5 + $0x28] sm:$0xf] %v1375
    %1396 = vst [vmem:[#allocation5 + $0x30] sm:$0xf] %v1380
    %1397 = vst [vmem:[#allocation5 + $0x38] sm:$0xf] %v1385
    %1398 = vst [vmem:[#allocation5 + $0x40] sm:$0xf] %v1390
    %v1399 = vld [vmem:[#allocation15] sm:$0xf]
    %v1400 = vld [vmem:[#allocation5] sm:$0xff]
    %v1401 = vld [vmem:[#allocation5 + $0x8] sm:$0xff]
    %v1402 = vld [vmem:[#allocation5 + $0x10] sm:$0xff]
    %v1403 = vld [vmem:[#allocation5 + $0x18] sm:$0xff]
    %v1404 = vld [vmem:[#allocation5 + $0x20] sm:$0xff]
    %v1405 = vld [vmem:[#allocation5 + $0x28] sm:$0xff]
    %v1406 = vld [vmem:[#allocation5 + $0x30] sm:$0xff]
    %v1407 = vld [vmem:[#allocation5 + $0x38] sm:$0xff]
    %v1408 = vld [vmem:[#allocation5 + $0x40] sm:$0xff]
    %v1410 = vsel %vm874, %v1399, 0
    %1412 = vmatpush.msra.mxu0 0.0
    %1413 = vmatpush.msra.mxu0 0.0
    %1414 = vmatpush.msra.mxu0 0.0
    %1415 = vmatpush.msra.mxu0 0.0
    %1416 = vmatpush.msra.mxu0 0.0
    %1417 = vmatpush.msra.mxu0 0.0
    %1418 = vmatpush.msra.mxu0 0.0
    %1419 = vmatpush.msra.mxu0 %v1408
    %1420 = vmatpush.msra.mxu0 %v1407
    %1421 = vmatpush.msra.mxu0 %v1406
    %1422 = vmatpush.msra.mxu0 %v1405
    %1423 = vmatpush.msra.mxu0 %v1404
    %1424 = vmatpush.msra.mxu0 %v1403
    %1425 = vmatpush.msra.mxu0 %v1402
    %1426 = vmatpush.msra.mxu0 %v1401
    %1427 = vmatpush.msra.mxu0 %v1400
    %1428 = vmatmul.f32.gmra.mxu0 %v1410
    %v1429 = vpop.f32.mrf.mxu0
    %v1430 = vadd.f32 0.0, %v1429
    %1431 = vdwg.mxu0
    %v1432 = vld [vmem:[#allocation11] sm:$0xf]
    %v1433 = vadd.f32 %v1432, %v1430
    %1434 = vst [vmem:[#allocation18] sm:$0xf] %v1433
    // Predicated region
    $region54: #{tpu_custom_call.1} parent=1 // pred_check
      _
    $region55: #{tpu_custom_call.1} parent=1 // pred_check_branch
      %1436 = sbr.rel (0) target = $region57
    $region56: #{tpu_custom_call.1} parent=1 // pred_region
      %1438 = vsyncadd [#allocation8], 0
      %s1440 = sshll.u32 [#allocation17], 4
      %s1441 = int_to_ptr.vmem [resolvable:$true] %s1440
      %s1442 = sshll.u32 %s7, 4
      %s1443 = int_to_ptr.hbm [resolvable:$true] %s1442
      %1445 = dma.vmem_to_hbm [thread:$0]  %s1441, 128, %s1443, [#allocation8]
    $region57: #{tpu_custom_call.1} parent=1 // pred_fallthru
      _
    // Predicated region
    $region58: #{tpu_custom_call.1} parent=1 // pred_check
      _
    $region59: #{tpu_custom_call.1} parent=1 // pred_check_branch
      %1447 = sbr.rel (0) target = $region61
    $region60: #{tpu_custom_call.1} parent=1 // pred_region
      %1449 = vsyncadd [#allocation19], 0
      %s1451 = sshll.u32 [#allocation18], 4
      %s1452 = int_to_ptr.vmem [resolvable:$true] %s1451
      %s1453 = sshll.u32 %s8, 4
      %s1454 = int_to_ptr.hbm [resolvable:$true] %s1453
      %1456 = dma.vmem_to_hbm [thread:$0]  %s1452, 64, %s1454, [#allocation19]
    $region61: #{tpu_custom_call.1} parent=1 // pred_fallthru
      _
    // Predicated region
    $region62: #{tpu_custom_call.1} parent=1 // pred_check
      _
    $region63: #{tpu_custom_call.1} parent=1 // pred_check_branch
      %1458 = sbr.rel (0) target = $region65
    $region64: #{tpu_custom_call.1} parent=1 // pred_region
      %1460 = dma.done [#allocation8], 128
    $region65: #{tpu_custom_call.1} parent=1 // pred_fallthru
      _
    // Predicated region
    $region66: #{tpu_custom_call.1} parent=1 // pred_check
      _
    $region67: #{tpu_custom_call.1} parent=1 // pred_check_branch
      %1462 = sbr.rel (0) target = $region69
    $region68: #{tpu_custom_call.1} parent=1 // pred_region
      %1464 = dma.done [#allocation19], 64
    $region69: #{tpu_custom_call.1} parent=1 // pred_fallthru
      _
    %1465 = vsyncpa [#allocation7], 1
    %1466 = vsyncpa [#allocation10], 1
    %1467 = vsyncpa [#allocation13], 1
    %1468 = vsyncpa [#allocation16], 1
    %1469 = vsyncpa [#allocation8], 1
    %1470 = vsyncpa [#allocation19], 1

</llo_original>
